<compile_context>
chip_gen: v5e
topology: v5e:2x2
jax: 0.10.0
libtpu: 0.0.40
codegen_flags: <defaults>
</compile_context>

<pallas_src>
from functools import partial

import numpy as np
import jax
import jax.numpy as jnp
from jax import lax
from jax.experimental import pallas as pl
from jax.experimental.pallas import tpu as pltpu


def _round_up(x, m):
    return (x + m - 1) // m * m


# ----------------------------------------------------------------------------
# Fused kernel: conv1+relu -> conv2 -> (sum)+relu -> flatten -> linear
# One grid step == one batch element. All intermediates stay in VMEM/vregs.
# ----------------------------------------------------------------------------
def _fused_net_kernel(x_ref, w1_ref, b1_ref, w2_ref, b2_ref, fcw_ref, fcb_ref,
                      o_ref, xpad1, xpad2, *, H, W):
    c1 = w1_ref.shape[0]

    def conv3x3(xpad_ref, w_ref, b_ref, center):
        """3x3 'same' conv as a single im2col MXU matmul.

        xpad_ref : (Cp, H+2, W+2) VMEM scratch (halo + padded channel planes = 0)
        w_ref    : (Cout, 9*Cp)   rows = output channel, cols ordered (dy, dx, c)
        center   : (C, H, W)      unpadded input planes, C <= Cp
        returns  : (Cout, H*W)    lane-dense CHW-flat activation
        """
        # Zero halo + stale/padded channel planes, then drop activation in centre.
        xpad_ref[...] = jnp.zeros_like(xpad_ref)
        xpad_ref[0:center.shape[0], 1:H + 1, 1:W + 1] = center
        # im2col: stack the 9 shifted taps along the (untiled) leading axis,
        # flatten spatial onto the 256-wide lane axis -> one MXU push.
        taps = [xpad_ref[:, dy:dy + H, dx:dx + W]
                for dy in range(3) for dx in range(3)]
        patches = jnp.concatenate(taps, axis=0)                  # (9*Cp, H, W)
        patches = patches.reshape(9 * xpad_ref.shape[0], H * W)  # (9*Cp, H*W)
        out = jnp.dot(w_ref[...], patches, preferred_element_type=jnp.float32)
        return out + b_ref[...]                                  # (Cout, H*W)

    # 000_conv1 -> 001_relu1
    h1 = jnp.maximum(conv3x3(xpad1, w1_ref, b1_ref, x_ref[0]), 0.0)   # (C1, H*W)
    # 002_conv2 (input: relu1)
    h2 = conv3x3(xpad2, w2_ref, b2_ref, h1.reshape(c1, H, W))         # (C2, H*W)
    # 003_relu2: multi-input node => sum of incoming (relu1 + conv2), then ReLU.
    h3 = jnp.maximum(h1 + h2, 0.0)                                    # (C, H*W) CHW order
    # Flatten (PyTorch NCHW order == row-major over (c, h*w)) + dense head.
    flat = h3.reshape(1, h3.shape[0] * H * W)                         # (1, C*H*W)
    logits = lax.dot_general(flat, fcw_ref[...],                      # fc_w stays (out, in)
                             dimension_numbers=(((1,), (1,)), ((), ())),
                             preferred_element_type=jnp.float32)
    o_ref[0] = (logits + fcb_ref[...]).astype(o_ref.dtype)


# ----------------------------------------------------------------------------
# Host-side, one-time weight preparation (outside the jitted hot path).
# ----------------------------------------------------------------------------
def prepare_params(params):
    c1w = jnp.asarray(params["conv1_w"], jnp.float32)   # (C1, Cin, 3, 3)
    c2w = jnp.asarray(params["conv2_w"], jnp.float32)   # (C2, C1, 3, 3)
    C1, Cin = c1w.shape[0], c1w.shape[1]
    C2 = c2w.shape[0]
    cin_p = _round_up(Cin, 8)      # pad input channels so im2col pieces are 8-sublane aligned
    c1_p = _round_up(C1, 8)

    def conv_weight(w, cp):
        cout, cin = w.shape[0], w.shape[1]
        w = jnp.transpose(w, (0, 2, 3, 1))                       # (Cout, 3, 3, Cin)
        w = jnp.pad(w, ((0, 0), (0, 0), (0, 0), (0, cp - cin)))  # pad Cin -> Cp
        return w.reshape(cout, 9 * cp)                           # cols ordered (dy, dx, c)

    return {
        "w1r": conv_weight(c1w, cin_p),
        "b1": jnp.asarray(params["conv1_b"], jnp.float32).reshape(C1, 1),
        "w2r": conv_weight(c2w, c1_p),
        "b2": jnp.asarray(params["conv2_b"], jnp.float32).reshape(C2, 1),
        "fcw": jnp.asarray(params["fc_w"], jnp.float32),          # (num_classes, C*H*W)
        "fcb": jnp.asarray(params["fc_b"], jnp.float32).reshape(1, -1),
    }


# ----------------------------------------------------------------------------
# Full NeuralNet forward (single pallas_call).
# ----------------------------------------------------------------------------
def neural_net_forward(x_nchw, p):
    N, Cin, H, W = x_nchw.shape
    C1 = p["w1r"].shape[0]
    cin_p = p["w1r"].shape[1] // 9
    C2 = p["w2r"].shape[0]
    c1_p = p["w2r"].shape[1] // 9
    num_classes = p["fcw"].shape[0]
    fc_in = p["fcw"].shape[1]
    assert C1 == C2 and fc_in == C2 * H * W

    kern = partial(_fused_net_kernel, H=H, W=W)
    out = pl.pallas_call(
        kern,
        out_shape=jax.ShapeDtypeStruct((N, 1, num_classes), jnp.float32),
        grid=(N,),
        in_specs=[
            pl.BlockSpec((1, Cin, H, W), lambda n: (n, 0, 0, 0)),   # x (per batch element)
            pl.BlockSpec((C1, 9 * cin_p), lambda n: (0, 0)),        # conv1 weight (im2col form)
            pl.BlockSpec((C1, 1), lambda n: (0, 0)),                # conv1 bias
            pl.BlockSpec((C2, 9 * c1_p), lambda n: (0, 0)),         # conv2 weight (im2col form)
            pl.BlockSpec((C2, 1), lambda n: (0, 0)),                # conv2 bias
            pl.BlockSpec((num_classes, fc_in), lambda n: (0, 0)),   # fc weight, original (out,in)
            pl.BlockSpec((1, num_classes), lambda n: (0, 0)),       # fc bias
        ],
        out_specs=pl.BlockSpec((1, 1, num_classes), lambda n: (n, 0, 0)),
        scratch_shapes=[
            pltpu.VMEM((cin_p, H + 2, W + 2), jnp.float32),         # padded conv1 input
            pltpu.VMEM((c1_p, H + 2, W + 2), jnp.float32),          # padded conv2 input
        ],
        compiler_params=pltpu.CompilerParams(
            dimension_semantics=("parallel",)),                     # megacore-shard the batch
    )(x_nchw, p["w1r"], p["b1"], p["w2r"], p["b2"], p["fcw"], p["fcb"])
    return out.reshape(N, num_classes)


# Pure-JAX reference (same math, XLA convs) for a correctness check.
def reference_forward(x_nchw, params):
    dn = ("NCHW", "OIHW", "NCHW")
    h1 = jax.lax.conv_general_dilated(x_nchw, params["conv1_w"], (1, 1),
                                      ((1, 1), (1, 1)), dimension_numbers=dn)
    h1 = jax.nn.relu(h1 + params["conv1_b"][None, :, None, None])
    h2 = jax.lax.conv_general_dilated(h1, params["conv2_w"], (1, 1),
                                      ((1, 1), (1, 1)), dimension_numbers=dn)
    h2 = h2 + params["conv2_b"][None, :, None, None]
    h3 = jax.nn.relu(h1 + h2)
    flat = h3.reshape(h3.shape[0], -1)
    return flat @ params["fc_w"].T + params["fc_b"]


# TODO(synk): NeuralNet's graph-construction machinery (networkx path naming,
# SizeScaleLayer rescaling, 1x1 channel-matching conv insertion) is host-side
# Python that determines the topology; only the resulting forward compute is a
# kernel target.

if __name__ == "__main__":
    N, Cin, H, W = 2, 4, 16, 16
    Cmid, num_classes = 8, 10

    key = jax.random.PRNGKey(0)
    ks = jax.random.split(key, 7)
    x = jax.random.normal(ks[0], (N, Cin, H, W), jnp.float32)
    params = {
        "conv1_w": 0.1 * jax.random.normal(ks[1], (Cmid, Cin, 3, 3), jnp.float32),
        "conv1_b": 0.1 * jax.random.normal(ks[2], (Cmid,), jnp.float32),
        "conv2_w": 0.1 * jax.random.normal(ks[3], (Cmid, Cmid, 3, 3), jnp.float32),
        "conv2_b": 0.1 * jax.random.normal(ks[4], (Cmid,), jnp.float32),
        "fc_w":    0.1 * jax.random.normal(ks[5], (num_classes, Cmid * H * W), jnp.float32),
        "fc_b":    0.1 * jax.random.normal(ks[6], (num_classes,), jnp.float32),
    }

    prepped = prepare_params(params)                 # one-time, outside jit
    fwd = jax.jit(neural_net_forward)
    out = jax.block_until_ready(fwd(x, prepped))

    ref = reference_forward(x, params)
    np.testing.assert_allclose(np.asarray(out), np.asarray(ref), rtol=1e-3, atol=1e-3)

    print("KERNEL_OK")
</pallas_src>

<mosaic_0001>
module attributes {stable_mosaic.version = 11 : i64} {
  func.func @_fused_net_kernel(%arg0: i32, %arg1: memref<1x4x16x16xf32, #tpu.memory_space<vmem>>, %arg2: memref<8x72xf32, #tpu.memory_space<vmem>>, %arg3: memref<8x1xf32, #tpu.memory_space<vmem>>, %arg4: memref<8x72xf32, #tpu.memory_space<vmem>>, %arg5: memref<8x1xf32, #tpu.memory_space<vmem>>, %arg6: memref<10x2048xf32, #tpu.memory_space<vmem>>, %arg7: memref<1x10xf32, #tpu.memory_space<vmem>>, %arg8: memref<1x1x10xf32, #tpu.memory_space<vmem>>, %arg9: memref<8x18x18xf32, #tpu.memory_space<vmem>>, %arg10: memref<8x18x18xf32, #tpu.memory_space<vmem>>) attributes {dimension_semantics = [#tpu.dimension_semantics<parallel>], iteration_bounds = array<i64: 2>, scalar_prefetch = 0 : i64, scratch_operands = 2 : i64, tpu.core_type = #tpu.core_type<tc>, window_params = [{transform_indices = @transform_0, window_bounds = array<i64: 1, 4, 16, 16>}, {pipeline_mode = #tpu.pipeline_mode<synchronous>, transform_indices = @transform_1, window_bounds = array<i64: 8, 72>}, {pipeline_mode = #tpu.pipeline_mode<synchronous>, transform_indices = @transform_2, window_bounds = array<i64: 8, 1>}, {pipeline_mode = #tpu.pipeline_mode<synchronous>, transform_indices = @transform_3, window_bounds = array<i64: 8, 72>}, {pipeline_mode = #tpu.pipeline_mode<synchronous>, transform_indices = @transform_4, window_bounds = array<i64: 8, 1>}, {pipeline_mode = #tpu.pipeline_mode<synchronous>, transform_indices = @transform_5, window_bounds = array<i64: 10, 2048>}, {pipeline_mode = #tpu.pipeline_mode<synchronous>, transform_indices = @transform_6, window_bounds = array<i64: 1, 10>}, {transform_indices = @transform_7, window_bounds = array<i64: 1, 1, 10>}]} {
    %c0 = arith.constant 0 : index
    %c0_0 = arith.constant 0 : index
    %c0_1 = arith.constant 0 : index
    %c0_2 = arith.constant 0 : index
    %0 = vector.load %arg1[%c0, %c0_0, %c0_1, %c0_2] : memref<1x4x16x16xf32, #tpu.memory_space<vmem>>, vector<1x4x16x16xf32>
    %1 = vector.shape_cast %0 : vector<1x4x16x16xf32> to vector<4x16x16xf32>
    %cst = arith.constant 0.000000e+00 : f32
    %2 = vector.broadcast %cst : f32 to vector<8x18x18xf32>
    %c0_3 = arith.constant 0 : index
    %c0_4 = arith.constant 0 : index
    %c0_5 = arith.constant 0 : index
    %3 = vector.load %arg9[%c0_3, %c0_4, %c0_5] : memref<8x18x18xf32, #tpu.memory_space<vmem>>, vector<8x18x18xf32>
    tpu.vector_store %arg9[%c0_3, %c0_4, %c0_5], %2 {strides = array<i32>} : memref<8x18x18xf32, #tpu.memory_space<vmem>>, vector<8x18x18xf32>,
    %c0_6 = arith.constant 0 : index
    %c1 = arith.constant 1 : index
    %c1_7 = arith.constant 1 : index
    %4 = vector.load %arg9[%c0_6, %c1, %c1_7] : memref<8x18x18xf32, #tpu.memory_space<vmem>>, vector<4x16x16xf32>
    tpu.vector_store %arg9[%c0_6, %c1, %c1_7], %1 {strides = array<i32>} : memref<8x18x18xf32, #tpu.memory_space<vmem>>, vector<4x16x16xf32>,
    %c0_8 = arith.constant 0 : index
    %c0_9 = arith.constant 0 : index
    %c0_10 = arith.constant 0 : index
    %5 = vector.load %arg9[%c0_8, %c0_9, %c0_10] : memref<8x18x18xf32, #tpu.memory_space<vmem>>, vector<8x16x16xf32>
    %c0_11 = arith.constant 0 : index
    %c0_12 = arith.constant 0 : index
    %c1_13 = arith.constant 1 : index
    %6 = vector.load %arg9[%c0_11, %c0_12, %c1_13] : memref<8x18x18xf32, #tpu.memory_space<vmem>>, vector<8x16x16xf32>
    %c0_14 = arith.constant 0 : index
    %c0_15 = arith.constant 0 : index
    %c2 = arith.constant 2 : index
    %7 = vector.load %arg9[%c0_14, %c0_15, %c2] : memref<8x18x18xf32, #tpu.memory_space<vmem>>, vector<8x16x16xf32>
    %c0_16 = arith.constant 0 : index
    %c1_17 = arith.constant 1 : index
    %c0_18 = arith.constant 0 : index
    %8 = vector.load %arg9[%c0_16, %c1_17, %c0_18] : memref<8x18x18xf32, #tpu.memory_space<vmem>>, vector<8x16x16xf32>
    %c0_19 = arith.constant 0 : index
    %c1_20 = arith.constant 1 : index
    %c1_21 = arith.constant 1 : index
    %9 = vector.load %arg9[%c0_19, %c1_20, %c1_21] : memref<8x18x18xf32, #tpu.memory_space<vmem>>, vector<8x16x16xf32>
    %c0_22 = arith.constant 0 : index
    %c1_23 = arith.constant 1 : index
    %c2_24 = arith.constant 2 : index
    %10 = vector.load %arg9[%c0_22, %c1_23, %c2_24] : memref<8x18x18xf32, #tpu.memory_space<vmem>>, vector<8x16x16xf32>
    %c0_25 = arith.constant 0 : index
    %c2_26 = arith.constant 2 : index
    %c0_27 = arith.constant 0 : index
    %11 = vector.load %arg9[%c0_25, %c2_26, %c0_27] : memref<8x18x18xf32, #tpu.memory_space<vmem>>, vector<8x16x16xf32>
    %c0_28 = arith.constant 0 : index
    %c2_29 = arith.constant 2 : index
    %c1_30 = arith.constant 1 : index
    %12 = vector.load %arg9[%c0_28, %c2_29, %c1_30] : memref<8x18x18xf32, #tpu.memory_space<vmem>>, vector<8x16x16xf32>
    %c0_31 = arith.constant 0 : index
    %c2_32 = arith.constant 2 : index
    %c2_33 = arith.constant 2 : index
    %13 = vector.load %arg9[%c0_31, %c2_32, %c2_33] : memref<8x18x18xf32, #tpu.memory_space<vmem>>, vector<8x16x16xf32>
    %14 = tpu.concatenate %5, %6, %7, %8, %9, %10, %11, %12, %13 in 0 : vector<8x16x16xf32>, vector<8x16x16xf32>, vector<8x16x16xf32>, vector<8x16x16xf32>, vector<8x16x16xf32>, vector<8x16x16xf32>, vector<8x16x16xf32>, vector<8x16x16xf32>, vector<8x16x16xf32> -> vector<72x16x16xf32>
    %15 = vector.shape_cast %14 : vector<72x16x16xf32> to vector<72x256xf32>
    %c0_34 = arith.constant 0 : index
    %c0_35 = arith.constant 0 : index
    %16 = vector.load %arg2[%c0_34, %c0_35] : memref<8x72xf32, #tpu.memory_space<vmem>>, vector<8x72xf32>
    %cst_36 = arith.constant dense<0.000000e+00> : vector<8x256xf32>
    %17 = tpu.matmul %16, %15, %cst_36 {dimension_numbers = #tpu.dot_dimension_numbers<[1], [0], [0], [1], [0, 0, 1, 1], [], []>} : vector<8x72xf32>, vector<72x256xf32>, vector<8x256xf32> -> vector<8x256xf32>
    %c0_37 = arith.constant 0 : index
    %c0_38 = arith.constant 0 : index
    %18 = vector.load %arg3[%c0_37, %c0_38] : memref<8x1xf32, #tpu.memory_space<vmem>>, vector<8x1xf32>
    %19 = vector.broadcast %18 : vector<8x1xf32> to vector<8x256xf32>
    %20 = arith.addf %17, %19 : vector<8x256xf32>
    %cst_39 = arith.constant 0.000000e+00 : f32
    %21 = vector.broadcast %cst_39 : f32 to vector<8x256xf32>
    %22 = arith.maximumf %20, %21 : vector<8x256xf32>
    %23 = vector.shape_cast %22 : vector<8x256xf32> to vector<8x16x16xf32>
    %cst_40 = arith.constant 0.000000e+00 : f32
    %24 = vector.broadcast %cst_40 : f32 to vector<8x18x18xf32>
    %c0_41 = arith.constant 0 : index
    %c0_42 = arith.constant 0 : index
    %c0_43 = arith.constant 0 : index
    %25 = vector.load %arg10[%c0_41, %c0_42, %c0_43] : memref<8x18x18xf32, #tpu.memory_space<vmem>>, vector<8x18x18xf32>
    tpu.vector_store %arg10[%c0_41, %c0_42, %c0_43], %24 {strides = array<i32>} : memref<8x18x18xf32, #tpu.memory_space<vmem>>, vector<8x18x18xf32>,
    %c0_44 = arith.constant 0 : index
    %c1_45 = arith.constant 1 : index
    %c1_46 = arith.constant 1 : index
    %26 = vector.load %arg10[%c0_44, %c1_45, %c1_46] : memref<8x18x18xf32, #tpu.memory_space<vmem>>, vector<8x16x16xf32>
    tpu.vector_store %arg10[%c0_44, %c1_45, %c1_46], %23 {strides = array<i32>} : memref<8x18x18xf32, #tpu.memory_space<vmem>>, vector<8x16x16xf32>,
    %c0_47 = arith.constant 0 : index
    %c0_48 = arith.constant 0 : index
    %c0_49 = arith.constant 0 : index
    %27 = vector.load %arg10[%c0_47, %c0_48, %c0_49] : memref<8x18x18xf32, #tpu.memory_space<vmem>>, vector<8x16x16xf32>
    %c0_50 = arith.constant 0 : index
    %c0_51 = arith.constant 0 : index
    %c1_52 = arith.constant 1 : index
    %28 = vector.load %arg10[%c0_50, %c0_51, %c1_52] : memref<8x18x18xf32, #tpu.memory_space<vmem>>, vector<8x16x16xf32>
    %c0_53 = arith.constant 0 : index
    %c0_54 = arith.constant 0 : index
    %c2_55 = arith.constant 2 : index
    %29 = vector.load %arg10[%c0_53, %c0_54, %c2_55] : memref<8x18x18xf32, #tpu.memory_space<vmem>>, vector<8x16x16xf32>
    %c0_56 = arith.constant 0 : index
    %c1_57 = arith.constant 1 : index
    %c0_58 = arith.constant 0 : index
    %30 = vector.load %arg10[%c0_56, %c1_57, %c0_58] : memref<8x18x18xf32, #tpu.memory_space<vmem>>, vector<8x16x16xf32>
    %c0_59 = arith.constant 0 : index
    %c1_60 = arith.constant 1 : index
    %c1_61 = arith.constant 1 : index
    %31 = vector.load %arg10[%c0_59, %c1_60, %c1_61] : memref<8x18x18xf32, #tpu.memory_space<vmem>>, vector<8x16x16xf32>
    %c0_62 = arith.constant 0 : index
    %c1_63 = arith.constant 1 : index
    %c2_64 = arith.constant 2 : index
    %32 = vector.load %arg10[%c0_62, %c1_63, %c2_64] : memref<8x18x18xf32, #tpu.memory_space<vmem>>, vector<8x16x16xf32>
    %c0_65 = arith.constant 0 : index
    %c2_66 = arith.constant 2 : index
    %c0_67 = arith.constant 0 : index
    %33 = vector.load %arg10[%c0_65, %c2_66, %c0_67] : memref<8x18x18xf32, #tpu.memory_space<vmem>>, vector<8x16x16xf32>
    %c0_68 = arith.constant 0 : index
    %c2_69 = arith.constant 2 : index
    %c1_70 = arith.constant 1 : index
    %34 = vector.load %arg10[%c0_68, %c2_69, %c1_70] : memref<8x18x18xf32, #tpu.memory_space<vmem>>, vector<8x16x16xf32>
    %c0_71 = arith.constant 0 : index
    %c2_72 = arith.constant 2 : index
    %c2_73 = arith.constant 2 : index
    %35 = vector.load %arg10[%c0_71, %c2_72, %c2_73] : memref<8x18x18xf32, #tpu.memory_space<vmem>>, vector<8x16x16xf32>
    %36 = tpu.concatenate %27, %28, %29, %30, %31, %32, %33, %34, %35 in 0 : vector<8x16x16xf32>, vector<8x16x16xf32>, vector<8x16x16xf32>, vector<8x16x16xf32>, vector<8x16x16xf32>, vector<8x16x16xf32>, vector<8x16x16xf32>, vector<8x16x16xf32>, vector<8x16x16xf32> -> vector<72x16x16xf32>
    %37 = vector.shape_cast %36 : vector<72x16x16xf32> to vector<72x256xf32>
    %c0_74 = arith.constant 0 : index
    %c0_75 = arith.constant 0 : index
    %38 = vector.load %arg4[%c0_74, %c0_75] : memref<8x72xf32, #tpu.memory_space<vmem>>, vector<8x72xf32>
    %cst_76 = arith.constant dense<0.000000e+00> : vector<8x256xf32>
    %39 = tpu.matmul %38, %37, %cst_76 {dimension_numbers = #tpu.dot_dimension_numbers<[1], [0], [0], [1], [0, 0, 1, 1], [], []>} : vector<8x72xf32>, vector<72x256xf32>, vector<8x256xf32> -> vector<8x256xf32>
    %c0_77 = arith.constant 0 : index
    %c0_78 = arith.constant 0 : index
    %40 = vector.load %arg5[%c0_77, %c0_78] : memref<8x1xf32, #tpu.memory_space<vmem>>, vector<8x1xf32>
    %41 = vector.broadcast %40 : vector<8x1xf32> to vector<8x256xf32>
    %42 = arith.addf %39, %41 : vector<8x256xf32>
    %43 = arith.addf %22, %42 : vector<8x256xf32>
    %cst_79 = arith.constant 0.000000e+00 : f32
    %44 = vector.broadcast %cst_79 : f32 to vector<8x256xf32>
    %45 = arith.maximumf %43, %44 : vector<8x256xf32>
    %46 = vector.shape_cast %45 : vector<8x256xf32> to vector<1x2048xf32>
    %c0_80 = arith.constant 0 : index
    %c0_81 = arith.constant 0 : index
    %47 = vector.load %arg6[%c0_80, %c0_81] : memref<10x2048xf32, #tpu.memory_space<vmem>>, vector<10x2048xf32>
    %cst_82 = arith.constant dense<0.000000e+00> : vector<1x10xf32>
    %48 = tpu.matmul %46, %47, %cst_82 {dimension_numbers = #tpu.dot_dimension_numbers<[1], [1], [0], [0], [0, 0, 1, 0], [], []>} : vector<1x2048xf32>, vector<10x2048xf32>, vector<1x10xf32> -> vector<1x10xf32>
    %c0_83 = arith.constant 0 : index
    %c0_84 = arith.constant 0 : index
    %49 = vector.load %arg7[%c0_83, %c0_84] : memref<1x10xf32, #tpu.memory_space<vmem>>, vector<1x10xf32>
    %50 = arith.addf %48, %49 : vector<1x10xf32>
    %c0_85 = arith.constant 0 : index
    %c0_86 = arith.constant 0 : index
    %c0_87 = arith.constant 0 : index
    %51 = vector.load %arg8[%c0_85, %c0_86, %c0_87] : memref<1x1x10xf32, #tpu.memory_space<vmem>>, vector<1x1x10xf32>
    %52 = vector.shape_cast %51 : vector<1x1x10xf32> to vector<1x10xf32>
    %53 = vector.shape_cast %50 : vector<1x10xf32> to vector<1x1x10xf32>
    tpu.vector_store %arg8[%c0_85, %c0_86, %c0_87], %53 {strides = array<i32>} : memref<1x1x10xf32, #tpu.memory_space<vmem>>, vector<1x1x10xf32>,
    return
  }
  func.func @transform_0(%arg0: i32) -> (i32, i32, i32, i32) {
    %c0_i32 = arith.constant 0 : i32
    %c0_i32_0 = arith.constant 0 : i32
    %c0_i32_1 = arith.constant 0 : i32
    %c0_i32_2 = arith.constant 0 : i32
    return %arg0, %c0_i32, %c0_i32_0, %c0_i32_1 : i32, i32, i32, i32
  }
  func.func @transform_1(%arg0: i32) -> (i32, i32) {
    %c0_i32 = arith.constant 0 : i32
    %c0_i32_0 = arith.constant 0 : i32
    %c0_i32_1 = arith.constant 0 : i32
    return %c0_i32, %c0_i32_0 : i32, i32
  }
  func.func @transform_2(%arg0: i32) -> (i32, i32) {
    %c0_i32 = arith.constant 0 : i32
    %c0_i32_0 = arith.constant 0 : i32
    %c0_i32_1 = arith.constant 0 : i32
    return %c0_i32, %c0_i32_0 : i32, i32
  }
  func.func @transform_3(%arg0: i32) -> (i32, i32) {
    %c0_i32 = arith.constant 0 : i32
    %c0_i32_0 = arith.constant 0 : i32
    %c0_i32_1 = arith.constant 0 : i32
    return %c0_i32, %c0_i32_0 : i32, i32
  }
  func.func @transform_4(%arg0: i32) -> (i32, i32) {
    %c0_i32 = arith.constant 0 : i32
    %c0_i32_0 = arith.constant 0 : i32
    %c0_i32_1 = arith.constant 0 : i32
    return %c0_i32, %c0_i32_0 : i32, i32
  }
  func.func @transform_5(%arg0: i32) -> (i32, i32) {
    %c0_i32 = arith.constant 0 : i32
    %c0_i32_0 = arith.constant 0 : i32
    %c0_i32_1 = arith.constant 0 : i32
    return %c0_i32, %c0_i32_0 : i32, i32
  }
  func.func @transform_6(%arg0: i32) -> (i32, i32) {
    %c0_i32 = arith.constant 0 : i32
    %c0_i32_0 = arith.constant 0 : i32
    %c0_i32_1 = arith.constant 0 : i32
    return %c0_i32, %c0_i32_0 : i32, i32
  }
  func.func @transform_7(%arg0: i32) -> (i32, i32, i32) {
    %c0_i32 = arith.constant 0 : i32
    %c0_i32_0 = arith.constant 0 : i32
    %c0_i32_1 = arith.constant 0 : i32
    return %arg0, %c0_i32, %c0_i32_0 : i32, i32, i32
  }
}

</mosaic_0001>

<llo_original>
// kernel: neural_net_forward.1
$region0: #{neural_net_forward.1}
  #allocation0 [shape = 'u32[]', space=smem, size = 0x4, offset = 0x4, fixed_abs, tag = 'smem constant byte address 0x4 - core index']
  #allocation1 [shape = 'u32[72,128]{1,0:T(1,128)}', space=vmem, size = 0x9000, scoped, tag = 'internal scratch']
  #allocation2 [shape = 'f32[8,18,18]{2,1,0:T(8,128)}', space=vmem, size = 0x18000, scoped, tag = 'scratch operand']
  #allocation3 [shape = 'f32[8,18,18]{2,1,0:T(8,128)}', space=vmem, size = 0x18000, scoped, tag = 'scratch operand']
  %s0 = inlined_call_operand.hbm [shape: f32[2,4,16,16], index: 0, kind: input, shape index: {}]
  %s1 = inlined_call_operand.vmem [shape: f32[8,72], index: 1, kind: input, shape index: {}]
  %s2 = inlined_call_operand.vmem [shape: f32[8,1], index: 2, kind: input, shape index: {}]
  %s3 = inlined_call_operand.vmem [shape: f32[8,72], index: 3, kind: input, shape index: {}]
  %s4 = inlined_call_operand.vmem [shape: f32[8,1], index: 4, kind: input, shape index: {}]
  %s5 = inlined_call_operand.hbm [shape: f32[10,2048], index: 5, kind: input, shape index: {}]
  %s6 = inlined_call_operand.vmem [shape: f32[1,10], index: 6, kind: input, shape index: {}]
  %s7 = inlined_call_operand.hbm [shape: f32[2,1,10], index: 7, kind: output, shape index: {}]
  %s8 = sld [smem:[#allocation0]]
  $region69: #{neural_net_forward.1} parent=0
    _
  %s10 = ssub.s32 1, %s8
  %s11 = scalar_select 0, %s10, %s8
  $region1: #{neural_net_forward.1} parent=0
    #allocation4 [shape = 'u8[65536]{0}', space=vmem, size = 0x10000, scoped, tag = 'input window, operand 0']
    #allocation5 [shape = 's32[2]{0}', space=sflag, size = 0x8, scoped, tag = 'scoped memory for neural_net_forward.1']
    #allocation6 [shape = 's32[2]{0}', space=sflag, size = 0x8, scoped, tag = 'scoped memory for neural_net_forward.1']
    #allocation7 [shape = 'u8[131072]{0}', space=vmem, size = 0x20000, scoped, tag = 'input window, operand 5, single buffered']
    #allocation8 [shape = 's32[1]{0}', space=sflag, size = 0x4, scoped, tag = 'scoped memory for neural_net_forward.1']
    #allocation9 [shape = 'u8[1024]{0}', space=vmem, size = 0x400, scoped, tag = 'output window, operand 0']
    %12 = vsyncpa [#allocation5], 0
    %s13 = scalar_lea.sflag [#allocation5], 1
    %14 = vsyncpa %s13, 0
    %15 = vsyncpa [#allocation8], 0
    %16 = vsyncpa [#allocation6], 0
    %s17 = scalar_lea.sflag [#allocation6], 1
    %18 = vsyncpa %s17, 0
    loop: start=0, step=1, limit=4
    $region2: #{neural_net_forward.1} parent=1 // loop_pre_header
      _
    $region3: #{neural_net_forward.1} parent=1 // loop_header
      %s20 = sphi 0, %s24
      %p21 = scmp.ge.s32.totalorder %s20, 4
      %s30 = sphi 0, %s32
      %s33 = sphi 0, %s30
      %s34 = sphi 0, %s33
      %s50 = sphi 0, %s34
      %s54 = sphi 0, %s54
      %s56 = sphi 0, %s54
      %s57 = sphi 0, %s56
      %s71 = sphi 0, %s57
      %s75 = sphi 0, %s75
      %s77 = sphi 0, %s75
      %s78 = sphi 0, %s77
      %s92 = sphi 0, %s78
      %s96 = sphi 0, %s96
      %s98 = sphi 0, %s96
      %s99 = sphi 0, %s98
      %s113 = sphi 0, %s99
      %s117 = sphi 0, %s117
      %s119 = sphi 0, %s117
      %s120 = sphi 0, %s119
      %s134 = sphi 0, %s120
      %s138 = sphi 0, %s138
      %s140 = sphi 0, %s138
      %s141 = sphi 0, %s140
      %s155 = sphi 0, %s141
      %s159 = sphi 0, %s159
      %s161 = sphi 0, %s159
      %s162 = sphi 0, %s161
      %s176 = sphi 0, %s162
      %s182 = sphi 0, %s184
      %s185 = sphi 0, %s182
      %s186 = sphi 0, %s185
      %s202 = sphi 0, %s186
    $region4: #{neural_net_forward.1} parent=1 // loop_header_branch
      %23 = sbr.rel (%p21) target = $region8
    $region5: #{neural_net_forward.1} parent=1 // loop_body
      %s25 = ssub.s32 %s20, 1
      %s26 = ssub.s32 %s20, 2
      %s27 = sadd.s32 %s20, 1
      %s28 = ssub.s32 %s20, %s27
      %p29 = scmp.eq.s32.totalorder %s28, 0
      %s31 = sadd.s32 %s30, 1
      %s32 = scalar_select %p29, %s30, %s31
      %p35 = pneg %p29
      %p36 = scmp.eq.s32.totalorder %s20, 1
      %p37 = por %p35, %p36
      %p38 = scmp.ne.s32.totalorder %s30, %s33
      %p39 = scmp.eq.s32.totalorder %s20, 0
      %p40 = por %p38, %p39
      %p41 = scmp.ne.s32.totalorder %s30, %s33
      %p42 = scmp.eq.s32.totalorder %s25, 1
      %p43 = por %p41, %p42
      %p44 = scmp.ne.s32.totalorder %s33, %s34
      %p45 = scmp.eq.s32.totalorder %s25, 0
      %p46 = por %p44, %p45
      %p47 = scmp.ne.s32.totalorder %s33, %s34
      %p48 = scmp.eq.s32.totalorder %s26, 1
      %p49 = por %p47, %p48
      %p51 = scmp.ne.s32.totalorder %s34, %s50
      %p52 = scmp.eq.s32.totalorder %s26, 0
      %p53 = por %p51, %p52
      %s55 = sadd.s32 %s54, 1
      %p58 = scmp.eq.s32.totalorder %s20, 1
      %p59 = scmp.ne.s32.totalorder %s54, %s56
      %p60 = scmp.eq.s32.totalorder %s20, 0
      %p61 = por %p59, %p60
      %p62 = scmp.ne.s32.totalorder %s54, %s56
      %p63 = scmp.eq.s32.totalorder %s25, 1
      %p64 = por %p62, %p63
      %p65 = scmp.ne.s32.totalorder %s56, %s57
      %p66 = scmp.eq.s32.totalorder %s25, 0
      %p67 = por %p65, %p66
      %p68 = scmp.ne.s32.totalorder %s56, %s57
      %p69 = scmp.eq.s32.totalorder %s26, 1
      %p70 = por %p68, %p69
      %p72 = scmp.ne.s32.totalorder %s57, %s71
      %p73 = scmp.eq.s32.totalorder %s26, 0
      %p74 = por %p72, %p73
      %s76 = sadd.s32 %s75, 1
      %p79 = scmp.eq.s32.totalorder %s20, 1
      %p80 = scmp.ne.s32.totalorder %s75, %s77
      %p81 = scmp.eq.s32.totalorder %s20, 0
      %p82 = por %p80, %p81
      %p83 = scmp.ne.s32.totalorder %s75, %s77
      %p84 = scmp.eq.s32.totalorder %s25, 1
      %p85 = por %p83, %p84
      %p86 = scmp.ne.s32.totalorder %s77, %s78
      %p87 = scmp.eq.s32.totalorder %s25, 0
      %p88 = por %p86, %p87
      %p89 = scmp.ne.s32.totalorder %s77, %s78
      %p90 = scmp.eq.s32.totalorder %s26, 1
      %p91 = por %p89, %p90
      %p93 = scmp.ne.s32.totalorder %s78, %s92
      %p94 = scmp.eq.s32.totalorder %s26, 0
      %p95 = por %p93, %p94
      %s97 = sadd.s32 %s96, 1
      %p100 = scmp.eq.s32.totalorder %s20, 1
      %p101 = scmp.ne.s32.totalorder %s96, %s98
      %p102 = scmp.eq.s32.totalorder %s20, 0
      %p103 = por %p101, %p102
      %p104 = scmp.ne.s32.totalorder %s96, %s98
      %p105 = scmp.eq.s32.totalorder %s25, 1
      %p106 = por %p104, %p105
      %p107 = scmp.ne.s32.totalorder %s98, %s99
      %p108 = scmp.eq.s32.totalorder %s25, 0
      %p109 = por %p107, %p108
      %p110 = scmp.ne.s32.totalorder %s98, %s99
      %p111 = scmp.eq.s32.totalorder %s26, 1
      %p112 = por %p110, %p111
      %p114 = scmp.ne.s32.totalorder %s99, %s113
      %p115 = scmp.eq.s32.totalorder %s26, 0
      %p116 = por %p114, %p115
      %s118 = sadd.s32 %s117, 1
      %p121 = scmp.eq.s32.totalorder %s20, 1
      %p122 = scmp.ne.s32.totalorder %s117, %s119
      %p123 = scmp.eq.s32.totalorder %s20, 0
      %p124 = por %p122, %p123
      %p125 = scmp.ne.s32.totalorder %s117, %s119
      %p126 = scmp.eq.s32.totalorder %s25, 1
      %p127 = por %p125, %p126
      %p128 = scmp.ne.s32.totalorder %s119, %s120
      %p129 = scmp.eq.s32.totalorder %s25, 0
      %p130 = por %p128, %p129
      %p131 = scmp.ne.s32.totalorder %s119, %s120
      %p132 = scmp.eq.s32.totalorder %s26, 1
      %p133 = por %p131, %p132
      %p135 = scmp.ne.s32.totalorder %s120, %s134
      %p136 = scmp.eq.s32.totalorder %s26, 0
      %p137 = por %p135, %p136
      %s139 = sadd.s32 %s138, 1
      %p142 = scmp.eq.s32.totalorder %s20, 1
      %p143 = scmp.ne.s32.totalorder %s138, %s140
      %p144 = scmp.eq.s32.totalorder %s20, 0
      %p145 = por %p143, %p144
      %p146 = scmp.ne.s32.totalorder %s138, %s140
      %p147 = scmp.eq.s32.totalorder %s25, 1
      %p148 = por %p146, %p147
      %p149 = scmp.ne.s32.totalorder %s140, %s141
      %p150 = scmp.eq.s32.totalorder %s25, 0
      %p151 = por %p149, %p150
      %p152 = scmp.ne.s32.totalorder %s140, %s141
      %p153 = scmp.eq.s32.totalorder %s26, 1
      %p154 = por %p152, %p153
      %p156 = scmp.ne.s32.totalorder %s141, %s155
      %p157 = scmp.eq.s32.totalorder %s26, 0
      %p158 = por %p156, %p157
      %s160 = sadd.s32 %s159, 1
      %p163 = scmp.eq.s32.totalorder %s20, 1
      %p164 = scmp.ne.s32.totalorder %s159, %s161
      %p165 = scmp.eq.s32.totalorder %s20, 0
      %p166 = por %p164, %p165
      %p167 = scmp.ne.s32.totalorder %s159, %s161
      %p168 = scmp.eq.s32.totalorder %s25, 1
      %p169 = por %p167, %p168
      %p170 = scmp.ne.s32.totalorder %s161, %s162
      %p171 = scmp.eq.s32.totalorder %s25, 0
      %p172 = por %p170, %p171
      %p173 = scmp.ne.s32.totalorder %s161, %s162
      %p174 = scmp.eq.s32.totalorder %s26, 1
      %p175 = por %p173, %p174
      %p177 = scmp.ne.s32.totalorder %s162, %s176
      %p178 = scmp.eq.s32.totalorder %s26, 0
      %p179 = por %p177, %p178
      %s180 = ssub.s32 %s20, %s27
      %p181 = scmp.eq.s32.totalorder %s180, 0
      %s183 = sadd.s32 %s182, 1
      %s184 = scalar_select %p181, %s182, %s183
      %p187 = pneg %p181
      %p188 = scmp.eq.s32.totalorder %s20, 1
      %p189 = por %p187, %p188
      %p190 = scmp.ne.s32.totalorder %s182, %s185
      %p191 = scmp.eq.s32.totalorder %s20, 0
      %p192 = por %p190, %p191
      %p193 = scmp.ne.s32.totalorder %s182, %s185
      %p194 = scmp.eq.s32.totalorder %s25, 1
      %p195 = por %p193, %p194
      %p196 = scmp.ne.s32.totalorder %s185, %s186
      %p197 = scmp.eq.s32.totalorder %s25, 0
      %p198 = por %p196, %p197
      %p199 = scmp.ne.s32.totalorder %s185, %s186
      %p200 = scmp.eq.s32.totalorder %s26, 1
      %p201 = por %p199, %p200
      %p203 = scmp.ne.s32.totalorder %s186, %s202
      %p204 = scmp.eq.s32.totalorder %s26, 0
      %p205 = por %p203, %p204
      %p206 = scmp.le.s32.totalorder 1, %s20
      %p207 = scmp.lt.s32.totalorder %s20, 3
      %p208 = pnand %p206, %p207
      %p209 = pneg %p208
      // Predicated region
      $region9: #{neural_net_forward.1} parent=5 // pred_check
        _
      $region10: #{neural_net_forward.1} parent=5 // pred_check_branch
        %211 = sbr.rel (%p208) target = $region12
      $region11: #{neural_net_forward.1} parent=5 // pred_region
        %s212 = ssub.s32 %s20, 1
        // Predicated region
        $region13: #{neural_net_forward.1} parent=11 // pred_check
          %p213 = pneg %p67
        $region14: #{neural_net_forward.1} parent=11 // pred_check_branch
          %215 = sbr.rel (%p213) target = $region16
        $region15: #{neural_net_forward.1} parent=11 // pred_region
          _
        $region16: #{neural_net_forward.1} parent=11 // pred_fallthru
          _
        // Predicated region
        $region17: #{neural_net_forward.1} parent=11 // pred_check
          %p216 = pneg %p88
        $region18: #{neural_net_forward.1} parent=11 // pred_check_branch
          %218 = sbr.rel (%p216) target = $region20
        $region19: #{neural_net_forward.1} parent=11 // pred_region
          _
        $region20: #{neural_net_forward.1} parent=11 // pred_fallthru
          _
        // Predicated region
        $region21: #{neural_net_forward.1} parent=11 // pred_check
          %p219 = pneg %p109
        $region22: #{neural_net_forward.1} parent=11 // pred_check_branch
          %221 = sbr.rel (%p219) target = $region24
        $region23: #{neural_net_forward.1} parent=11 // pred_region
          _
        $region24: #{neural_net_forward.1} parent=11 // pred_fallthru
          _
        // Predicated region
        $region25: #{neural_net_forward.1} parent=11 // pred_check
          %p222 = pneg %p130
        $region26: #{neural_net_forward.1} parent=11 // pred_check_branch
          %224 = sbr.rel (%p222) target = $region28
        $region27: #{neural_net_forward.1} parent=11 // pred_region
          _
        $region28: #{neural_net_forward.1} parent=11 // pred_fallthru
          _
        // Predicated region
        $region29: #{neural_net_forward.1} parent=11 // pred_check
          %p225 = pneg %p151
        $region30: #{neural_net_forward.1} parent=11 // pred_check_branch
          %227 = sbr.rel (%p225) target = $region32
        $region31: #{neural_net_forward.1} parent=11 // pred_region
          %229 = vsyncadd [#allocation8], 0
          %s230 = sshll.u32 %s5, 4
          %s231 = int_to_ptr.hbm [resolvable:$true] %s230
          %s232 = sshll.u32 [#allocation7], 4
          %s233 = int_to_ptr.vmem [resolvable:$true] %s232
          %238 = dma.hbm_to_vmem [thread:$0]  %s231, 4096, %s233, [#allocation8], 2048, 2048, 128
        $region32: #{neural_net_forward.1} parent=11 // pred_fallthru
          _
        // Predicated region
        $region33: #{neural_net_forward.1} parent=11 // pred_check
          %p239 = pneg %p172
        $region34: #{neural_net_forward.1} parent=11 // pred_check_branch
          %241 = sbr.rel (%p239) target = $region36
        $region35: #{neural_net_forward.1} parent=11 // pred_region
          _
        $region36: #{neural_net_forward.1} parent=11 // pred_fallthru
          _
      $region12: #{neural_net_forward.1} parent=5 // pred_fallthru
        _
      %p242 = scmp.lt.s32.totalorder %s20, 2
      // Predicated region
      $region37: #{neural_net_forward.1} parent=5 // pred_check
        %p243 = pneg %p242
      $region38: #{neural_net_forward.1} parent=5 // pred_check_branch
        %245 = sbr.rel (%p243) target = $region40
      $region39: #{neural_net_forward.1} parent=5 // pred_region
        // Predicated region
        $region41: #{neural_net_forward.1} parent=39 // pred_check
          %p246 = pneg %p40
        $region42: #{neural_net_forward.1} parent=39 // pred_check_branch
          %248 = sbr.rel (%p246) target = $region44
        $region43: #{neural_net_forward.1} parent=39 // pred_region
          %s249 = sand.u32 %s30, 1
          %s250 = scalar_lea.sflag [#allocation5], %s249
          %s251 = sand.u32 %s30, 1
          %s252 = smul.addr %s251, 64
          %s253 = scalar_lea.vmem [#allocation4], %s252
          %255 = vsyncadd %s250, 0
          %s256 = smul.addr %s20, 8
          %s257 = smul.addr %s256, 8
          %s258 = scalar_lea.hbm %s0, %s257
          %s259 = sshll.u32 %s258, 4
          %s260 = int_to_ptr.hbm [resolvable:$true] %s259
          %s261 = sshll.u32 %s253, 4
          %s262 = int_to_ptr.vmem [resolvable:$true] %s261
          %267 = dma.hbm_to_vmem [thread:$0]  %s260, 1024, %s262, %s250, 128, 128, 8
        $region44: #{neural_net_forward.1} parent=39 // pred_fallthru
          _
      $region40: #{neural_net_forward.1} parent=5 // pred_fallthru
        _
      %p268 = scmp.le.s32.totalorder 1, %s20
      %p269 = scmp.lt.s32.totalorder %s20, 3
      %p270 = pnand %p268, %p269
      %p271 = pneg %p270
      // Predicated region
      $region45: #{neural_net_forward.1} parent=5 // pred_check
        _
      $region46: #{neural_net_forward.1} parent=5 // pred_check_branch
        %273 = sbr.rel (%p270) target = $region48
      $region47: #{neural_net_forward.1} parent=5 // pred_region
        %s274 = ssub.s32 %s20, 1
        %s275 = sand.u32 %s33, 1
        %s276 = scalar_lea.sflag [#allocation5], %s275
        %s277 = sand.u32 %s33, 1
        %s278 = smul.addr %s277, 64
        %s279 = scalar_lea.vmem [#allocation4], %s278
        // Predicated region
        $region49: #{neural_net_forward.1} parent=47 // pred_check
          %p280 = pneg %p46
        $region50: #{neural_net_forward.1} parent=47 // pred_check_branch
          %282 = sbr.rel (%p280) target = $region52
        $region51: #{neural_net_forward.1} parent=47 // pred_region
          %284 = dma.done %s276, 1024
        $region52: #{neural_net_forward.1} parent=47 // pred_fallthru
          _
        // Predicated region
        $region53: #{neural_net_forward.1} parent=47 // pred_check
          %p285 = pneg %p151
        $region54: #{neural_net_forward.1} parent=47 // pred_check_branch
          %287 = sbr.rel (%p285) target = $region56
        $region55: #{neural_net_forward.1} parent=47 // pred_region
          %289 = dma.done [#allocation8], 4096
        $region56: #{neural_net_forward.1} parent=47 // pred_fallthru
          _
        %s290 = sand.u32 %s33, 1
        %s291 = scalar_lea.sflag [#allocation5], %s290
        %s292 = sand.u32 %s33, 1
        %s293 = smul.addr %s292, 64
        %s294 = scalar_lea.vmem [#allocation4], %s293
        %p295 = pneg %p46
        %p296 = pneg %p43
        %p297 = pneg %p67
        %p298 = pneg %p64
        %p299 = pneg %p88
        %p300 = pneg %p85
        %p301 = pneg %p109
        %p302 = pneg %p106
        %p303 = pneg %p130
        %p304 = pneg %p127
        %p305 = pneg %p151
        %p306 = pneg %p148
        %p307 = pneg %p172
        %p308 = pneg %p169
        %p309 = pneg %p198
        %p310 = pneg %p195
        %s311 = sand.u32 %s185, 1
        %s312 = scalar_lea.sflag [#allocation6], %s311
        %s313 = sand.u32 %s185, 1
        %s314 = scalar_lea.vmem [#allocation9], %s313
        %v315 = vld [vmem:[%s279] sm:$0xff]
        %v316 = vld [vmem:[%s279 + $0x8] sm:$0xff]
        %v317 = vld [vmem:[%s279 + $0x10] sm:$0xff]
        %v318 = vld [vmem:[%s279 + $0x18] sm:$0xff]
        %v319 = vld [vmem:[%s279 + $0x20] sm:$0xff]
        %v320 = vld [vmem:[%s279 + $0x28] sm:$0xff]
        %v321 = vld [vmem:[%s279 + $0x30] sm:$0xff]
        %v322 = vld [vmem:[%s279 + $0x38] sm:$0xff]
        %vm323 = vcmask 146432
        %324 = vst.msk [vmem:[#allocation2] sm:$0xff] %vm323, 0.0
        %325 = vst.msk [vmem:[#allocation2 + $0x8] sm:$0xff] %vm323, 0.0
        %vm326 = vcmask 140288
        %327 = vst.msk [vmem:[#allocation2 + $0x10] sm:$0x3] %vm326, 0.0
        %328 = vst.msk [vmem:[#allocation2 + $0x18] sm:$0xff] %vm323, 0.0
        %329 = vst.msk [vmem:[#allocation2 + $0x20] sm:$0xff] %vm323, 0.0
        %330 = vst.msk [vmem:[#allocation2 + $0x28] sm:$0x3] %vm326, 0.0
        %331 = vst.msk [vmem:[#allocation2 + $0x30] sm:$0xff] %vm323, 0.0
        %332 = vst.msk [vmem:[#allocation2 + $0x38] sm:$0xff] %vm323, 0.0
        %333 = vst.msk [vmem:[#allocation2 + $0x40] sm:$0x3] %vm326, 0.0
        %334 = vst.msk [vmem:[#allocation2 + $0x48] sm:$0xff] %vm323, 0.0
        %335 = vst.msk [vmem:[#allocation2 + $0x50] sm:$0xff] %vm323, 0.0
        %336 = vst.msk [vmem:[#allocation2 + $0x58] sm:$0x3] %vm326, 0.0
        %337 = vst.msk [vmem:[#allocation2 + $0x60] sm:$0xff] %vm323, 0.0
        %338 = vst.msk [vmem:[#allocation2 + $0x68] sm:$0xff] %vm323, 0.0
        %339 = vst.msk [vmem:[#allocation2 + $0x70] sm:$0x3] %vm326, 0.0
        %340 = vst.msk [vmem:[#allocation2 + $0x78] sm:$0xff] %vm323, 0.0
        %341 = vst.msk [vmem:[#allocation2 + $0x80] sm:$0xff] %vm323, 0.0
        %342 = vst.msk [vmem:[#allocation2 + $0x88] sm:$0x3] %vm326, 0.0
        %343 = vst.msk [vmem:[#allocation2 + $0x90] sm:$0xff] %vm323, 0.0
        %344 = vst.msk [vmem:[#allocation2 + $0x98] sm:$0xff] %vm323, 0.0
        %345 = vst.msk [vmem:[#allocation2 + $0xa0] sm:$0x3] %vm326, 0.0
        %346 = vst.msk [vmem:[#allocation2 + $0xa8] sm:$0xff] %vm323, 0.0
        %347 = vst.msk [vmem:[#allocation2 + $0xb0] sm:$0xff] %vm323, 0.0
        %348 = vst.msk [vmem:[#allocation2 + $0xb8] sm:$0x3] %vm326, 0.0
        %357 = vrot.lane.b32.xlu0 %v315, 1
        %v358 = vpop.permute.xlu0 %357
        %359 = vrot.lane.b32.xlu0 %v316, 1
        %v360 = vpop.permute.xlu0 %359
        %361 = vrot.lane.b32.xlu0 %v317, 1
        %v362 = vpop.permute.xlu0 %361
        %363 = vrot.lane.b32.xlu0 %v318, 1
        %v364 = vpop.permute.xlu0 %363
        %365 = vrot.lane.b32.xlu0 %v319, 1
        %v366 = vpop.permute.xlu0 %365
        %367 = vrot.lane.b32.xlu0 %v320, 1
        %v368 = vpop.permute.xlu0 %367
        %369 = vrot.lane.b32.xlu0 %v321, 1
        %v370 = vpop.permute.xlu0 %369
        %371 = vrot.lane.b32.xlu0 %v322, 1
        %v372 = vpop.permute.xlu0 %371
        %vm381 = vcmask 138248
        %382 = vst.msk [vmem:[#allocation2 + $0x1] sm:$0xff] %vm381, %v358
        %383 = vst.msk [vmem:[#allocation2 + $0x9] sm:$0xff] %vm381, %v360
        %384 = vst.msk [vmem:[#allocation2 + $0x19] sm:$0xff] %vm381, %v362
        %385 = vst.msk [vmem:[#allocation2 + $0x21] sm:$0xff] %vm381, %v364
        %386 = vst.msk [vmem:[#allocation2 + $0x31] sm:$0xff] %vm381, %v366
        %387 = vst.msk [vmem:[#allocation2 + $0x39] sm:$0xff] %vm381, %v368
        %388 = vst.msk [vmem:[#allocation2 + $0x49] sm:$0xff] %vm381, %v370
        %389 = vst.msk [vmem:[#allocation2 + $0x51] sm:$0xff] %vm381, %v372
        %v390 = vld [vmem:[#allocation2] sm:$0xff]
        %v391 = vld [vmem:[#allocation2 + $0x8] sm:$0xff]
        %v392 = vld [vmem:[#allocation2 + $0x18] sm:$0xff]
        %v393 = vld [vmem:[#allocation2 + $0x20] sm:$0xff]
        %v394 = vld [vmem:[#allocation2 + $0x30] sm:$0xff]
        %v395 = vld [vmem:[#allocation2 + $0x38] sm:$0xff]
        %v396 = vld [vmem:[#allocation2 + $0x48] sm:$0xff]
        %v397 = vld [vmem:[#allocation2 + $0x50] sm:$0xff]
        %v398 = vld [vmem:[#allocation2 + $0x60] sm:$0xff]
        %v399 = vld [vmem:[#allocation2 + $0x68] sm:$0xff]
        %v400 = vld [vmem:[#allocation2 + $0x78] sm:$0xff]
        %v401 = vld [vmem:[#allocation2 + $0x80] sm:$0xff]
        %v402 = vld [vmem:[#allocation2 + $0x90] sm:$0xff]
        %v403 = vld [vmem:[#allocation2 + $0x98] sm:$0xff]
        %v404 = vld [vmem:[#allocation2 + $0xa8] sm:$0xff]
        %v405 = vld [vmem:[#allocation2 + $0xb0] sm:$0xff]
        %v406 = vld [vmem:[#allocation2 + $0x1] sm:$0xff]
        %v407 = vld [vmem:[#allocation2 + $0x9] sm:$0xff]
        %v408 = vld [vmem:[#allocation2 + $0x19] sm:$0xff]
        %v409 = vld [vmem:[#allocation2 + $0x21] sm:$0xff]
        %v410 = vld [vmem:[#allocation2 + $0x31] sm:$0xff]
        %v411 = vld [vmem:[#allocation2 + $0x39] sm:$0xff]
        %v412 = vld [vmem:[#allocation2 + $0x49] sm:$0xff]
        %v413 = vld [vmem:[#allocation2 + $0x51] sm:$0xff]
        %v414 = vld [vmem:[#allocation2 + $0x61] sm:$0xff]
        %v415 = vld [vmem:[#allocation2 + $0x69] sm:$0xff]
        %v416 = vld [vmem:[#allocation2 + $0x79] sm:$0xff]
        %v417 = vld [vmem:[#allocation2 + $0x81] sm:$0xff]
        %v418 = vld [vmem:[#allocation2 + $0x91] sm:$0xff]
        %v419 = vld [vmem:[#allocation2 + $0x99] sm:$0xff]
        %v420 = vld [vmem:[#allocation2 + $0xa9] sm:$0xff]
        %v421 = vld [vmem:[#allocation2 + $0xb1] sm:$0xff]
        %v422 = vld [vmem:[#allocation2 + $0x2] sm:$0xff]
        %v423 = vld [vmem:[#allocation2 + $0xa] sm:$0xff]
        %v424 = vld [vmem:[#allocation2 + $0x1a] sm:$0xff]
        %v425 = vld [vmem:[#allocation2 + $0x22] sm:$0xff]
        %v426 = vld [vmem:[#allocation2 + $0x32] sm:$0xff]
        %v427 = vld [vmem:[#allocation2 + $0x3a] sm:$0xff]
        %v428 = vld [vmem:[#allocation2 + $0x4a] sm:$0xff]
        %v429 = vld [vmem:[#allocation2 + $0x52] sm:$0xff]
        %v430 = vld [vmem:[#allocation2 + $0x62] sm:$0xff]
        %v431 = vld [vmem:[#allocation2 + $0x6a] sm:$0xff]
        %v432 = vld [vmem:[#allocation2 + $0x7a] sm:$0xff]
        %v433 = vld [vmem:[#allocation2 + $0x82] sm:$0xff]
        %v434 = vld [vmem:[#allocation2 + $0x92] sm:$0xff]
        %v435 = vld [vmem:[#allocation2 + $0x9a] sm:$0xff]
        %v436 = vld [vmem:[#allocation2 + $0xaa] sm:$0xff]
        %v437 = vld [vmem:[#allocation2 + $0xb2] sm:$0xff]
        %454 = vrot.lane.b32.xlu0 %v390, 127
        %v455 = vpop.permute.xlu0 %454
        %456 = vrot.lane.b32.xlu0 %v391, 127
        %v457 = vpop.permute.xlu0 %456
        %458 = vrot.lane.b32.xlu0 %v392, 127
        %v459 = vpop.permute.xlu0 %458
        %460 = vrot.lane.b32.xlu0 %v393, 127
        %v461 = vpop.permute.xlu0 %460
        %462 = vrot.lane.b32.xlu0 %v394, 127
        %v463 = vpop.permute.xlu0 %462
        %464 = vrot.lane.b32.xlu0 %v395, 127
        %v465 = vpop.permute.xlu0 %464
        %466 = vrot.lane.b32.xlu0 %v396, 127
        %v467 = vpop.permute.xlu0 %466
        %468 = vrot.lane.b32.xlu0 %v397, 127
        %v469 = vpop.permute.xlu0 %468
        %470 = vrot.lane.b32.xlu0 %v398, 127
        %v471 = vpop.permute.xlu0 %470
        %472 = vrot.lane.b32.xlu0 %v399, 127
        %v473 = vpop.permute.xlu0 %472
        %474 = vrot.lane.b32.xlu0 %v400, 127
        %v475 = vpop.permute.xlu0 %474
        %476 = vrot.lane.b32.xlu0 %v401, 127
        %v477 = vpop.permute.xlu0 %476
        %478 = vrot.lane.b32.xlu0 %v402, 127
        %v479 = vpop.permute.xlu0 %478
        %480 = vrot.lane.b32.xlu0 %v403, 127
        %v481 = vpop.permute.xlu0 %480
        %482 = vrot.lane.b32.xlu0 %v404, 127
        %v483 = vpop.permute.xlu0 %482
        %484 = vrot.lane.b32.xlu0 %v405, 127
        %v485 = vpop.permute.xlu0 %484
        %502 = vrot.lane.b32.xlu0 %v390, 126
        %v503 = vpop.permute.xlu0 %502
        %504 = vrot.lane.b32.xlu0 %v391, 126
        %v505 = vpop.permute.xlu0 %504
        %506 = vrot.lane.b32.xlu0 %v392, 126
        %v507 = vpop.permute.xlu0 %506
        %508 = vrot.lane.b32.xlu0 %v393, 126
        %v509 = vpop.permute.xlu0 %508
        %510 = vrot.lane.b32.xlu0 %v394, 126
        %v511 = vpop.permute.xlu0 %510
        %512 = vrot.lane.b32.xlu0 %v395, 126
        %v513 = vpop.permute.xlu0 %512
        %514 = vrot.lane.b32.xlu0 %v396, 126
        %v515 = vpop.permute.xlu0 %514
        %516 = vrot.lane.b32.xlu0 %v397, 126
        %v517 = vpop.permute.xlu0 %516
        %518 = vrot.lane.b32.xlu0 %v398, 126
        %v519 = vpop.permute.xlu0 %518
        %520 = vrot.lane.b32.xlu0 %v399, 126
        %v521 = vpop.permute.xlu0 %520
        %522 = vrot.lane.b32.xlu0 %v400, 126
        %v523 = vpop.permute.xlu0 %522
        %524 = vrot.lane.b32.xlu0 %v401, 126
        %v525 = vpop.permute.xlu0 %524
        %526 = vrot.lane.b32.xlu0 %v402, 126
        %v527 = vpop.permute.xlu0 %526
        %528 = vrot.lane.b32.xlu0 %v403, 126
        %v529 = vpop.permute.xlu0 %528
        %530 = vrot.lane.b32.xlu0 %v404, 126
        %v531 = vpop.permute.xlu0 %530
        %532 = vrot.lane.b32.xlu0 %v405, 126
        %v533 = vpop.permute.xlu0 %532
        %566 = vrot.lane.b32.xlu0 %v406, 127
        %v567 = vpop.permute.xlu0 %566
        %568 = vrot.lane.b32.xlu0 %v407, 127
        %v569 = vpop.permute.xlu0 %568
        %570 = vrot.lane.b32.xlu0 %v408, 127
        %v571 = vpop.permute.xlu0 %570
        %572 = vrot.lane.b32.xlu0 %v409, 127
        %v573 = vpop.permute.xlu0 %572
        %574 = vrot.lane.b32.xlu0 %v410, 127
        %v575 = vpop.permute.xlu0 %574
        %576 = vrot.lane.b32.xlu0 %v411, 127
        %v577 = vpop.permute.xlu0 %576
        %578 = vrot.lane.b32.xlu0 %v412, 127
        %v579 = vpop.permute.xlu0 %578
        %580 = vrot.lane.b32.xlu0 %v413, 127
        %v581 = vpop.permute.xlu0 %580
        %582 = vrot.lane.b32.xlu0 %v414, 127
        %v583 = vpop.permute.xlu0 %582
        %584 = vrot.lane.b32.xlu0 %v415, 127
        %v585 = vpop.permute.xlu0 %584
        %586 = vrot.lane.b32.xlu0 %v416, 127
        %v587 = vpop.permute.xlu0 %586
        %588 = vrot.lane.b32.xlu0 %v417, 127
        %v589 = vpop.permute.xlu0 %588
        %590 = vrot.lane.b32.xlu0 %v418, 127
        %v591 = vpop.permute.xlu0 %590
        %592 = vrot.lane.b32.xlu0 %v419, 127
        %v593 = vpop.permute.xlu0 %592
        %594 = vrot.lane.b32.xlu0 %v420, 127
        %v595 = vpop.permute.xlu0 %594
        %596 = vrot.lane.b32.xlu0 %v421, 127
        %v597 = vpop.permute.xlu0 %596
        %614 = vrot.lane.b32.xlu0 %v406, 126
        %v615 = vpop.permute.xlu0 %614
        %616 = vrot.lane.b32.xlu0 %v407, 126
        %v617 = vpop.permute.xlu0 %616
        %618 = vrot.lane.b32.xlu0 %v408, 126
        %v619 = vpop.permute.xlu0 %618
        %620 = vrot.lane.b32.xlu0 %v409, 126
        %v621 = vpop.permute.xlu0 %620
        %622 = vrot.lane.b32.xlu0 %v410, 126
        %v623 = vpop.permute.xlu0 %622
        %624 = vrot.lane.b32.xlu0 %v411, 126
        %v625 = vpop.permute.xlu0 %624
        %626 = vrot.lane.b32.xlu0 %v412, 126
        %v627 = vpop.permute.xlu0 %626
        %628 = vrot.lane.b32.xlu0 %v413, 126
        %v629 = vpop.permute.xlu0 %628
        %630 = vrot.lane.b32.xlu0 %v414, 126
        %v631 = vpop.permute.xlu0 %630
        %632 = vrot.lane.b32.xlu0 %v415, 126
        %v633 = vpop.permute.xlu0 %632
        %634 = vrot.lane.b32.xlu0 %v416, 126
        %v635 = vpop.permute.xlu0 %634
        %636 = vrot.lane.b32.xlu0 %v417, 126
        %v637 = vpop.permute.xlu0 %636
        %638 = vrot.lane.b32.xlu0 %v418, 126
        %v639 = vpop.permute.xlu0 %638
        %640 = vrot.lane.b32.xlu0 %v419, 126
        %v641 = vpop.permute.xlu0 %640
        %642 = vrot.lane.b32.xlu0 %v420, 126
        %v643 = vpop.permute.xlu0 %642
        %644 = vrot.lane.b32.xlu0 %v421, 126
        %v645 = vpop.permute.xlu0 %644
        %678 = vrot.lane.b32.xlu0 %v422, 127
        %v679 = vpop.permute.xlu0 %678
        %680 = vrot.lane.b32.xlu0 %v423, 127
        %v681 = vpop.permute.xlu0 %680
        %682 = vrot.lane.b32.xlu0 %v424, 127
        %v683 = vpop.permute.xlu0 %682
        %684 = vrot.lane.b32.xlu0 %v425, 127
        %v685 = vpop.permute.xlu0 %684
        %686 = vrot.lane.b32.xlu0 %v426, 127
        %v687 = vpop.permute.xlu0 %686
        %688 = vrot.lane.b32.xlu0 %v427, 127
        %v689 = vpop.permute.xlu0 %688
        %690 = vrot.lane.b32.xlu0 %v428, 127
        %v691 = vpop.permute.xlu0 %690
        %692 = vrot.lane.b32.xlu0 %v429, 127
        %v693 = vpop.permute.xlu0 %692
        %694 = vrot.lane.b32.xlu0 %v430, 127
        %v695 = vpop.permute.xlu0 %694
        %696 = vrot.lane.b32.xlu0 %v431, 127
        %v697 = vpop.permute.xlu0 %696
        %698 = vrot.lane.b32.xlu0 %v432, 127
        %v699 = vpop.permute.xlu0 %698
        %700 = vrot.lane.b32.xlu0 %v433, 127
        %v701 = vpop.permute.xlu0 %700
        %702 = vrot.lane.b32.xlu0 %v434, 127
        %v703 = vpop.permute.xlu0 %702
        %704 = vrot.lane.b32.xlu0 %v435, 127
        %v705 = vpop.permute.xlu0 %704
        %706 = vrot.lane.b32.xlu0 %v436, 127
        %v707 = vpop.permute.xlu0 %706
        %708 = vrot.lane.b32.xlu0 %v437, 127
        %v709 = vpop.permute.xlu0 %708
        %726 = vrot.lane.b32.xlu0 %v422, 126
        %v727 = vpop.permute.xlu0 %726
        %728 = vrot.lane.b32.xlu0 %v423, 126
        %v729 = vpop.permute.xlu0 %728
        %730 = vrot.lane.b32.xlu0 %v424, 126
        %v731 = vpop.permute.xlu0 %730
        %732 = vrot.lane.b32.xlu0 %v425, 126
        %v733 = vpop.permute.xlu0 %732
        %734 = vrot.lane.b32.xlu0 %v426, 126
        %v735 = vpop.permute.xlu0 %734
        %736 = vrot.lane.b32.xlu0 %v427, 126
        %v737 = vpop.permute.xlu0 %736
        %738 = vrot.lane.b32.xlu0 %v428, 126
        %v739 = vpop.permute.xlu0 %738
        %740 = vrot.lane.b32.xlu0 %v429, 126
        %v741 = vpop.permute.xlu0 %740
        %742 = vrot.lane.b32.xlu0 %v430, 126
        %v743 = vpop.permute.xlu0 %742
        %744 = vrot.lane.b32.xlu0 %v431, 126
        %v745 = vpop.permute.xlu0 %744
        %746 = vrot.lane.b32.xlu0 %v432, 126
        %v747 = vpop.permute.xlu0 %746
        %748 = vrot.lane.b32.xlu0 %v433, 126
        %v749 = vpop.permute.xlu0 %748
        %750 = vrot.lane.b32.xlu0 %v434, 126
        %v751 = vpop.permute.xlu0 %750
        %752 = vrot.lane.b32.xlu0 %v435, 126
        %v753 = vpop.permute.xlu0 %752
        %754 = vrot.lane.b32.xlu0 %v436, 126
        %v755 = vpop.permute.xlu0 %754
        %756 = vrot.lane.b32.xlu0 %v437, 126
        %v757 = vpop.permute.xlu0 %756
        %v774 = vrot.slane %v394, 4
        %vm775 = vcmask 1047556
        %v776 = vsel %vm775, %v774, %v390
        %v777 = vrot.slane %v390, 4
        %v778 = vsel %vm775, %v394, %v777
        %v780 = vunpack.c.l.s4 1983009808
        %v781 = vunpack.c.0.s8 %v780
        %v782 = vperm.slane %v776, %v781
        %v784 = vunpack.c.l.s4 1983009808
        %v785 = vunpack.c.0.s8 %v784
        %v786 = vperm.slane %v778, %v785
        %v787 = vrot.slane %v396, 4
        %v788 = vsel %vm775, %v787, %v392
        %v789 = vrot.slane %v392, 4
        %v790 = vsel %vm775, %v396, %v789
        %v792 = vunpack.c.l.s4 1983009808
        %v793 = vunpack.c.0.s8 %v792
        %v794 = vperm.slane %v788, %v793
        %v796 = vunpack.c.l.s4 1983009808
        %v797 = vunpack.c.0.s8 %v796
        %v798 = vperm.slane %v790, %v797
        %v799 = vrot.slane %v402, 4
        %v800 = vsel %vm775, %v799, %v398
        %v801 = vrot.slane %v398, 4
        %v802 = vsel %vm775, %v402, %v801
        %v804 = vunpack.c.l.s4 1983009808
        %v805 = vunpack.c.0.s8 %v804
        %v806 = vperm.slane %v800, %v805
        %v808 = vunpack.c.l.s4 1983009808
        %v809 = vunpack.c.0.s8 %v808
        %v810 = vperm.slane %v802, %v809
        %v811 = vrot.slane %v404, 4
        %v812 = vsel %vm775, %v811, %v400
        %v813 = vrot.slane %v400, 4
        %v814 = vsel %vm775, %v404, %v813
        %v816 = vunpack.c.l.s4 1983009808
        %v817 = vunpack.c.0.s8 %v816
        %v818 = vperm.slane %v812, %v817
        %v820 = vunpack.c.l.s4 1983009808
        %v821 = vunpack.c.0.s8 %v820
        %v822 = vperm.slane %v814, %v821
        %v823 = vrot.slane %v794, 4
        %v824 = vsel %vm775, %v823, %v782
        %v825 = vrot.slane %v782, 4
        %v826 = vsel %vm775, %v794, %v825
        %v828 = vunpack.c.l.s4 1934713408
        %v829 = vunpack.c.0.s8 %v828
        %v830 = vperm.slane %v824, %v829
        %v832 = vunpack.c.l.s4 1934713408
        %v833 = vunpack.c.0.s8 %v832
        %v834 = vperm.slane %v826, %v833
        %v835 = vrot.slane %v798, 4
        %v836 = vsel %vm775, %v835, %v786
        %v837 = vrot.slane %v786, 4
        %v838 = vsel %vm775, %v798, %v837
        %v840 = vunpack.c.l.s4 1934713408
        %v841 = vunpack.c.0.s8 %v840
        %v842 = vperm.slane %v836, %v841
        %v844 = vunpack.c.l.s4 1934713408
        %v845 = vunpack.c.0.s8 %v844
        %v846 = vperm.slane %v838, %v845
        %v847 = vrot.slane %v818, 4
        %v848 = vsel %vm775, %v847, %v806
        %v849 = vrot.slane %v806, 4
        %v850 = vsel %vm775, %v818, %v849
        %v852 = vunpack.c.l.s4 1934713408
        %v853 = vunpack.c.0.s8 %v852
        %v854 = vperm.slane %v848, %v853
        %v856 = vunpack.c.l.s4 1934713408
        %v857 = vunpack.c.0.s8 %v856
        %v858 = vperm.slane %v850, %v857
        %v859 = vrot.slane %v822, 4
        %v860 = vsel %vm775, %v859, %v810
        %v861 = vrot.slane %v810, 4
        %v862 = vsel %vm775, %v822, %v861
        %v864 = vunpack.c.l.s4 1934713408
        %v865 = vunpack.c.0.s8 %v864
        %v866 = vperm.slane %v860, %v865
        %v868 = vunpack.c.l.s4 1934713408
        %v869 = vunpack.c.0.s8 %v868
        %v870 = vperm.slane %v862, %v869
        %v871 = vrot.slane %v854, 4
        %v872 = vsel %vm775, %v871, %v830
        %v873 = vrot.slane %v830, 4
        %v874 = vsel %vm775, %v854, %v873
        %v875 = vrot.slane %v858, 4
        %v876 = vsel %vm775, %v875, %v834
        %v877 = vrot.slane %v834, 4
        %v878 = vsel %vm775, %v858, %v877
        %v879 = vrot.slane %v866, 4
        %v880 = vsel %vm775, %v879, %v842
        %v881 = vrot.slane %v842, 4
        %v882 = vsel %vm775, %v866, %v881
        %v883 = vrot.slane %v870, 4
        %v884 = vsel %vm775, %v883, %v846
        %v885 = vrot.slane %v846, 4
        %v886 = vsel %vm775, %v870, %v885
        %v887 = vrot.slane %v463, 4
        %v888 = vsel %vm775, %v887, %v455
        %v889 = vrot.slane %v455, 4
        %v890 = vsel %vm775, %v463, %v889
        %v892 = vunpack.c.l.s4 1983009808
        %v893 = vunpack.c.0.s8 %v892
        %v894 = vperm.slane %v888, %v893
        %v896 = vunpack.c.l.s4 1983009808
        %v897 = vunpack.c.0.s8 %v896
        %v898 = vperm.slane %v890, %v897
        %v899 = vrot.slane %v467, 4
        %v900 = vsel %vm775, %v899, %v459
        %v901 = vrot.slane %v459, 4
        %v902 = vsel %vm775, %v467, %v901
        %v904 = vunpack.c.l.s4 1983009808
        %v905 = vunpack.c.0.s8 %v904
        %v906 = vperm.slane %v900, %v905
        %v908 = vunpack.c.l.s4 1983009808
        %v909 = vunpack.c.0.s8 %v908
        %v910 = vperm.slane %v902, %v909
        %v911 = vrot.slane %v479, 4
        %v912 = vsel %vm775, %v911, %v471
        %v913 = vrot.slane %v471, 4
        %v914 = vsel %vm775, %v479, %v913
        %v916 = vunpack.c.l.s4 1983009808
        %v917 = vunpack.c.0.s8 %v916
        %v918 = vperm.slane %v912, %v917
        %v920 = vunpack.c.l.s4 1983009808
        %v921 = vunpack.c.0.s8 %v920
        %v922 = vperm.slane %v914, %v921
        %v923 = vrot.slane %v483, 4
        %v924 = vsel %vm775, %v923, %v475
        %v925 = vrot.slane %v475, 4
        %v926 = vsel %vm775, %v483, %v925
        %v928 = vunpack.c.l.s4 1983009808
        %v929 = vunpack.c.0.s8 %v928
        %v930 = vperm.slane %v924, %v929
        %v932 = vunpack.c.l.s4 1983009808
        %v933 = vunpack.c.0.s8 %v932
        %v934 = vperm.slane %v926, %v933
        %v935 = vrot.slane %v906, 4
        %v936 = vsel %vm775, %v935, %v894
        %v937 = vrot.slane %v894, 4
        %v938 = vsel %vm775, %v906, %v937
        %v940 = vunpack.c.l.s4 1934713408
        %v941 = vunpack.c.0.s8 %v940
        %v942 = vperm.slane %v936, %v941
        %v944 = vunpack.c.l.s4 1934713408
        %v945 = vunpack.c.0.s8 %v944
        %v946 = vperm.slane %v938, %v945
        %v947 = vrot.slane %v910, 4
        %v948 = vsel %vm775, %v947, %v898
        %v949 = vrot.slane %v898, 4
        %v950 = vsel %vm775, %v910, %v949
        %v952 = vunpack.c.l.s4 1934713408
        %v953 = vunpack.c.0.s8 %v952
        %v954 = vperm.slane %v948, %v953
        %v956 = vunpack.c.l.s4 1934713408
        %v957 = vunpack.c.0.s8 %v956
        %v958 = vperm.slane %v950, %v957
        %v959 = vrot.slane %v930, 4
        %v960 = vsel %vm775, %v959, %v918
        %v961 = vrot.slane %v918, 4
        %v962 = vsel %vm775, %v930, %v961
        %v964 = vunpack.c.l.s4 1934713408
        %v965 = vunpack.c.0.s8 %v964
        %v966 = vperm.slane %v960, %v965
        %v968 = vunpack.c.l.s4 1934713408
        %v969 = vunpack.c.0.s8 %v968
        %v970 = vperm.slane %v962, %v969
        %v971 = vrot.slane %v934, 4
        %v972 = vsel %vm775, %v971, %v922
        %v973 = vrot.slane %v922, 4
        %v974 = vsel %vm775, %v934, %v973
        %v976 = vunpack.c.l.s4 1934713408
        %v977 = vunpack.c.0.s8 %v976
        %v978 = vperm.slane %v972, %v977
        %v980 = vunpack.c.l.s4 1934713408
        %v981 = vunpack.c.0.s8 %v980
        %v982 = vperm.slane %v974, %v981
        %v983 = vrot.slane %v966, 4
        %v984 = vsel %vm775, %v983, %v942
        %v985 = vrot.slane %v942, 4
        %v986 = vsel %vm775, %v966, %v985
        %v987 = vrot.slane %v970, 4
        %v988 = vsel %vm775, %v987, %v946
        %v989 = vrot.slane %v946, 4
        %v990 = vsel %vm775, %v970, %v989
        %v991 = vrot.slane %v978, 4
        %v992 = vsel %vm775, %v991, %v954
        %v993 = vrot.slane %v954, 4
        %v994 = vsel %vm775, %v978, %v993
        %v995 = vrot.slane %v982, 4
        %v996 = vsel %vm775, %v995, %v958
        %v997 = vrot.slane %v958, 4
        %v998 = vsel %vm775, %v982, %v997
        %v999 = vrot.slane %v511, 4
        %v1000 = vsel %vm775, %v999, %v503
        %v1001 = vrot.slane %v503, 4
        %v1002 = vsel %vm775, %v511, %v1001
        %v1004 = vunpack.c.l.s4 1983009808
        %v1005 = vunpack.c.0.s8 %v1004
        %v1006 = vperm.slane %v1000, %v1005
        %v1008 = vunpack.c.l.s4 1983009808
        %v1009 = vunpack.c.0.s8 %v1008
        %v1010 = vperm.slane %v1002, %v1009
        %v1011 = vrot.slane %v515, 4
        %v1012 = vsel %vm775, %v1011, %v507
        %v1013 = vrot.slane %v507, 4
        %v1014 = vsel %vm775, %v515, %v1013
        %v1016 = vunpack.c.l.s4 1983009808
        %v1017 = vunpack.c.0.s8 %v1016
        %v1018 = vperm.slane %v1012, %v1017
        %v1020 = vunpack.c.l.s4 1983009808
        %v1021 = vunpack.c.0.s8 %v1020
        %v1022 = vperm.slane %v1014, %v1021
        %v1023 = vrot.slane %v527, 4
        %v1024 = vsel %vm775, %v1023, %v519
        %v1025 = vrot.slane %v519, 4
        %v1026 = vsel %vm775, %v527, %v1025
        %v1028 = vunpack.c.l.s4 1983009808
        %v1029 = vunpack.c.0.s8 %v1028
        %v1030 = vperm.slane %v1024, %v1029
        %v1032 = vunpack.c.l.s4 1983009808
        %v1033 = vunpack.c.0.s8 %v1032
        %v1034 = vperm.slane %v1026, %v1033
        %v1035 = vrot.slane %v531, 4
        %v1036 = vsel %vm775, %v1035, %v523
        %v1037 = vrot.slane %v523, 4
        %v1038 = vsel %vm775, %v531, %v1037
        %v1040 = vunpack.c.l.s4 1983009808
        %v1041 = vunpack.c.0.s8 %v1040
        %v1042 = vperm.slane %v1036, %v1041
        %v1044 = vunpack.c.l.s4 1983009808
        %v1045 = vunpack.c.0.s8 %v1044
        %v1046 = vperm.slane %v1038, %v1045
        %v1047 = vrot.slane %v1018, 4
        %v1048 = vsel %vm775, %v1047, %v1006
        %v1049 = vrot.slane %v1006, 4
        %v1050 = vsel %vm775, %v1018, %v1049
        %v1052 = vunpack.c.l.s4 1934713408
        %v1053 = vunpack.c.0.s8 %v1052
        %v1054 = vperm.slane %v1048, %v1053
        %v1056 = vunpack.c.l.s4 1934713408
        %v1057 = vunpack.c.0.s8 %v1056
        %v1058 = vperm.slane %v1050, %v1057
        %v1059 = vrot.slane %v1022, 4
        %v1060 = vsel %vm775, %v1059, %v1010
        %v1061 = vrot.slane %v1010, 4
        %v1062 = vsel %vm775, %v1022, %v1061
        %v1064 = vunpack.c.l.s4 1934713408
        %v1065 = vunpack.c.0.s8 %v1064
        %v1066 = vperm.slane %v1060, %v1065
        %v1068 = vunpack.c.l.s4 1934713408
        %v1069 = vunpack.c.0.s8 %v1068
        %v1070 = vperm.slane %v1062, %v1069
        %v1071 = vrot.slane %v1042, 4
        %v1072 = vsel %vm775, %v1071, %v1030
        %v1073 = vrot.slane %v1030, 4
        %v1074 = vsel %vm775, %v1042, %v1073
        %v1076 = vunpack.c.l.s4 1934713408
        %v1077 = vunpack.c.0.s8 %v1076
        %v1078 = vperm.slane %v1072, %v1077
        %v1080 = vunpack.c.l.s4 1934713408
        %v1081 = vunpack.c.0.s8 %v1080
        %v1082 = vperm.slane %v1074, %v1081
        %v1083 = vrot.slane %v1046, 4
        %v1084 = vsel %vm775, %v1083, %v1034
        %v1085 = vrot.slane %v1034, 4
        %v1086 = vsel %vm775, %v1046, %v1085
        %v1088 = vunpack.c.l.s4 1934713408
        %v1089 = vunpack.c.0.s8 %v1088
        %v1090 = vperm.slane %v1084, %v1089
        %v1092 = vunpack.c.l.s4 1934713408
        %v1093 = vunpack.c.0.s8 %v1092
        %v1094 = vperm.slane %v1086, %v1093
        %v1095 = vrot.slane %v1078, 4
        %v1096 = vsel %vm775, %v1095, %v1054
        %v1097 = vrot.slane %v1054, 4
        %v1098 = vsel %vm775, %v1078, %v1097
        %v1099 = vrot.slane %v1082, 4
        %v1100 = vsel %vm775, %v1099, %v1058
        %v1101 = vrot.slane %v1058, 4
        %v1102 = vsel %vm775, %v1082, %v1101
        %v1103 = vrot.slane %v1090, 4
        %v1104 = vsel %vm775, %v1103, %v1066
        %v1105 = vrot.slane %v1066, 4
        %v1106 = vsel %vm775, %v1090, %v1105
        %v1107 = vrot.slane %v1094, 4
        %v1108 = vsel %vm775, %v1107, %v1070
        %v1109 = vrot.slane %v1070, 4
        %v1110 = vsel %vm775, %v1094, %v1109
        %v1111 = vrot.slane %v410, 4
        %v1112 = vsel %vm775, %v1111, %v406
        %v1113 = vrot.slane %v406, 4
        %v1114 = vsel %vm775, %v410, %v1113
        %v1116 = vunpack.c.l.s4 1983009808
        %v1117 = vunpack.c.0.s8 %v1116
        %v1118 = vperm.slane %v1112, %v1117
        %v1120 = vunpack.c.l.s4 1983009808
        %v1121 = vunpack.c.0.s8 %v1120
        %v1122 = vperm.slane %v1114, %v1121
        %v1123 = vrot.slane %v412, 4
        %v1124 = vsel %vm775, %v1123, %v408
        %v1125 = vrot.slane %v408, 4
        %v1126 = vsel %vm775, %v412, %v1125
        %v1128 = vunpack.c.l.s4 1983009808
        %v1129 = vunpack.c.0.s8 %v1128
        %v1130 = vperm.slane %v1124, %v1129
        %v1132 = vunpack.c.l.s4 1983009808
        %v1133 = vunpack.c.0.s8 %v1132
        %v1134 = vperm.slane %v1126, %v1133
        %v1135 = vrot.slane %v418, 4
        %v1136 = vsel %vm775, %v1135, %v414
        %v1137 = vrot.slane %v414, 4
        %v1138 = vsel %vm775, %v418, %v1137
        %v1140 = vunpack.c.l.s4 1983009808
        %v1141 = vunpack.c.0.s8 %v1140
        %v1142 = vperm.slane %v1136, %v1141
        %v1144 = vunpack.c.l.s4 1983009808
        %v1145 = vunpack.c.0.s8 %v1144
        %v1146 = vperm.slane %v1138, %v1145
        %v1147 = vrot.slane %v420, 4
        %v1148 = vsel %vm775, %v1147, %v416
        %v1149 = vrot.slane %v416, 4
        %v1150 = vsel %vm775, %v420, %v1149
        %v1152 = vunpack.c.l.s4 1983009808
        %v1153 = vunpack.c.0.s8 %v1152
        %v1154 = vperm.slane %v1148, %v1153
        %v1156 = vunpack.c.l.s4 1983009808
        %v1157 = vunpack.c.0.s8 %v1156
        %v1158 = vperm.slane %v1150, %v1157
        %v1159 = vrot.slane %v1130, 4
        %v1160 = vsel %vm775, %v1159, %v1118
        %v1161 = vrot.slane %v1118, 4
        %v1162 = vsel %vm775, %v1130, %v1161
        %v1164 = vunpack.c.l.s4 1934713408
        %v1165 = vunpack.c.0.s8 %v1164
        %v1166 = vperm.slane %v1160, %v1165
        %v1168 = vunpack.c.l.s4 1934713408
        %v1169 = vunpack.c.0.s8 %v1168
        %v1170 = vperm.slane %v1162, %v1169
        %v1171 = vrot.slane %v1134, 4
        %v1172 = vsel %vm775, %v1171, %v1122
        %v1173 = vrot.slane %v1122, 4
        %v1174 = vsel %vm775, %v1134, %v1173
        %v1176 = vunpack.c.l.s4 1934713408
        %v1177 = vunpack.c.0.s8 %v1176
        %v1178 = vperm.slane %v1172, %v1177
        %v1180 = vunpack.c.l.s4 1934713408
        %v1181 = vunpack.c.0.s8 %v1180
        %v1182 = vperm.slane %v1174, %v1181
        %v1183 = vrot.slane %v1154, 4
        %v1184 = vsel %vm775, %v1183, %v1142
        %v1185 = vrot.slane %v1142, 4
        %v1186 = vsel %vm775, %v1154, %v1185
        %v1188 = vunpack.c.l.s4 1934713408
        %v1189 = vunpack.c.0.s8 %v1188
        %v1190 = vperm.slane %v1184, %v1189
        %v1192 = vunpack.c.l.s4 1934713408
        %v1193 = vunpack.c.0.s8 %v1192
        %v1194 = vperm.slane %v1186, %v1193
        %v1195 = vrot.slane %v1158, 4
        %v1196 = vsel %vm775, %v1195, %v1146
        %v1197 = vrot.slane %v1146, 4
        %v1198 = vsel %vm775, %v1158, %v1197
        %v1200 = vunpack.c.l.s4 1934713408
        %v1201 = vunpack.c.0.s8 %v1200
        %v1202 = vperm.slane %v1196, %v1201
        %v1204 = vunpack.c.l.s4 1934713408
        %v1205 = vunpack.c.0.s8 %v1204
        %v1206 = vperm.slane %v1198, %v1205
        %v1207 = vrot.slane %v1190, 4
        %v1208 = vsel %vm775, %v1207, %v1166
        %v1209 = vrot.slane %v1166, 4
        %v1210 = vsel %vm775, %v1190, %v1209
        %v1211 = vrot.slane %v1194, 4
        %v1212 = vsel %vm775, %v1211, %v1170
        %v1213 = vrot.slane %v1170, 4
        %v1214 = vsel %vm775, %v1194, %v1213
        %v1215 = vrot.slane %v1202, 4
        %v1216 = vsel %vm775, %v1215, %v1178
        %v1217 = vrot.slane %v1178, 4
        %v1218 = vsel %vm775, %v1202, %v1217
        %v1219 = vrot.slane %v1206, 4
        %v1220 = vsel %vm775, %v1219, %v1182
        %v1221 = vrot.slane %v1182, 4
        %v1222 = vsel %vm775, %v1206, %v1221
        %v1223 = vrot.slane %v575, 4
        %v1224 = vsel %vm775, %v1223, %v567
        %v1225 = vrot.slane %v567, 4
        %v1226 = vsel %vm775, %v575, %v1225
        %v1228 = vunpack.c.l.s4 1983009808
        %v1229 = vunpack.c.0.s8 %v1228
        %v1230 = vperm.slane %v1224, %v1229
        %v1232 = vunpack.c.l.s4 1983009808
        %v1233 = vunpack.c.0.s8 %v1232
        %v1234 = vperm.slane %v1226, %v1233
        %v1235 = vrot.slane %v579, 4
        %v1236 = vsel %vm775, %v1235, %v571
        %v1237 = vrot.slane %v571, 4
        %v1238 = vsel %vm775, %v579, %v1237
        %v1240 = vunpack.c.l.s4 1983009808
        %v1241 = vunpack.c.0.s8 %v1240
        %v1242 = vperm.slane %v1236, %v1241
        %v1244 = vunpack.c.l.s4 1983009808
        %v1245 = vunpack.c.0.s8 %v1244
        %v1246 = vperm.slane %v1238, %v1245
        %v1247 = vrot.slane %v591, 4
        %v1248 = vsel %vm775, %v1247, %v583
        %v1249 = vrot.slane %v583, 4
        %v1250 = vsel %vm775, %v591, %v1249
        %v1252 = vunpack.c.l.s4 1983009808
        %v1253 = vunpack.c.0.s8 %v1252
        %v1254 = vperm.slane %v1248, %v1253
        %v1256 = vunpack.c.l.s4 1983009808
        %v1257 = vunpack.c.0.s8 %v1256
        %v1258 = vperm.slane %v1250, %v1257
        %v1259 = vrot.slane %v595, 4
        %v1260 = vsel %vm775, %v1259, %v587
        %v1261 = vrot.slane %v587, 4
        %v1262 = vsel %vm775, %v595, %v1261
        %v1264 = vunpack.c.l.s4 1983009808
        %v1265 = vunpack.c.0.s8 %v1264
        %v1266 = vperm.slane %v1260, %v1265
        %v1268 = vunpack.c.l.s4 1983009808
        %v1269 = vunpack.c.0.s8 %v1268
        %v1270 = vperm.slane %v1262, %v1269
        %v1271 = vrot.slane %v1242, 4
        %v1272 = vsel %vm775, %v1271, %v1230
        %v1273 = vrot.slane %v1230, 4
        %v1274 = vsel %vm775, %v1242, %v1273
        %v1276 = vunpack.c.l.s4 1934713408
        %v1277 = vunpack.c.0.s8 %v1276
        %v1278 = vperm.slane %v1272, %v1277
        %v1280 = vunpack.c.l.s4 1934713408
        %v1281 = vunpack.c.0.s8 %v1280
        %v1282 = vperm.slane %v1274, %v1281
        %v1283 = vrot.slane %v1246, 4
        %v1284 = vsel %vm775, %v1283, %v1234
        %v1285 = vrot.slane %v1234, 4
        %v1286 = vsel %vm775, %v1246, %v1285
        %v1288 = vunpack.c.l.s4 1934713408
        %v1289 = vunpack.c.0.s8 %v1288
        %v1290 = vperm.slane %v1284, %v1289
        %v1292 = vunpack.c.l.s4 1934713408
        %v1293 = vunpack.c.0.s8 %v1292
        %v1294 = vperm.slane %v1286, %v1293
        %v1295 = vrot.slane %v1266, 4
        %v1296 = vsel %vm775, %v1295, %v1254
        %v1297 = vrot.slane %v1254, 4
        %v1298 = vsel %vm775, %v1266, %v1297
        %v1300 = vunpack.c.l.s4 1934713408
        %v1301 = vunpack.c.0.s8 %v1300
        %v1302 = vperm.slane %v1296, %v1301
        %v1304 = vunpack.c.l.s4 1934713408
        %v1305 = vunpack.c.0.s8 %v1304
        %v1306 = vperm.slane %v1298, %v1305
        %v1307 = vrot.slane %v1270, 4
        %v1308 = vsel %vm775, %v1307, %v1258
        %v1309 = vrot.slane %v1258, 4
        %v1310 = vsel %vm775, %v1270, %v1309
        %v1312 = vunpack.c.l.s4 1934713408
        %v1313 = vunpack.c.0.s8 %v1312
        %v1314 = vperm.slane %v1308, %v1313
        %v1316 = vunpack.c.l.s4 1934713408
        %v1317 = vunpack.c.0.s8 %v1316
        %v1318 = vperm.slane %v1310, %v1317
        %v1319 = vrot.slane %v1302, 4
        %v1320 = vsel %vm775, %v1319, %v1278
        %v1321 = vrot.slane %v1278, 4
        %v1322 = vsel %vm775, %v1302, %v1321
        %v1323 = vrot.slane %v1306, 4
        %v1324 = vsel %vm775, %v1323, %v1282
        %v1325 = vrot.slane %v1282, 4
        %v1326 = vsel %vm775, %v1306, %v1325
        %v1327 = vrot.slane %v1314, 4
        %v1328 = vsel %vm775, %v1327, %v1290
        %v1329 = vrot.slane %v1290, 4
        %v1330 = vsel %vm775, %v1314, %v1329
        %v1331 = vrot.slane %v1318, 4
        %v1332 = vsel %vm775, %v1331, %v1294
        %v1333 = vrot.slane %v1294, 4
        %v1334 = vsel %vm775, %v1318, %v1333
        %v1335 = vrot.slane %v623, 4
        %v1336 = vsel %vm775, %v1335, %v615
        %v1337 = vrot.slane %v615, 4
        %v1338 = vsel %vm775, %v623, %v1337
        %v1340 = vunpack.c.l.s4 1983009808
        %v1341 = vunpack.c.0.s8 %v1340
        %v1342 = vperm.slane %v1336, %v1341
        %v1344 = vunpack.c.l.s4 1983009808
        %v1345 = vunpack.c.0.s8 %v1344
        %v1346 = vperm.slane %v1338, %v1345
        %v1347 = vrot.slane %v627, 4
        %v1348 = vsel %vm775, %v1347, %v619
        %v1349 = vrot.slane %v619, 4
        %v1350 = vsel %vm775, %v627, %v1349
        %v1352 = vunpack.c.l.s4 1983009808
        %v1353 = vunpack.c.0.s8 %v1352
        %v1354 = vperm.slane %v1348, %v1353
        %v1356 = vunpack.c.l.s4 1983009808
        %v1357 = vunpack.c.0.s8 %v1356
        %v1358 = vperm.slane %v1350, %v1357
        %v1359 = vrot.slane %v639, 4
        %v1360 = vsel %vm775, %v1359, %v631
        %v1361 = vrot.slane %v631, 4
        %v1362 = vsel %vm775, %v639, %v1361
        %v1364 = vunpack.c.l.s4 1983009808
        %v1365 = vunpack.c.0.s8 %v1364
        %v1366 = vperm.slane %v1360, %v1365
        %v1368 = vunpack.c.l.s4 1983009808
        %v1369 = vunpack.c.0.s8 %v1368
        %v1370 = vperm.slane %v1362, %v1369
        %v1371 = vrot.slane %v643, 4
        %v1372 = vsel %vm775, %v1371, %v635
        %v1373 = vrot.slane %v635, 4
        %v1374 = vsel %vm775, %v643, %v1373
        %v1376 = vunpack.c.l.s4 1983009808
        %v1377 = vunpack.c.0.s8 %v1376
        %v1378 = vperm.slane %v1372, %v1377
        %v1380 = vunpack.c.l.s4 1983009808
        %v1381 = vunpack.c.0.s8 %v1380
        %v1382 = vperm.slane %v1374, %v1381
        %v1383 = vrot.slane %v1354, 4
        %v1384 = vsel %vm775, %v1383, %v1342
        %v1385 = vrot.slane %v1342, 4
        %v1386 = vsel %vm775, %v1354, %v1385
        %v1388 = vunpack.c.l.s4 1934713408
        %v1389 = vunpack.c.0.s8 %v1388
        %v1390 = vperm.slane %v1384, %v1389
        %v1392 = vunpack.c.l.s4 1934713408
        %v1393 = vunpack.c.0.s8 %v1392
        %v1394 = vperm.slane %v1386, %v1393
        %v1395 = vrot.slane %v1358, 4
        %v1396 = vsel %vm775, %v1395, %v1346
        %v1397 = vrot.slane %v1346, 4
        %v1398 = vsel %vm775, %v1358, %v1397
        %v1400 = vunpack.c.l.s4 1934713408
        %v1401 = vunpack.c.0.s8 %v1400
        %v1402 = vperm.slane %v1396, %v1401
        %v1404 = vunpack.c.l.s4 1934713408
        %v1405 = vunpack.c.0.s8 %v1404
        %v1406 = vperm.slane %v1398, %v1405
        %v1407 = vrot.slane %v1378, 4
        %v1408 = vsel %vm775, %v1407, %v1366
        %v1409 = vrot.slane %v1366, 4
        %v1410 = vsel %vm775, %v1378, %v1409
        %v1412 = vunpack.c.l.s4 1934713408
        %v1413 = vunpack.c.0.s8 %v1412
        %v1414 = vperm.slane %v1408, %v1413
        %v1416 = vunpack.c.l.s4 1934713408
        %v1417 = vunpack.c.0.s8 %v1416
        %v1418 = vperm.slane %v1410, %v1417
        %v1419 = vrot.slane %v1382, 4
        %v1420 = vsel %vm775, %v1419, %v1370
        %v1421 = vrot.slane %v1370, 4
        %v1422 = vsel %vm775, %v1382, %v1421
        %v1424 = vunpack.c.l.s4 1934713408
        %v1425 = vunpack.c.0.s8 %v1424
        %v1426 = vperm.slane %v1420, %v1425
        %v1428 = vunpack.c.l.s4 1934713408
        %v1429 = vunpack.c.0.s8 %v1428
        %v1430 = vperm.slane %v1422, %v1429
        %v1431 = vrot.slane %v1414, 4
        %v1432 = vsel %vm775, %v1431, %v1390
        %v1433 = vrot.slane %v1390, 4
        %v1434 = vsel %vm775, %v1414, %v1433
        %v1435 = vrot.slane %v1418, 4
        %v1436 = vsel %vm775, %v1435, %v1394
        %v1437 = vrot.slane %v1394, 4
        %v1438 = vsel %vm775, %v1418, %v1437
        %v1439 = vrot.slane %v1426, 4
        %v1440 = vsel %vm775, %v1439, %v1402
        %v1441 = vrot.slane %v1402, 4
        %v1442 = vsel %vm775, %v1426, %v1441
        %v1443 = vrot.slane %v1430, 4
        %v1444 = vsel %vm775, %v1443, %v1406
        %v1445 = vrot.slane %v1406, 4
        %v1446 = vsel %vm775, %v1430, %v1445
        %v1447 = vrot.slane %v426, 4
        %v1448 = vsel %vm775, %v1447, %v422
        %v1449 = vrot.slane %v422, 4
        %v1450 = vsel %vm775, %v426, %v1449
        %v1452 = vunpack.c.l.s4 1983009808
        %v1453 = vunpack.c.0.s8 %v1452
        %v1454 = vperm.slane %v1448, %v1453
        %v1456 = vunpack.c.l.s4 1983009808
        %v1457 = vunpack.c.0.s8 %v1456
        %v1458 = vperm.slane %v1450, %v1457
        %v1459 = vrot.slane %v428, 4
        %v1460 = vsel %vm775, %v1459, %v424
        %v1461 = vrot.slane %v424, 4
        %v1462 = vsel %vm775, %v428, %v1461
        %v1464 = vunpack.c.l.s4 1983009808
        %v1465 = vunpack.c.0.s8 %v1464
        %v1466 = vperm.slane %v1460, %v1465
        %v1468 = vunpack.c.l.s4 1983009808
        %v1469 = vunpack.c.0.s8 %v1468
        %v1470 = vperm.slane %v1462, %v1469
        %v1471 = vrot.slane %v434, 4
        %v1472 = vsel %vm775, %v1471, %v430
        %v1473 = vrot.slane %v430, 4
        %v1474 = vsel %vm775, %v434, %v1473
        %v1476 = vunpack.c.l.s4 1983009808
        %v1477 = vunpack.c.0.s8 %v1476
        %v1478 = vperm.slane %v1472, %v1477
        %v1480 = vunpack.c.l.s4 1983009808
        %v1481 = vunpack.c.0.s8 %v1480
        %v1482 = vperm.slane %v1474, %v1481
        %v1483 = vrot.slane %v436, 4
        %v1484 = vsel %vm775, %v1483, %v432
        %v1485 = vrot.slane %v432, 4
        %v1486 = vsel %vm775, %v436, %v1485
        %v1488 = vunpack.c.l.s4 1983009808
        %v1489 = vunpack.c.0.s8 %v1488
        %v1490 = vperm.slane %v1484, %v1489
        %v1492 = vunpack.c.l.s4 1983009808
        %v1493 = vunpack.c.0.s8 %v1492
        %v1494 = vperm.slane %v1486, %v1493
        %v1495 = vrot.slane %v1466, 4
        %v1496 = vsel %vm775, %v1495, %v1454
        %v1497 = vrot.slane %v1454, 4
        %v1498 = vsel %vm775, %v1466, %v1497
        %v1500 = vunpack.c.l.s4 1934713408
        %v1501 = vunpack.c.0.s8 %v1500
        %v1502 = vperm.slane %v1496, %v1501
        %v1504 = vunpack.c.l.s4 1934713408
        %v1505 = vunpack.c.0.s8 %v1504
        %v1506 = vperm.slane %v1498, %v1505
        %v1507 = vrot.slane %v1470, 4
        %v1508 = vsel %vm775, %v1507, %v1458
        %v1509 = vrot.slane %v1458, 4
        %v1510 = vsel %vm775, %v1470, %v1509
        %v1512 = vunpack.c.l.s4 1934713408
        %v1513 = vunpack.c.0.s8 %v1512
        %v1514 = vperm.slane %v1508, %v1513
        %v1516 = vunpack.c.l.s4 1934713408
        %v1517 = vunpack.c.0.s8 %v1516
        %v1518 = vperm.slane %v1510, %v1517
        %v1519 = vrot.slane %v1490, 4
        %v1520 = vsel %vm775, %v1519, %v1478
        %v1521 = vrot.slane %v1478, 4
        %v1522 = vsel %vm775, %v1490, %v1521
        %v1524 = vunpack.c.l.s4 1934713408
        %v1525 = vunpack.c.0.s8 %v1524
        %v1526 = vperm.slane %v1520, %v1525
        %v1528 = vunpack.c.l.s4 1934713408
        %v1529 = vunpack.c.0.s8 %v1528
        %v1530 = vperm.slane %v1522, %v1529
        %v1531 = vrot.slane %v1494, 4
        %v1532 = vsel %vm775, %v1531, %v1482
        %v1533 = vrot.slane %v1482, 4
        %v1534 = vsel %vm775, %v1494, %v1533
        %v1536 = vunpack.c.l.s4 1934713408
        %v1537 = vunpack.c.0.s8 %v1536
        %v1538 = vperm.slane %v1532, %v1537
        %v1540 = vunpack.c.l.s4 1934713408
        %v1541 = vunpack.c.0.s8 %v1540
        %v1542 = vperm.slane %v1534, %v1541
        %v1543 = vrot.slane %v1526, 4
        %v1544 = vsel %vm775, %v1543, %v1502
        %v1545 = vrot.slane %v1502, 4
        %v1546 = vsel %vm775, %v1526, %v1545
        %v1547 = vrot.slane %v1530, 4
        %v1548 = vsel %vm775, %v1547, %v1506
        %v1549 = vrot.slane %v1506, 4
        %v1550 = vsel %vm775, %v1530, %v1549
        %v1551 = vrot.slane %v1538, 4
        %v1552 = vsel %vm775, %v1551, %v1514
        %v1553 = vrot.slane %v1514, 4
        %v1554 = vsel %vm775, %v1538, %v1553
        %v1555 = vrot.slane %v1542, 4
        %v1556 = vsel %vm775, %v1555, %v1518
        %v1557 = vrot.slane %v1518, 4
        %v1558 = vsel %vm775, %v1542, %v1557
        %v1559 = vrot.slane %v687, 4
        %v1560 = vsel %vm775, %v1559, %v679
        %v1561 = vrot.slane %v679, 4
        %v1562 = vsel %vm775, %v687, %v1561
        %v1564 = vunpack.c.l.s4 1983009808
        %v1565 = vunpack.c.0.s8 %v1564
        %v1566 = vperm.slane %v1560, %v1565
        %v1568 = vunpack.c.l.s4 1983009808
        %v1569 = vunpack.c.0.s8 %v1568
        %v1570 = vperm.slane %v1562, %v1569
        %v1571 = vrot.slane %v691, 4
        %v1572 = vsel %vm775, %v1571, %v683
        %v1573 = vrot.slane %v683, 4
        %v1574 = vsel %vm775, %v691, %v1573
        %v1576 = vunpack.c.l.s4 1983009808
        %v1577 = vunpack.c.0.s8 %v1576
        %v1578 = vperm.slane %v1572, %v1577
        %v1580 = vunpack.c.l.s4 1983009808
        %v1581 = vunpack.c.0.s8 %v1580
        %v1582 = vperm.slane %v1574, %v1581
        %v1583 = vrot.slane %v703, 4
        %v1584 = vsel %vm775, %v1583, %v695
        %v1585 = vrot.slane %v695, 4
        %v1586 = vsel %vm775, %v703, %v1585
        %v1588 = vunpack.c.l.s4 1983009808
        %v1589 = vunpack.c.0.s8 %v1588
        %v1590 = vperm.slane %v1584, %v1589
        %v1592 = vunpack.c.l.s4 1983009808
        %v1593 = vunpack.c.0.s8 %v1592
        %v1594 = vperm.slane %v1586, %v1593
        %v1595 = vrot.slane %v707, 4
        %v1596 = vsel %vm775, %v1595, %v699
        %v1597 = vrot.slane %v699, 4
        %v1598 = vsel %vm775, %v707, %v1597
        %v1600 = vunpack.c.l.s4 1983009808
        %v1601 = vunpack.c.0.s8 %v1600
        %v1602 = vperm.slane %v1596, %v1601
        %v1604 = vunpack.c.l.s4 1983009808
        %v1605 = vunpack.c.0.s8 %v1604
        %v1606 = vperm.slane %v1598, %v1605
        %v1607 = vrot.slane %v1578, 4
        %v1608 = vsel %vm775, %v1607, %v1566
        %v1609 = vrot.slane %v1566, 4
        %v1610 = vsel %vm775, %v1578, %v1609
        %v1612 = vunpack.c.l.s4 1934713408
        %v1613 = vunpack.c.0.s8 %v1612
        %v1614 = vperm.slane %v1608, %v1613
        %v1616 = vunpack.c.l.s4 1934713408
        %v1617 = vunpack.c.0.s8 %v1616
        %v1618 = vperm.slane %v1610, %v1617
        %v1619 = vrot.slane %v1582, 4
        %v1620 = vsel %vm775, %v1619, %v1570
        %v1621 = vrot.slane %v1570, 4
        %v1622 = vsel %vm775, %v1582, %v1621
        %v1624 = vunpack.c.l.s4 1934713408
        %v1625 = vunpack.c.0.s8 %v1624
        %v1626 = vperm.slane %v1620, %v1625
        %v1628 = vunpack.c.l.s4 1934713408
        %v1629 = vunpack.c.0.s8 %v1628
        %v1630 = vperm.slane %v1622, %v1629
        %v1631 = vrot.slane %v1602, 4
        %v1632 = vsel %vm775, %v1631, %v1590
        %v1633 = vrot.slane %v1590, 4
        %v1634 = vsel %vm775, %v1602, %v1633
        %v1636 = vunpack.c.l.s4 1934713408
        %v1637 = vunpack.c.0.s8 %v1636
        %v1638 = vperm.slane %v1632, %v1637
        %v1640 = vunpack.c.l.s4 1934713408
        %v1641 = vunpack.c.0.s8 %v1640
        %v1642 = vperm.slane %v1634, %v1641
        %v1643 = vrot.slane %v1606, 4
        %v1644 = vsel %vm775, %v1643, %v1594
        %v1645 = vrot.slane %v1594, 4
        %v1646 = vsel %vm775, %v1606, %v1645
        %v1648 = vunpack.c.l.s4 1934713408
        %v1649 = vunpack.c.0.s8 %v1648
        %v1650 = vperm.slane %v1644, %v1649
        %v1652 = vunpack.c.l.s4 1934713408
        %v1653 = vunpack.c.0.s8 %v1652
        %v1654 = vperm.slane %v1646, %v1653
        %v1655 = vrot.slane %v1638, 4
        %v1656 = vsel %vm775, %v1655, %v1614
        %v1657 = vrot.slane %v1614, 4
        %v1658 = vsel %vm775, %v1638, %v1657
        %v1659 = vrot.slane %v1642, 4
        %v1660 = vsel %vm775, %v1659, %v1618
        %v1661 = vrot.slane %v1618, 4
        %v1662 = vsel %vm775, %v1642, %v1661
        %v1663 = vrot.slane %v1650, 4
        %v1664 = vsel %vm775, %v1663, %v1626
        %v1665 = vrot.slane %v1626, 4
        %v1666 = vsel %vm775, %v1650, %v1665
        %v1667 = vrot.slane %v1654, 4
        %v1668 = vsel %vm775, %v1667, %v1630
        %v1669 = vrot.slane %v1630, 4
        %v1670 = vsel %vm775, %v1654, %v1669
        %v1671 = vrot.slane %v735, 4
        %v1672 = vsel %vm775, %v1671, %v727
        %v1673 = vrot.slane %v727, 4
        %v1674 = vsel %vm775, %v735, %v1673
        %v1676 = vunpack.c.l.s4 1983009808
        %v1677 = vunpack.c.0.s8 %v1676
        %v1678 = vperm.slane %v1672, %v1677
        %v1680 = vunpack.c.l.s4 1983009808
        %v1681 = vunpack.c.0.s8 %v1680
        %v1682 = vperm.slane %v1674, %v1681
        %v1683 = vrot.slane %v739, 4
        %v1684 = vsel %vm775, %v1683, %v731
        %v1685 = vrot.slane %v731, 4
        %v1686 = vsel %vm775, %v739, %v1685
        %v1688 = vunpack.c.l.s4 1983009808
        %v1689 = vunpack.c.0.s8 %v1688
        %v1690 = vperm.slane %v1684, %v1689
        %v1692 = vunpack.c.l.s4 1983009808
        %v1693 = vunpack.c.0.s8 %v1692
        %v1694 = vperm.slane %v1686, %v1693
        %v1695 = vrot.slane %v751, 4
        %v1696 = vsel %vm775, %v1695, %v743
        %v1697 = vrot.slane %v743, 4
        %v1698 = vsel %vm775, %v751, %v1697
        %v1700 = vunpack.c.l.s4 1983009808
        %v1701 = vunpack.c.0.s8 %v1700
        %v1702 = vperm.slane %v1696, %v1701
        %v1704 = vunpack.c.l.s4 1983009808
        %v1705 = vunpack.c.0.s8 %v1704
        %v1706 = vperm.slane %v1698, %v1705
        %v1707 = vrot.slane %v755, 4
        %v1708 = vsel %vm775, %v1707, %v747
        %v1709 = vrot.slane %v747, 4
        %v1710 = vsel %vm775, %v755, %v1709
        %v1712 = vunpack.c.l.s4 1983009808
        %v1713 = vunpack.c.0.s8 %v1712
        %v1714 = vperm.slane %v1708, %v1713
        %v1716 = vunpack.c.l.s4 1983009808
        %v1717 = vunpack.c.0.s8 %v1716
        %v1718 = vperm.slane %v1710, %v1717
        %v1719 = vrot.slane %v1690, 4
        %v1720 = vsel %vm775, %v1719, %v1678
        %v1721 = vrot.slane %v1678, 4
        %v1722 = vsel %vm775, %v1690, %v1721
        %v1724 = vunpack.c.l.s4 1934713408
        %v1725 = vunpack.c.0.s8 %v1724
        %v1726 = vperm.slane %v1720, %v1725
        %v1728 = vunpack.c.l.s4 1934713408
        %v1729 = vunpack.c.0.s8 %v1728
        %v1730 = vperm.slane %v1722, %v1729
        %v1731 = vrot.slane %v1694, 4
        %v1732 = vsel %vm775, %v1731, %v1682
        %v1733 = vrot.slane %v1682, 4
        %v1734 = vsel %vm775, %v1694, %v1733
        %v1736 = vunpack.c.l.s4 1934713408
        %v1737 = vunpack.c.0.s8 %v1736
        %v1738 = vperm.slane %v1732, %v1737
        %v1740 = vunpack.c.l.s4 1934713408
        %v1741 = vunpack.c.0.s8 %v1740
        %v1742 = vperm.slane %v1734, %v1741
        %v1743 = vrot.slane %v1714, 4
        %v1744 = vsel %vm775, %v1743, %v1702
        %v1745 = vrot.slane %v1702, 4
        %v1746 = vsel %vm775, %v1714, %v1745
        %v1748 = vunpack.c.l.s4 1934713408
        %v1749 = vunpack.c.0.s8 %v1748
        %v1750 = vperm.slane %v1744, %v1749
        %v1752 = vunpack.c.l.s4 1934713408
        %v1753 = vunpack.c.0.s8 %v1752
        %v1754 = vperm.slane %v1746, %v1753
        %v1755 = vrot.slane %v1718, 4
        %v1756 = vsel %vm775, %v1755, %v1706
        %v1757 = vrot.slane %v1706, 4
        %v1758 = vsel %vm775, %v1718, %v1757
        %v1760 = vunpack.c.l.s4 1934713408
        %v1761 = vunpack.c.0.s8 %v1760
        %v1762 = vperm.slane %v1756, %v1761
        %v1764 = vunpack.c.l.s4 1934713408
        %v1765 = vunpack.c.0.s8 %v1764
        %v1766 = vperm.slane %v1758, %v1765
        %v1767 = vrot.slane %v1750, 4
        %v1768 = vsel %vm775, %v1767, %v1726
        %v1769 = vrot.slane %v1726, 4
        %v1770 = vsel %vm775, %v1750, %v1769
        %v1771 = vrot.slane %v1754, 4
        %v1772 = vsel %vm775, %v1771, %v1730
        %v1773 = vrot.slane %v1730, 4
        %v1774 = vsel %vm775, %v1754, %v1773
        %v1775 = vrot.slane %v1762, 4
        %v1776 = vsel %vm775, %v1775, %v1738
        %v1777 = vrot.slane %v1738, 4
        %v1778 = vsel %vm775, %v1762, %v1777
        %v1779 = vrot.slane %v1766, 4
        %v1780 = vsel %vm775, %v1779, %v1742
        %v1781 = vrot.slane %v1742, 4
        %v1782 = vsel %vm775, %v1766, %v1781
        %v1783 = vrot.slane %v395, 4
        %v1784 = vsel %vm775, %v1783, %v391
        %v1785 = vrot.slane %v391, 4
        %v1786 = vsel %vm775, %v395, %v1785
        %v1788 = vunpack.c.l.s4 1983009808
        %v1789 = vunpack.c.0.s8 %v1788
        %v1790 = vperm.slane %v1784, %v1789
        %v1792 = vunpack.c.l.s4 1983009808
        %v1793 = vunpack.c.0.s8 %v1792
        %v1794 = vperm.slane %v1786, %v1793
        %v1795 = vrot.slane %v397, 4
        %v1796 = vsel %vm775, %v1795, %v393
        %v1797 = vrot.slane %v393, 4
        %v1798 = vsel %vm775, %v397, %v1797
        %v1800 = vunpack.c.l.s4 1983009808
        %v1801 = vunpack.c.0.s8 %v1800
        %v1802 = vperm.slane %v1796, %v1801
        %v1804 = vunpack.c.l.s4 1983009808
        %v1805 = vunpack.c.0.s8 %v1804
        %v1806 = vperm.slane %v1798, %v1805
        %v1807 = vrot.slane %v403, 4
        %v1808 = vsel %vm775, %v1807, %v399
        %v1809 = vrot.slane %v399, 4
        %v1810 = vsel %vm775, %v403, %v1809
        %v1812 = vunpack.c.l.s4 1983009808
        %v1813 = vunpack.c.0.s8 %v1812
        %v1814 = vperm.slane %v1808, %v1813
        %v1816 = vunpack.c.l.s4 1983009808
        %v1817 = vunpack.c.0.s8 %v1816
        %v1818 = vperm.slane %v1810, %v1817
        %v1819 = vrot.slane %v405, 4
        %v1820 = vsel %vm775, %v1819, %v401
        %v1821 = vrot.slane %v401, 4
        %v1822 = vsel %vm775, %v405, %v1821
        %v1824 = vunpack.c.l.s4 1983009808
        %v1825 = vunpack.c.0.s8 %v1824
        %v1826 = vperm.slane %v1820, %v1825
        %v1828 = vunpack.c.l.s4 1983009808
        %v1829 = vunpack.c.0.s8 %v1828
        %v1830 = vperm.slane %v1822, %v1829
        %v1831 = vrot.slane %v1802, 4
        %v1832 = vsel %vm775, %v1831, %v1790
        %v1833 = vrot.slane %v1790, 4
        %v1834 = vsel %vm775, %v1802, %v1833
        %v1836 = vunpack.c.l.s4 1934713408
        %v1837 = vunpack.c.0.s8 %v1836
        %v1838 = vperm.slane %v1832, %v1837
        %v1840 = vunpack.c.l.s4 1934713408
        %v1841 = vunpack.c.0.s8 %v1840
        %v1842 = vperm.slane %v1834, %v1841
        %v1843 = vrot.slane %v1806, 4
        %v1844 = vsel %vm775, %v1843, %v1794
        %v1845 = vrot.slane %v1794, 4
        %v1846 = vsel %vm775, %v1806, %v1845
        %v1848 = vunpack.c.l.s4 1934713408
        %v1849 = vunpack.c.0.s8 %v1848
        %v1850 = vperm.slane %v1844, %v1849
        %v1852 = vunpack.c.l.s4 1934713408
        %v1853 = vunpack.c.0.s8 %v1852
        %v1854 = vperm.slane %v1846, %v1853
        %v1855 = vrot.slane %v1826, 4
        %v1856 = vsel %vm775, %v1855, %v1814
        %v1857 = vrot.slane %v1814, 4
        %v1858 = vsel %vm775, %v1826, %v1857
        %v1860 = vunpack.c.l.s4 1934713408
        %v1861 = vunpack.c.0.s8 %v1860
        %v1862 = vperm.slane %v1856, %v1861
        %v1864 = vunpack.c.l.s4 1934713408
        %v1865 = vunpack.c.0.s8 %v1864
        %v1866 = vperm.slane %v1858, %v1865
        %v1867 = vrot.slane %v1830, 4
        %v1868 = vsel %vm775, %v1867, %v1818
        %v1869 = vrot.slane %v1818, 4
        %v1870 = vsel %vm775, %v1830, %v1869
        %v1872 = vunpack.c.l.s4 1934713408
        %v1873 = vunpack.c.0.s8 %v1872
        %v1874 = vperm.slane %v1868, %v1873
        %v1876 = vunpack.c.l.s4 1934713408
        %v1877 = vunpack.c.0.s8 %v1876
        %v1878 = vperm.slane %v1870, %v1877
        %v1879 = vrot.slane %v1862, 4
        %v1880 = vsel %vm775, %v1879, %v1838
        %v1881 = vrot.slane %v1838, 4
        %v1882 = vsel %vm775, %v1862, %v1881
        %v1883 = vrot.slane %v1866, 4
        %v1884 = vsel %vm775, %v1883, %v1842
        %v1885 = vrot.slane %v1842, 4
        %v1886 = vsel %vm775, %v1866, %v1885
        %v1887 = vrot.slane %v1874, 4
        %v1888 = vsel %vm775, %v1887, %v1850
        %v1889 = vrot.slane %v1850, 4
        %v1890 = vsel %vm775, %v1874, %v1889
        %v1891 = vrot.slane %v1878, 4
        %v1892 = vsel %vm775, %v1891, %v1854
        %v1893 = vrot.slane %v1854, 4
        %v1894 = vsel %vm775, %v1878, %v1893
        %v1895 = vrot.slane %v465, 4
        %v1896 = vsel %vm775, %v1895, %v457
        %v1897 = vrot.slane %v457, 4
        %v1898 = vsel %vm775, %v465, %v1897
        %v1900 = vunpack.c.l.s4 1983009808
        %v1901 = vunpack.c.0.s8 %v1900
        %v1902 = vperm.slane %v1896, %v1901
        %v1904 = vunpack.c.l.s4 1983009808
        %v1905 = vunpack.c.0.s8 %v1904
        %v1906 = vperm.slane %v1898, %v1905
        %v1907 = vrot.slane %v469, 4
        %v1908 = vsel %vm775, %v1907, %v461
        %v1909 = vrot.slane %v461, 4
        %v1910 = vsel %vm775, %v469, %v1909
        %v1912 = vunpack.c.l.s4 1983009808
        %v1913 = vunpack.c.0.s8 %v1912
        %v1914 = vperm.slane %v1908, %v1913
        %v1916 = vunpack.c.l.s4 1983009808
        %v1917 = vunpack.c.0.s8 %v1916
        %v1918 = vperm.slane %v1910, %v1917
        %v1919 = vrot.slane %v481, 4
        %v1920 = vsel %vm775, %v1919, %v473
        %v1921 = vrot.slane %v473, 4
        %v1922 = vsel %vm775, %v481, %v1921
        %v1924 = vunpack.c.l.s4 1983009808
        %v1925 = vunpack.c.0.s8 %v1924
        %v1926 = vperm.slane %v1920, %v1925
        %v1928 = vunpack.c.l.s4 1983009808
        %v1929 = vunpack.c.0.s8 %v1928
        %v1930 = vperm.slane %v1922, %v1929
        %v1931 = vrot.slane %v485, 4
        %v1932 = vsel %vm775, %v1931, %v477
        %v1933 = vrot.slane %v477, 4
        %v1934 = vsel %vm775, %v485, %v1933
        %v1936 = vunpack.c.l.s4 1983009808
        %v1937 = vunpack.c.0.s8 %v1936
        %v1938 = vperm.slane %v1932, %v1937
        %v1940 = vunpack.c.l.s4 1983009808
        %v1941 = vunpack.c.0.s8 %v1940
        %v1942 = vperm.slane %v1934, %v1941
        %v1943 = vrot.slane %v1914, 4
        %v1944 = vsel %vm775, %v1943, %v1902
        %v1945 = vrot.slane %v1902, 4
        %v1946 = vsel %vm775, %v1914, %v1945
        %v1948 = vunpack.c.l.s4 1934713408
        %v1949 = vunpack.c.0.s8 %v1948
        %v1950 = vperm.slane %v1944, %v1949
        %v1952 = vunpack.c.l.s4 1934713408
        %v1953 = vunpack.c.0.s8 %v1952
        %v1954 = vperm.slane %v1946, %v1953
        %v1955 = vrot.slane %v1918, 4
        %v1956 = vsel %vm775, %v1955, %v1906
        %v1957 = vrot.slane %v1906, 4
        %v1958 = vsel %vm775, %v1918, %v1957
        %v1960 = vunpack.c.l.s4 1934713408
        %v1961 = vunpack.c.0.s8 %v1960
        %v1962 = vperm.slane %v1956, %v1961
        %v1964 = vunpack.c.l.s4 1934713408
        %v1965 = vunpack.c.0.s8 %v1964
        %v1966 = vperm.slane %v1958, %v1965
        %v1967 = vrot.slane %v1938, 4
        %v1968 = vsel %vm775, %v1967, %v1926
        %v1969 = vrot.slane %v1926, 4
        %v1970 = vsel %vm775, %v1938, %v1969
        %v1972 = vunpack.c.l.s4 1934713408
        %v1973 = vunpack.c.0.s8 %v1972
        %v1974 = vperm.slane %v1968, %v1973
        %v1976 = vunpack.c.l.s4 1934713408
        %v1977 = vunpack.c.0.s8 %v1976
        %v1978 = vperm.slane %v1970, %v1977
        %v1979 = vrot.slane %v1942, 4
        %v1980 = vsel %vm775, %v1979, %v1930
        %v1981 = vrot.slane %v1930, 4
        %v1982 = vsel %vm775, %v1942, %v1981
        %v1984 = vunpack.c.l.s4 1934713408
        %v1985 = vunpack.c.0.s8 %v1984
        %v1986 = vperm.slane %v1980, %v1985
        %v1988 = vunpack.c.l.s4 1934713408
        %v1989 = vunpack.c.0.s8 %v1988
        %v1990 = vperm.slane %v1982, %v1989
        %v1991 = vrot.slane %v1974, 4
        %v1992 = vsel %vm775, %v1991, %v1950
        %v1993 = vrot.slane %v1950, 4
        %v1994 = vsel %vm775, %v1974, %v1993
        %v1995 = vrot.slane %v1978, 4
        %v1996 = vsel %vm775, %v1995, %v1954
        %v1997 = vrot.slane %v1954, 4
        %v1998 = vsel %vm775, %v1978, %v1997
        %v1999 = vrot.slane %v1986, 4
        %v2000 = vsel %vm775, %v1999, %v1962
        %v2001 = vrot.slane %v1962, 4
        %v2002 = vsel %vm775, %v1986, %v2001
        %v2003 = vrot.slane %v1990, 4
        %v2004 = vsel %vm775, %v2003, %v1966
        %v2005 = vrot.slane %v1966, 4
        %v2006 = vsel %vm775, %v1990, %v2005
        %v2007 = vrot.slane %v513, 4
        %v2008 = vsel %vm775, %v2007, %v505
        %v2009 = vrot.slane %v505, 4
        %v2010 = vsel %vm775, %v513, %v2009
        %v2012 = vunpack.c.l.s4 1983009808
        %v2013 = vunpack.c.0.s8 %v2012
        %v2014 = vperm.slane %v2008, %v2013
        %v2016 = vunpack.c.l.s4 1983009808
        %v2017 = vunpack.c.0.s8 %v2016
        %v2018 = vperm.slane %v2010, %v2017
        %v2019 = vrot.slane %v517, 4
        %v2020 = vsel %vm775, %v2019, %v509
        %v2021 = vrot.slane %v509, 4
        %v2022 = vsel %vm775, %v517, %v2021
        %v2024 = vunpack.c.l.s4 1983009808
        %v2025 = vunpack.c.0.s8 %v2024
        %v2026 = vperm.slane %v2020, %v2025
        %v2028 = vunpack.c.l.s4 1983009808
        %v2029 = vunpack.c.0.s8 %v2028
        %v2030 = vperm.slane %v2022, %v2029
        %v2031 = vrot.slane %v529, 4
        %v2032 = vsel %vm775, %v2031, %v521
        %v2033 = vrot.slane %v521, 4
        %v2034 = vsel %vm775, %v529, %v2033
        %v2036 = vunpack.c.l.s4 1983009808
        %v2037 = vunpack.c.0.s8 %v2036
        %v2038 = vperm.slane %v2032, %v2037
        %v2040 = vunpack.c.l.s4 1983009808
        %v2041 = vunpack.c.0.s8 %v2040
        %v2042 = vperm.slane %v2034, %v2041
        %v2043 = vrot.slane %v533, 4
        %v2044 = vsel %vm775, %v2043, %v525
        %v2045 = vrot.slane %v525, 4
        %v2046 = vsel %vm775, %v533, %v2045
        %v2048 = vunpack.c.l.s4 1983009808
        %v2049 = vunpack.c.0.s8 %v2048
        %v2050 = vperm.slane %v2044, %v2049
        %v2052 = vunpack.c.l.s4 1983009808
        %v2053 = vunpack.c.0.s8 %v2052
        %v2054 = vperm.slane %v2046, %v2053
        %v2055 = vrot.slane %v2026, 4
        %v2056 = vsel %vm775, %v2055, %v2014
        %v2057 = vrot.slane %v2014, 4
        %v2058 = vsel %vm775, %v2026, %v2057
        %v2060 = vunpack.c.l.s4 1934713408
        %v2061 = vunpack.c.0.s8 %v2060
        %v2062 = vperm.slane %v2056, %v2061
        %v2064 = vunpack.c.l.s4 1934713408
        %v2065 = vunpack.c.0.s8 %v2064
        %v2066 = vperm.slane %v2058, %v2065
        %v2067 = vrot.slane %v2030, 4
        %v2068 = vsel %vm775, %v2067, %v2018
        %v2069 = vrot.slane %v2018, 4
        %v2070 = vsel %vm775, %v2030, %v2069
        %v2072 = vunpack.c.l.s4 1934713408
        %v2073 = vunpack.c.0.s8 %v2072
        %v2074 = vperm.slane %v2068, %v2073
        %v2076 = vunpack.c.l.s4 1934713408
        %v2077 = vunpack.c.0.s8 %v2076
        %v2078 = vperm.slane %v2070, %v2077
        %v2079 = vrot.slane %v2050, 4
        %v2080 = vsel %vm775, %v2079, %v2038
        %v2081 = vrot.slane %v2038, 4
        %v2082 = vsel %vm775, %v2050, %v2081
        %v2084 = vunpack.c.l.s4 1934713408
        %v2085 = vunpack.c.0.s8 %v2084
        %v2086 = vperm.slane %v2080, %v2085
        %v2088 = vunpack.c.l.s4 1934713408
        %v2089 = vunpack.c.0.s8 %v2088
        %v2090 = vperm.slane %v2082, %v2089
        %v2091 = vrot.slane %v2054, 4
        %v2092 = vsel %vm775, %v2091, %v2042
        %v2093 = vrot.slane %v2042, 4
        %v2094 = vsel %vm775, %v2054, %v2093
        %v2096 = vunpack.c.l.s4 1934713408
        %v2097 = vunpack.c.0.s8 %v2096
        %v2098 = vperm.slane %v2092, %v2097
        %v2100 = vunpack.c.l.s4 1934713408
        %v2101 = vunpack.c.0.s8 %v2100
        %v2102 = vperm.slane %v2094, %v2101
        %v2103 = vrot.slane %v2086, 4
        %v2104 = vsel %vm775, %v2103, %v2062
        %v2105 = vrot.slane %v2062, 4
        %v2106 = vsel %vm775, %v2086, %v2105
        %v2107 = vrot.slane %v2090, 4
        %v2108 = vsel %vm775, %v2107, %v2066
        %v2109 = vrot.slane %v2066, 4
        %v2110 = vsel %vm775, %v2090, %v2109
        %v2111 = vrot.slane %v2098, 4
        %v2112 = vsel %vm775, %v2111, %v2074
        %v2113 = vrot.slane %v2074, 4
        %v2114 = vsel %vm775, %v2098, %v2113
        %v2115 = vrot.slane %v2102, 4
        %v2116 = vsel %vm775, %v2115, %v2078
        %v2117 = vrot.slane %v2078, 4
        %v2118 = vsel %vm775, %v2102, %v2117
        %v2119 = vrot.slane %v411, 4
        %v2120 = vsel %vm775, %v2119, %v407
        %v2121 = vrot.slane %v407, 4
        %v2122 = vsel %vm775, %v411, %v2121
        %v2124 = vunpack.c.l.s4 1983009808
        %v2125 = vunpack.c.0.s8 %v2124
        %v2126 = vperm.slane %v2120, %v2125
        %v2128 = vunpack.c.l.s4 1983009808
        %v2129 = vunpack.c.0.s8 %v2128
        %v2130 = vperm.slane %v2122, %v2129
        %v2131 = vrot.slane %v413, 4
        %v2132 = vsel %vm775, %v2131, %v409
        %v2133 = vrot.slane %v409, 4
        %v2134 = vsel %vm775, %v413, %v2133
        %v2136 = vunpack.c.l.s4 1983009808
        %v2137 = vunpack.c.0.s8 %v2136
        %v2138 = vperm.slane %v2132, %v2137
        %v2140 = vunpack.c.l.s4 1983009808
        %v2141 = vunpack.c.0.s8 %v2140
        %v2142 = vperm.slane %v2134, %v2141
        %v2143 = vrot.slane %v419, 4
        %v2144 = vsel %vm775, %v2143, %v415
        %v2145 = vrot.slane %v415, 4
        %v2146 = vsel %vm775, %v419, %v2145
        %v2148 = vunpack.c.l.s4 1983009808
        %v2149 = vunpack.c.0.s8 %v2148
        %v2150 = vperm.slane %v2144, %v2149
        %v2152 = vunpack.c.l.s4 1983009808
        %v2153 = vunpack.c.0.s8 %v2152
        %v2154 = vperm.slane %v2146, %v2153
        %v2155 = vrot.slane %v421, 4
        %v2156 = vsel %vm775, %v2155, %v417
        %v2157 = vrot.slane %v417, 4
        %v2158 = vsel %vm775, %v421, %v2157
        %v2160 = vunpack.c.l.s4 1983009808
        %v2161 = vunpack.c.0.s8 %v2160
        %v2162 = vperm.slane %v2156, %v2161
        %v2164 = vunpack.c.l.s4 1983009808
        %v2165 = vunpack.c.0.s8 %v2164
        %v2166 = vperm.slane %v2158, %v2165
        %v2167 = vrot.slane %v2138, 4
        %v2168 = vsel %vm775, %v2167, %v2126
        %v2169 = vrot.slane %v2126, 4
        %v2170 = vsel %vm775, %v2138, %v2169
        %v2172 = vunpack.c.l.s4 1934713408
        %v2173 = vunpack.c.0.s8 %v2172
        %v2174 = vperm.slane %v2168, %v2173
        %v2176 = vunpack.c.l.s4 1934713408
        %v2177 = vunpack.c.0.s8 %v2176
        %v2178 = vperm.slane %v2170, %v2177
        %v2179 = vrot.slane %v2142, 4
        %v2180 = vsel %vm775, %v2179, %v2130
        %v2181 = vrot.slane %v2130, 4
        %v2182 = vsel %vm775, %v2142, %v2181
        %v2184 = vunpack.c.l.s4 1934713408
        %v2185 = vunpack.c.0.s8 %v2184
        %v2186 = vperm.slane %v2180, %v2185
        %v2188 = vunpack.c.l.s4 1934713408
        %v2189 = vunpack.c.0.s8 %v2188
        %v2190 = vperm.slane %v2182, %v2189
        %v2191 = vrot.slane %v2162, 4
        %v2192 = vsel %vm775, %v2191, %v2150
        %v2193 = vrot.slane %v2150, 4
        %v2194 = vsel %vm775, %v2162, %v2193
        %v2196 = vunpack.c.l.s4 1934713408
        %v2197 = vunpack.c.0.s8 %v2196
        %v2198 = vperm.slane %v2192, %v2197
        %v2200 = vunpack.c.l.s4 1934713408
        %v2201 = vunpack.c.0.s8 %v2200
        %v2202 = vperm.slane %v2194, %v2201
        %v2203 = vrot.slane %v2166, 4
        %v2204 = vsel %vm775, %v2203, %v2154
        %v2205 = vrot.slane %v2154, 4
        %v2206 = vsel %vm775, %v2166, %v2205
        %v2208 = vunpack.c.l.s4 1934713408
        %v2209 = vunpack.c.0.s8 %v2208
        %v2210 = vperm.slane %v2204, %v2209
        %v2212 = vunpack.c.l.s4 1934713408
        %v2213 = vunpack.c.0.s8 %v2212
        %v2214 = vperm.slane %v2206, %v2213
        %v2215 = vrot.slane %v2198, 4
        %v2216 = vsel %vm775, %v2215, %v2174
        %v2217 = vrot.slane %v2174, 4
        %v2218 = vsel %vm775, %v2198, %v2217
        %v2219 = vrot.slane %v2202, 4
        %v2220 = vsel %vm775, %v2219, %v2178
        %v2221 = vrot.slane %v2178, 4
        %v2222 = vsel %vm775, %v2202, %v2221
        %v2223 = vrot.slane %v2210, 4
        %v2224 = vsel %vm775, %v2223, %v2186
        %v2225 = vrot.slane %v2186, 4
        %v2226 = vsel %vm775, %v2210, %v2225
        %v2227 = vrot.slane %v2214, 4
        %v2228 = vsel %vm775, %v2227, %v2190
        %v2229 = vrot.slane %v2190, 4
        %v2230 = vsel %vm775, %v2214, %v2229
        %v2231 = vrot.slane %v577, 4
        %v2232 = vsel %vm775, %v2231, %v569
        %v2233 = vrot.slane %v569, 4
        %v2234 = vsel %vm775, %v577, %v2233
        %v2236 = vunpack.c.l.s4 1983009808
        %v2237 = vunpack.c.0.s8 %v2236
        %v2238 = vperm.slane %v2232, %v2237
        %v2240 = vunpack.c.l.s4 1983009808
        %v2241 = vunpack.c.0.s8 %v2240
        %v2242 = vperm.slane %v2234, %v2241
        %v2243 = vrot.slane %v581, 4
        %v2244 = vsel %vm775, %v2243, %v573
        %v2245 = vrot.slane %v573, 4
        %v2246 = vsel %vm775, %v581, %v2245
        %v2248 = vunpack.c.l.s4 1983009808
        %v2249 = vunpack.c.0.s8 %v2248
        %v2250 = vperm.slane %v2244, %v2249
        %v2252 = vunpack.c.l.s4 1983009808
        %v2253 = vunpack.c.0.s8 %v2252
        %v2254 = vperm.slane %v2246, %v2253
        %v2255 = vrot.slane %v593, 4
        %v2256 = vsel %vm775, %v2255, %v585
        %v2257 = vrot.slane %v585, 4
        %v2258 = vsel %vm775, %v593, %v2257
        %v2260 = vunpack.c.l.s4 1983009808
        %v2261 = vunpack.c.0.s8 %v2260
        %v2262 = vperm.slane %v2256, %v2261
        %v2264 = vunpack.c.l.s4 1983009808
        %v2265 = vunpack.c.0.s8 %v2264
        %v2266 = vperm.slane %v2258, %v2265
        %v2267 = vrot.slane %v597, 4
        %v2268 = vsel %vm775, %v2267, %v589
        %v2269 = vrot.slane %v589, 4
        %v2270 = vsel %vm775, %v597, %v2269
        %v2272 = vunpack.c.l.s4 1983009808
        %v2273 = vunpack.c.0.s8 %v2272
        %v2274 = vperm.slane %v2268, %v2273
        %v2276 = vunpack.c.l.s4 1983009808
        %v2277 = vunpack.c.0.s8 %v2276
        %v2278 = vperm.slane %v2270, %v2277
        %v2279 = vrot.slane %v2250, 4
        %v2280 = vsel %vm775, %v2279, %v2238
        %v2281 = vrot.slane %v2238, 4
        %v2282 = vsel %vm775, %v2250, %v2281
        %v2284 = vunpack.c.l.s4 1934713408
        %v2285 = vunpack.c.0.s8 %v2284
        %v2286 = vperm.slane %v2280, %v2285
        %v2288 = vunpack.c.l.s4 1934713408
        %v2289 = vunpack.c.0.s8 %v2288
        %v2290 = vperm.slane %v2282, %v2289
        %v2291 = vrot.slane %v2254, 4
        %v2292 = vsel %vm775, %v2291, %v2242
        %v2293 = vrot.slane %v2242, 4
        %v2294 = vsel %vm775, %v2254, %v2293
        %v2296 = vunpack.c.l.s4 1934713408
        %v2297 = vunpack.c.0.s8 %v2296
        %v2298 = vperm.slane %v2292, %v2297
        %v2300 = vunpack.c.l.s4 1934713408
        %v2301 = vunpack.c.0.s8 %v2300
        %v2302 = vperm.slane %v2294, %v2301
        %v2303 = vrot.slane %v2274, 4
        %v2304 = vsel %vm775, %v2303, %v2262
        %v2305 = vrot.slane %v2262, 4
        %v2306 = vsel %vm775, %v2274, %v2305
        %v2308 = vunpack.c.l.s4 1934713408
        %v2309 = vunpack.c.0.s8 %v2308
        %v2310 = vperm.slane %v2304, %v2309
        %v2312 = vunpack.c.l.s4 1934713408
        %v2313 = vunpack.c.0.s8 %v2312
        %v2314 = vperm.slane %v2306, %v2313
        %v2315 = vrot.slane %v2278, 4
        %v2316 = vsel %vm775, %v2315, %v2266
        %v2317 = vrot.slane %v2266, 4
        %v2318 = vsel %vm775, %v2278, %v2317
        %v2320 = vunpack.c.l.s4 1934713408
        %v2321 = vunpack.c.0.s8 %v2320
        %v2322 = vperm.slane %v2316, %v2321
        %v2324 = vunpack.c.l.s4 1934713408
        %v2325 = vunpack.c.0.s8 %v2324
        %v2326 = vperm.slane %v2318, %v2325
        %v2327 = vrot.slane %v2310, 4
        %v2328 = vsel %vm775, %v2327, %v2286
        %v2329 = vrot.slane %v2286, 4
        %v2330 = vsel %vm775, %v2310, %v2329
        %v2331 = vrot.slane %v2314, 4
        %v2332 = vsel %vm775, %v2331, %v2290
        %v2333 = vrot.slane %v2290, 4
        %v2334 = vsel %vm775, %v2314, %v2333
        %v2335 = vrot.slane %v2322, 4
        %v2336 = vsel %vm775, %v2335, %v2298
        %v2337 = vrot.slane %v2298, 4
        %v2338 = vsel %vm775, %v2322, %v2337
        %v2339 = vrot.slane %v2326, 4
        %v2340 = vsel %vm775, %v2339, %v2302
        %v2341 = vrot.slane %v2302, 4
        %v2342 = vsel %vm775, %v2326, %v2341
        %v2343 = vrot.slane %v625, 4
        %v2344 = vsel %vm775, %v2343, %v617
        %v2345 = vrot.slane %v617, 4
        %v2346 = vsel %vm775, %v625, %v2345
        %v2348 = vunpack.c.l.s4 1983009808
        %v2349 = vunpack.c.0.s8 %v2348
        %v2350 = vperm.slane %v2344, %v2349
        %v2352 = vunpack.c.l.s4 1983009808
        %v2353 = vunpack.c.0.s8 %v2352
        %v2354 = vperm.slane %v2346, %v2353
        %v2355 = vrot.slane %v629, 4
        %v2356 = vsel %vm775, %v2355, %v621
        %v2357 = vrot.slane %v621, 4
        %v2358 = vsel %vm775, %v629, %v2357
        %v2360 = vunpack.c.l.s4 1983009808
        %v2361 = vunpack.c.0.s8 %v2360
        %v2362 = vperm.slane %v2356, %v2361
        %v2364 = vunpack.c.l.s4 1983009808
        %v2365 = vunpack.c.0.s8 %v2364
        %v2366 = vperm.slane %v2358, %v2365
        %v2367 = vrot.slane %v641, 4
        %v2368 = vsel %vm775, %v2367, %v633
        %v2369 = vrot.slane %v633, 4
        %v2370 = vsel %vm775, %v641, %v2369
        %v2372 = vunpack.c.l.s4 1983009808
        %v2373 = vunpack.c.0.s8 %v2372
        %v2374 = vperm.slane %v2368, %v2373
        %v2376 = vunpack.c.l.s4 1983009808
        %v2377 = vunpack.c.0.s8 %v2376
        %v2378 = vperm.slane %v2370, %v2377
        %v2379 = vrot.slane %v645, 4
        %v2380 = vsel %vm775, %v2379, %v637
        %v2381 = vrot.slane %v637, 4
        %v2382 = vsel %vm775, %v645, %v2381
        %v2384 = vunpack.c.l.s4 1983009808
        %v2385 = vunpack.c.0.s8 %v2384
        %v2386 = vperm.slane %v2380, %v2385
        %v2388 = vunpack.c.l.s4 1983009808
        %v2389 = vunpack.c.0.s8 %v2388
        %v2390 = vperm.slane %v2382, %v2389
        %v2391 = vrot.slane %v2362, 4
        %v2392 = vsel %vm775, %v2391, %v2350
        %v2393 = vrot.slane %v2350, 4
        %v2394 = vsel %vm775, %v2362, %v2393
        %v2396 = vunpack.c.l.s4 1934713408
        %v2397 = vunpack.c.0.s8 %v2396
        %v2398 = vperm.slane %v2392, %v2397
        %v2400 = vunpack.c.l.s4 1934713408
        %v2401 = vunpack.c.0.s8 %v2400
        %v2402 = vperm.slane %v2394, %v2401
        %v2403 = vrot.slane %v2366, 4
        %v2404 = vsel %vm775, %v2403, %v2354
        %v2405 = vrot.slane %v2354, 4
        %v2406 = vsel %vm775, %v2366, %v2405
        %v2408 = vunpack.c.l.s4 1934713408
        %v2409 = vunpack.c.0.s8 %v2408
        %v2410 = vperm.slane %v2404, %v2409
        %v2412 = vunpack.c.l.s4 1934713408
        %v2413 = vunpack.c.0.s8 %v2412
        %v2414 = vperm.slane %v2406, %v2413
        %v2415 = vrot.slane %v2386, 4
        %v2416 = vsel %vm775, %v2415, %v2374
        %v2417 = vrot.slane %v2374, 4
        %v2418 = vsel %vm775, %v2386, %v2417
        %v2420 = vunpack.c.l.s4 1934713408
        %v2421 = vunpack.c.0.s8 %v2420
        %v2422 = vperm.slane %v2416, %v2421
        %v2424 = vunpack.c.l.s4 1934713408
        %v2425 = vunpack.c.0.s8 %v2424
        %v2426 = vperm.slane %v2418, %v2425
        %v2427 = vrot.slane %v2390, 4
        %v2428 = vsel %vm775, %v2427, %v2378
        %v2429 = vrot.slane %v2378, 4
        %v2430 = vsel %vm775, %v2390, %v2429
        %v2432 = vunpack.c.l.s4 1934713408
        %v2433 = vunpack.c.0.s8 %v2432
        %v2434 = vperm.slane %v2428, %v2433
        %v2436 = vunpack.c.l.s4 1934713408
        %v2437 = vunpack.c.0.s8 %v2436
        %v2438 = vperm.slane %v2430, %v2437
        %v2439 = vrot.slane %v2422, 4
        %v2440 = vsel %vm775, %v2439, %v2398
        %v2441 = vrot.slane %v2398, 4
        %v2442 = vsel %vm775, %v2422, %v2441
        %v2443 = vrot.slane %v2426, 4
        %v2444 = vsel %vm775, %v2443, %v2402
        %v2445 = vrot.slane %v2402, 4
        %v2446 = vsel %vm775, %v2426, %v2445
        %v2447 = vrot.slane %v2434, 4
        %v2448 = vsel %vm775, %v2447, %v2410
        %v2449 = vrot.slane %v2410, 4
        %v2450 = vsel %vm775, %v2434, %v2449
        %v2451 = vrot.slane %v2438, 4
        %v2452 = vsel %vm775, %v2451, %v2414
        %v2453 = vrot.slane %v2414, 4
        %v2454 = vsel %vm775, %v2438, %v2453
        %v2455 = vrot.slane %v427, 4
        %v2456 = vsel %vm775, %v2455, %v423
        %v2457 = vrot.slane %v423, 4
        %v2458 = vsel %vm775, %v427, %v2457
        %v2460 = vunpack.c.l.s4 1983009808
        %v2461 = vunpack.c.0.s8 %v2460
        %v2462 = vperm.slane %v2456, %v2461
        %v2464 = vunpack.c.l.s4 1983009808
        %v2465 = vunpack.c.0.s8 %v2464
        %v2466 = vperm.slane %v2458, %v2465
        %v2467 = vrot.slane %v429, 4
        %v2468 = vsel %vm775, %v2467, %v425
        %v2469 = vrot.slane %v425, 4
        %v2470 = vsel %vm775, %v429, %v2469
        %v2472 = vunpack.c.l.s4 1983009808
        %v2473 = vunpack.c.0.s8 %v2472
        %v2474 = vperm.slane %v2468, %v2473
        %v2476 = vunpack.c.l.s4 1983009808
        %v2477 = vunpack.c.0.s8 %v2476
        %v2478 = vperm.slane %v2470, %v2477
        %v2479 = vrot.slane %v435, 4
        %v2480 = vsel %vm775, %v2479, %v431
        %v2481 = vrot.slane %v431, 4
        %v2482 = vsel %vm775, %v435, %v2481
        %v2484 = vunpack.c.l.s4 1983009808
        %v2485 = vunpack.c.0.s8 %v2484
        %v2486 = vperm.slane %v2480, %v2485
        %v2488 = vunpack.c.l.s4 1983009808
        %v2489 = vunpack.c.0.s8 %v2488
        %v2490 = vperm.slane %v2482, %v2489
        %v2491 = vrot.slane %v437, 4
        %v2492 = vsel %vm775, %v2491, %v433
        %v2493 = vrot.slane %v433, 4
        %v2494 = vsel %vm775, %v437, %v2493
        %v2496 = vunpack.c.l.s4 1983009808
        %v2497 = vunpack.c.0.s8 %v2496
        %v2498 = vperm.slane %v2492, %v2497
        %v2500 = vunpack.c.l.s4 1983009808
        %v2501 = vunpack.c.0.s8 %v2500
        %v2502 = vperm.slane %v2494, %v2501
        %v2503 = vrot.slane %v2474, 4
        %v2504 = vsel %vm775, %v2503, %v2462
        %v2505 = vrot.slane %v2462, 4
        %v2506 = vsel %vm775, %v2474, %v2505
        %v2508 = vunpack.c.l.s4 1934713408
        %v2509 = vunpack.c.0.s8 %v2508
        %v2510 = vperm.slane %v2504, %v2509
        %v2512 = vunpack.c.l.s4 1934713408
        %v2513 = vunpack.c.0.s8 %v2512
        %v2514 = vperm.slane %v2506, %v2513
        %v2515 = vrot.slane %v2478, 4
        %v2516 = vsel %vm775, %v2515, %v2466
        %v2517 = vrot.slane %v2466, 4
        %v2518 = vsel %vm775, %v2478, %v2517
        %v2520 = vunpack.c.l.s4 1934713408
        %v2521 = vunpack.c.0.s8 %v2520
        %v2522 = vperm.slane %v2516, %v2521
        %v2524 = vunpack.c.l.s4 1934713408
        %v2525 = vunpack.c.0.s8 %v2524
        %v2526 = vperm.slane %v2518, %v2525
        %v2527 = vrot.slane %v2498, 4
        %v2528 = vsel %vm775, %v2527, %v2486
        %v2529 = vrot.slane %v2486, 4
        %v2530 = vsel %vm775, %v2498, %v2529
        %v2532 = vunpack.c.l.s4 1934713408
        %v2533 = vunpack.c.0.s8 %v2532
        %v2534 = vperm.slane %v2528, %v2533
        %v2536 = vunpack.c.l.s4 1934713408
        %v2537 = vunpack.c.0.s8 %v2536
        %v2538 = vperm.slane %v2530, %v2537
        %v2539 = vrot.slane %v2502, 4
        %v2540 = vsel %vm775, %v2539, %v2490
        %v2541 = vrot.slane %v2490, 4
        %v2542 = vsel %vm775, %v2502, %v2541
        %v2544 = vunpack.c.l.s4 1934713408
        %v2545 = vunpack.c.0.s8 %v2544
        %v2546 = vperm.slane %v2540, %v2545
        %v2548 = vunpack.c.l.s4 1934713408
        %v2549 = vunpack.c.0.s8 %v2548
        %v2550 = vperm.slane %v2542, %v2549
        %v2551 = vrot.slane %v2534, 4
        %v2552 = vsel %vm775, %v2551, %v2510
        %v2553 = vrot.slane %v2510, 4
        %v2554 = vsel %vm775, %v2534, %v2553
        %v2555 = vrot.slane %v2538, 4
        %v2556 = vsel %vm775, %v2555, %v2514
        %v2557 = vrot.slane %v2514, 4
        %v2558 = vsel %vm775, %v2538, %v2557
        %v2559 = vrot.slane %v2546, 4
        %v2560 = vsel %vm775, %v2559, %v2522
        %v2561 = vrot.slane %v2522, 4
        %v2562 = vsel %vm775, %v2546, %v2561
        %v2563 = vrot.slane %v2550, 4
        %v2564 = vsel %vm775, %v2563, %v2526
        %v2565 = vrot.slane %v2526, 4
        %v2566 = vsel %vm775, %v2550, %v2565
        %v2567 = vrot.slane %v689, 4
        %v2568 = vsel %vm775, %v2567, %v681
        %v2569 = vrot.slane %v681, 4
        %v2570 = vsel %vm775, %v689, %v2569
        %v2572 = vunpack.c.l.s4 1983009808
        %v2573 = vunpack.c.0.s8 %v2572
        %v2574 = vperm.slane %v2568, %v2573
        %v2576 = vunpack.c.l.s4 1983009808
        %v2577 = vunpack.c.0.s8 %v2576
        %v2578 = vperm.slane %v2570, %v2577
        %v2579 = vrot.slane %v693, 4
        %v2580 = vsel %vm775, %v2579, %v685
        %v2581 = vrot.slane %v685, 4
        %v2582 = vsel %vm775, %v693, %v2581
        %v2584 = vunpack.c.l.s4 1983009808
        %v2585 = vunpack.c.0.s8 %v2584
        %v2586 = vperm.slane %v2580, %v2585
        %v2588 = vunpack.c.l.s4 1983009808
        %v2589 = vunpack.c.0.s8 %v2588
        %v2590 = vperm.slane %v2582, %v2589
        %v2591 = vrot.slane %v705, 4
        %v2592 = vsel %vm775, %v2591, %v697
        %v2593 = vrot.slane %v697, 4
        %v2594 = vsel %vm775, %v705, %v2593
        %v2596 = vunpack.c.l.s4 1983009808
        %v2597 = vunpack.c.0.s8 %v2596
        %v2598 = vperm.slane %v2592, %v2597
        %v2600 = vunpack.c.l.s4 1983009808
        %v2601 = vunpack.c.0.s8 %v2600
        %v2602 = vperm.slane %v2594, %v2601
        %v2603 = vrot.slane %v709, 4
        %v2604 = vsel %vm775, %v2603, %v701
        %v2605 = vrot.slane %v701, 4
        %v2606 = vsel %vm775, %v709, %v2605
        %v2608 = vunpack.c.l.s4 1983009808
        %v2609 = vunpack.c.0.s8 %v2608
        %v2610 = vperm.slane %v2604, %v2609
        %v2612 = vunpack.c.l.s4 1983009808
        %v2613 = vunpack.c.0.s8 %v2612
        %v2614 = vperm.slane %v2606, %v2613
        %v2615 = vrot.slane %v2586, 4
        %v2616 = vsel %vm775, %v2615, %v2574
        %v2617 = vrot.slane %v2574, 4
        %v2618 = vsel %vm775, %v2586, %v2617
        %v2620 = vunpack.c.l.s4 1934713408
        %v2621 = vunpack.c.0.s8 %v2620
        %v2622 = vperm.slane %v2616, %v2621
        %v2624 = vunpack.c.l.s4 1934713408
        %v2625 = vunpack.c.0.s8 %v2624
        %v2626 = vperm.slane %v2618, %v2625
        %v2627 = vrot.slane %v2590, 4
        %v2628 = vsel %vm775, %v2627, %v2578
        %v2629 = vrot.slane %v2578, 4
        %v2630 = vsel %vm775, %v2590, %v2629
        %v2632 = vunpack.c.l.s4 1934713408
        %v2633 = vunpack.c.0.s8 %v2632
        %v2634 = vperm.slane %v2628, %v2633
        %v2636 = vunpack.c.l.s4 1934713408
        %v2637 = vunpack.c.0.s8 %v2636
        %v2638 = vperm.slane %v2630, %v2637
        %v2639 = vrot.slane %v2610, 4
        %v2640 = vsel %vm775, %v2639, %v2598
        %v2641 = vrot.slane %v2598, 4
        %v2642 = vsel %vm775, %v2610, %v2641
        %v2644 = vunpack.c.l.s4 1934713408
        %v2645 = vunpack.c.0.s8 %v2644
        %v2646 = vperm.slane %v2640, %v2645
        %v2648 = vunpack.c.l.s4 1934713408
        %v2649 = vunpack.c.0.s8 %v2648
        %v2650 = vperm.slane %v2642, %v2649
        %v2651 = vrot.slane %v2614, 4
        %v2652 = vsel %vm775, %v2651, %v2602
        %v2653 = vrot.slane %v2602, 4
        %v2654 = vsel %vm775, %v2614, %v2653
        %v2656 = vunpack.c.l.s4 1934713408
        %v2657 = vunpack.c.0.s8 %v2656
        %v2658 = vperm.slane %v2652, %v2657
        %v2660 = vunpack.c.l.s4 1934713408
        %v2661 = vunpack.c.0.s8 %v2660
        %v2662 = vperm.slane %v2654, %v2661
        %v2663 = vrot.slane %v2646, 4
        %v2664 = vsel %vm775, %v2663, %v2622
        %v2665 = vrot.slane %v2622, 4
        %v2666 = vsel %vm775, %v2646, %v2665
        %v2667 = vrot.slane %v2650, 4
        %v2668 = vsel %vm775, %v2667, %v2626
        %v2669 = vrot.slane %v2626, 4
        %v2670 = vsel %vm775, %v2650, %v2669
        %v2671 = vrot.slane %v2658, 4
        %v2672 = vsel %vm775, %v2671, %v2634
        %v2673 = vrot.slane %v2634, 4
        %v2674 = vsel %vm775, %v2658, %v2673
        %v2675 = vrot.slane %v2662, 4
        %v2676 = vsel %vm775, %v2675, %v2638
        %v2677 = vrot.slane %v2638, 4
        %v2678 = vsel %vm775, %v2662, %v2677
        %v2679 = vrot.slane %v737, 4
        %v2680 = vsel %vm775, %v2679, %v729
        %v2681 = vrot.slane %v729, 4
        %v2682 = vsel %vm775, %v737, %v2681
        %v2684 = vunpack.c.l.s4 1983009808
        %v2685 = vunpack.c.0.s8 %v2684
        %v2686 = vperm.slane %v2680, %v2685
        %v2688 = vunpack.c.l.s4 1983009808
        %v2689 = vunpack.c.0.s8 %v2688
        %v2690 = vperm.slane %v2682, %v2689
        %v2691 = vrot.slane %v741, 4
        %v2692 = vsel %vm775, %v2691, %v733
        %v2693 = vrot.slane %v733, 4
        %v2694 = vsel %vm775, %v741, %v2693
        %v2696 = vunpack.c.l.s4 1983009808
        %v2697 = vunpack.c.0.s8 %v2696
        %v2698 = vperm.slane %v2692, %v2697
        %v2700 = vunpack.c.l.s4 1983009808
        %v2701 = vunpack.c.0.s8 %v2700
        %v2702 = vperm.slane %v2694, %v2701
        %v2703 = vrot.slane %v753, 4
        %v2704 = vsel %vm775, %v2703, %v745
        %v2705 = vrot.slane %v745, 4
        %v2706 = vsel %vm775, %v753, %v2705
        %v2708 = vunpack.c.l.s4 1983009808
        %v2709 = vunpack.c.0.s8 %v2708
        %v2710 = vperm.slane %v2704, %v2709
        %v2712 = vunpack.c.l.s4 1983009808
        %v2713 = vunpack.c.0.s8 %v2712
        %v2714 = vperm.slane %v2706, %v2713
        %v2715 = vrot.slane %v757, 4
        %v2716 = vsel %vm775, %v2715, %v749
        %v2717 = vrot.slane %v749, 4
        %v2718 = vsel %vm775, %v757, %v2717
        %v2720 = vunpack.c.l.s4 1983009808
        %v2721 = vunpack.c.0.s8 %v2720
        %v2722 = vperm.slane %v2716, %v2721
        %v2724 = vunpack.c.l.s4 1983009808
        %v2725 = vunpack.c.0.s8 %v2724
        %v2726 = vperm.slane %v2718, %v2725
        %v2727 = vrot.slane %v2698, 4
        %v2728 = vsel %vm775, %v2727, %v2686
        %v2729 = vrot.slane %v2686, 4
        %v2730 = vsel %vm775, %v2698, %v2729
        %v2732 = vunpack.c.l.s4 1934713408
        %v2733 = vunpack.c.0.s8 %v2732
        %v2734 = vperm.slane %v2728, %v2733
        %v2736 = vunpack.c.l.s4 1934713408
        %v2737 = vunpack.c.0.s8 %v2736
        %v2738 = vperm.slane %v2730, %v2737
        %v2739 = vrot.slane %v2702, 4
        %v2740 = vsel %vm775, %v2739, %v2690
        %v2741 = vrot.slane %v2690, 4
        %v2742 = vsel %vm775, %v2702, %v2741
        %v2744 = vunpack.c.l.s4 1934713408
        %v2745 = vunpack.c.0.s8 %v2744
        %v2746 = vperm.slane %v2740, %v2745
        %v2748 = vunpack.c.l.s4 1934713408
        %v2749 = vunpack.c.0.s8 %v2748
        %v2750 = vperm.slane %v2742, %v2749
        %v2751 = vrot.slane %v2722, 4
        %v2752 = vsel %vm775, %v2751, %v2710
        %v2753 = vrot.slane %v2710, 4
        %v2754 = vsel %vm775, %v2722, %v2753
        %v2756 = vunpack.c.l.s4 1934713408
        %v2757 = vunpack.c.0.s8 %v2756
        %v2758 = vperm.slane %v2752, %v2757
        %v2760 = vunpack.c.l.s4 1934713408
        %v2761 = vunpack.c.0.s8 %v2760
        %v2762 = vperm.slane %v2754, %v2761
        %v2763 = vrot.slane %v2726, 4
        %v2764 = vsel %vm775, %v2763, %v2714
        %v2765 = vrot.slane %v2714, 4
        %v2766 = vsel %vm775, %v2726, %v2765
        %v2768 = vunpack.c.l.s4 1934713408
        %v2769 = vunpack.c.0.s8 %v2768
        %v2770 = vperm.slane %v2764, %v2769
        %v2772 = vunpack.c.l.s4 1934713408
        %v2773 = vunpack.c.0.s8 %v2772
        %v2774 = vperm.slane %v2766, %v2773
        %v2775 = vrot.slane %v2758, 4
        %v2776 = vsel %vm775, %v2775, %v2734
        %v2777 = vrot.slane %v2734, 4
        %v2778 = vsel %vm775, %v2758, %v2777
        %v2779 = vrot.slane %v2762, 4
        %v2780 = vsel %vm775, %v2779, %v2738
        %v2781 = vrot.slane %v2738, 4
        %v2782 = vsel %vm775, %v2762, %v2781
        %v2783 = vrot.slane %v2770, 4
        %v2784 = vsel %vm775, %v2783, %v2746
        %v2785 = vrot.slane %v2746, 4
        %v2786 = vsel %vm775, %v2770, %v2785
        %v2787 = vrot.slane %v2774, 4
        %v2788 = vsel %vm775, %v2787, %v2750
        %v2789 = vrot.slane %v2750, 4
        %v2790 = vsel %vm775, %v2774, %v2789
        %2800 = vrot.lane.b32.xlu0 %v874, 16
        %v2801 = vpop.permute.xlu0 %2800
        %2802 = vrot.lane.b32.xlu0 %v986, 16
        %v2803 = vpop.permute.xlu0 %2802
        %2804 = vrot.lane.b32.xlu0 %v1098, 16
        %v2805 = vpop.permute.xlu0 %2804
        %2806 = vrot.lane.b32.xlu0 %v1210, 16
        %v2807 = vpop.permute.xlu0 %2806
        %2808 = vrot.lane.b32.xlu0 %v1322, 16
        %v2809 = vpop.permute.xlu0 %2808
        %2810 = vrot.lane.b32.xlu0 %v1434, 16
        %v2811 = vpop.permute.xlu0 %2810
        %2812 = vrot.lane.b32.xlu0 %v1546, 16
        %v2813 = vpop.permute.xlu0 %2812
        %2814 = vrot.lane.b32.xlu0 %v1658, 16
        %v2815 = vpop.permute.xlu0 %2814
        %2816 = vrot.lane.b32.xlu0 %v1770, 16
        %v2817 = vpop.permute.xlu0 %2816
        %2836 = vrot.lane.b32.xlu0 %v876, 32
        %v2837 = vpop.permute.xlu0 %2836
        %2838 = vrot.lane.b32.xlu0 %v988, 32
        %v2839 = vpop.permute.xlu0 %2838
        %2840 = vrot.lane.b32.xlu0 %v1100, 32
        %v2841 = vpop.permute.xlu0 %2840
        %2842 = vrot.lane.b32.xlu0 %v1212, 32
        %v2843 = vpop.permute.xlu0 %2842
        %2844 = vrot.lane.b32.xlu0 %v1324, 32
        %v2845 = vpop.permute.xlu0 %2844
        %2846 = vrot.lane.b32.xlu0 %v1436, 32
        %v2847 = vpop.permute.xlu0 %2846
        %2848 = vrot.lane.b32.xlu0 %v1548, 32
        %v2849 = vpop.permute.xlu0 %2848
        %2850 = vrot.lane.b32.xlu0 %v1660, 32
        %v2851 = vpop.permute.xlu0 %2850
        %2852 = vrot.lane.b32.xlu0 %v1772, 32
        %v2853 = vpop.permute.xlu0 %2852
        %2872 = vrot.lane.b32.xlu0 %v878, 48
        %v2873 = vpop.permute.xlu0 %2872
        %2874 = vrot.lane.b32.xlu0 %v990, 48
        %v2875 = vpop.permute.xlu0 %2874
        %2876 = vrot.lane.b32.xlu0 %v1102, 48
        %v2877 = vpop.permute.xlu0 %2876
        %2878 = vrot.lane.b32.xlu0 %v1214, 48
        %v2879 = vpop.permute.xlu0 %2878
        %2880 = vrot.lane.b32.xlu0 %v1326, 48
        %v2881 = vpop.permute.xlu0 %2880
        %2882 = vrot.lane.b32.xlu0 %v1438, 48
        %v2883 = vpop.permute.xlu0 %2882
        %2884 = vrot.lane.b32.xlu0 %v1550, 48
        %v2885 = vpop.permute.xlu0 %2884
        %2886 = vrot.lane.b32.xlu0 %v1662, 48
        %v2887 = vpop.permute.xlu0 %2886
        %2888 = vrot.lane.b32.xlu0 %v1774, 48
        %v2889 = vpop.permute.xlu0 %2888
        %2908 = vrot.lane.b32.xlu0 %v880, 64
        %v2909 = vpop.permute.xlu0 %2908
        %2910 = vrot.lane.b32.xlu0 %v992, 64
        %v2911 = vpop.permute.xlu0 %2910
        %2912 = vrot.lane.b32.xlu0 %v1104, 64
        %v2913 = vpop.permute.xlu0 %2912
        %2914 = vrot.lane.b32.xlu0 %v1216, 64
        %v2915 = vpop.permute.xlu0 %2914
        %2916 = vrot.lane.b32.xlu0 %v1328, 64
        %v2917 = vpop.permute.xlu0 %2916
        %2918 = vrot.lane.b32.xlu0 %v1440, 64
        %v2919 = vpop.permute.xlu0 %2918
        %2920 = vrot.lane.b32.xlu0 %v1552, 64
        %v2921 = vpop.permute.xlu0 %2920
        %2922 = vrot.lane.b32.xlu0 %v1664, 64
        %v2923 = vpop.permute.xlu0 %2922
        %2924 = vrot.lane.b32.xlu0 %v1776, 64
        %v2925 = vpop.permute.xlu0 %2924
        %2944 = vrot.lane.b32.xlu0 %v882, 80
        %v2945 = vpop.permute.xlu0 %2944
        %2946 = vrot.lane.b32.xlu0 %v994, 80
        %v2947 = vpop.permute.xlu0 %2946
        %2948 = vrot.lane.b32.xlu0 %v1106, 80
        %v2949 = vpop.permute.xlu0 %2948
        %2950 = vrot.lane.b32.xlu0 %v1218, 80
        %v2951 = vpop.permute.xlu0 %2950
        %2952 = vrot.lane.b32.xlu0 %v1330, 80
        %v2953 = vpop.permute.xlu0 %2952
        %2954 = vrot.lane.b32.xlu0 %v1442, 80
        %v2955 = vpop.permute.xlu0 %2954
        %2956 = vrot.lane.b32.xlu0 %v1554, 80
        %v2957 = vpop.permute.xlu0 %2956
        %2958 = vrot.lane.b32.xlu0 %v1666, 80
        %v2959 = vpop.permute.xlu0 %2958
        %2960 = vrot.lane.b32.xlu0 %v1778, 80
        %v2961 = vpop.permute.xlu0 %2960
        %2980 = vrot.lane.b32.xlu0 %v884, 96
        %v2981 = vpop.permute.xlu0 %2980
        %2982 = vrot.lane.b32.xlu0 %v996, 96
        %v2983 = vpop.permute.xlu0 %2982
        %2984 = vrot.lane.b32.xlu0 %v1108, 96
        %v2985 = vpop.permute.xlu0 %2984
        %2986 = vrot.lane.b32.xlu0 %v1220, 96
        %v2987 = vpop.permute.xlu0 %2986
        %2988 = vrot.lane.b32.xlu0 %v1332, 96
        %v2989 = vpop.permute.xlu0 %2988
        %2990 = vrot.lane.b32.xlu0 %v1444, 96
        %v2991 = vpop.permute.xlu0 %2990
        %2992 = vrot.lane.b32.xlu0 %v1556, 96
        %v2993 = vpop.permute.xlu0 %2992
        %2994 = vrot.lane.b32.xlu0 %v1668, 96
        %v2995 = vpop.permute.xlu0 %2994
        %2996 = vrot.lane.b32.xlu0 %v1780, 96
        %v2997 = vpop.permute.xlu0 %2996
        %3016 = vrot.lane.b32.xlu0 %v886, 112
        %v3017 = vpop.permute.xlu0 %3016
        %3018 = vrot.lane.b32.xlu0 %v998, 112
        %v3019 = vpop.permute.xlu0 %3018
        %3020 = vrot.lane.b32.xlu0 %v1110, 112
        %v3021 = vpop.permute.xlu0 %3020
        %3022 = vrot.lane.b32.xlu0 %v1222, 112
        %v3023 = vpop.permute.xlu0 %3022
        %3024 = vrot.lane.b32.xlu0 %v1334, 112
        %v3025 = vpop.permute.xlu0 %3024
        %3026 = vrot.lane.b32.xlu0 %v1446, 112
        %v3027 = vpop.permute.xlu0 %3026
        %3028 = vrot.lane.b32.xlu0 %v1558, 112
        %v3029 = vpop.permute.xlu0 %3028
        %3030 = vrot.lane.b32.xlu0 %v1670, 112
        %v3031 = vpop.permute.xlu0 %3030
        %3032 = vrot.lane.b32.xlu0 %v1782, 112
        %v3033 = vpop.permute.xlu0 %3032
        %3052 = vrot.lane.b32.xlu0 %v1882, 16
        %v3053 = vpop.permute.xlu0 %3052
        %3054 = vrot.lane.b32.xlu0 %v1994, 16
        %v3055 = vpop.permute.xlu0 %3054
        %3056 = vrot.lane.b32.xlu0 %v2106, 16
        %v3057 = vpop.permute.xlu0 %3056
        %3058 = vrot.lane.b32.xlu0 %v2218, 16
        %v3059 = vpop.permute.xlu0 %3058
        %3060 = vrot.lane.b32.xlu0 %v2330, 16
        %v3061 = vpop.permute.xlu0 %3060
        %3062 = vrot.lane.b32.xlu0 %v2442, 16
        %v3063 = vpop.permute.xlu0 %3062
        %3064 = vrot.lane.b32.xlu0 %v2554, 16
        %v3065 = vpop.permute.xlu0 %3064
        %3066 = vrot.lane.b32.xlu0 %v2666, 16
        %v3067 = vpop.permute.xlu0 %3066
        %3068 = vrot.lane.b32.xlu0 %v2778, 16
        %v3069 = vpop.permute.xlu0 %3068
        %3088 = vrot.lane.b32.xlu0 %v1884, 32
        %v3089 = vpop.permute.xlu0 %3088
        %3090 = vrot.lane.b32.xlu0 %v1996, 32
        %v3091 = vpop.permute.xlu0 %3090
        %3092 = vrot.lane.b32.xlu0 %v2108, 32
        %v3093 = vpop.permute.xlu0 %3092
        %3094 = vrot.lane.b32.xlu0 %v2220, 32
        %v3095 = vpop.permute.xlu0 %3094
        %3096 = vrot.lane.b32.xlu0 %v2332, 32
        %v3097 = vpop.permute.xlu0 %3096
        %3098 = vrot.lane.b32.xlu0 %v2444, 32
        %v3099 = vpop.permute.xlu0 %3098
        %3100 = vrot.lane.b32.xlu0 %v2556, 32
        %v3101 = vpop.permute.xlu0 %3100
        %3102 = vrot.lane.b32.xlu0 %v2668, 32
        %v3103 = vpop.permute.xlu0 %3102
        %3104 = vrot.lane.b32.xlu0 %v2780, 32
        %v3105 = vpop.permute.xlu0 %3104
        %3124 = vrot.lane.b32.xlu0 %v1886, 48
        %v3125 = vpop.permute.xlu0 %3124
        %3126 = vrot.lane.b32.xlu0 %v1998, 48
        %v3127 = vpop.permute.xlu0 %3126
        %3128 = vrot.lane.b32.xlu0 %v2110, 48
        %v3129 = vpop.permute.xlu0 %3128
        %3130 = vrot.lane.b32.xlu0 %v2222, 48
        %v3131 = vpop.permute.xlu0 %3130
        %3132 = vrot.lane.b32.xlu0 %v2334, 48
        %v3133 = vpop.permute.xlu0 %3132
        %3134 = vrot.lane.b32.xlu0 %v2446, 48
        %v3135 = vpop.permute.xlu0 %3134
        %3136 = vrot.lane.b32.xlu0 %v2558, 48
        %v3137 = vpop.permute.xlu0 %3136
        %3138 = vrot.lane.b32.xlu0 %v2670, 48
        %v3139 = vpop.permute.xlu0 %3138
        %3140 = vrot.lane.b32.xlu0 %v2782, 48
        %v3141 = vpop.permute.xlu0 %3140
        %3160 = vrot.lane.b32.xlu0 %v1888, 64
        %v3161 = vpop.permute.xlu0 %3160
        %3162 = vrot.lane.b32.xlu0 %v2000, 64
        %v3163 = vpop.permute.xlu0 %3162
        %3164 = vrot.lane.b32.xlu0 %v2112, 64
        %v3165 = vpop.permute.xlu0 %3164
        %3166 = vrot.lane.b32.xlu0 %v2224, 64
        %v3167 = vpop.permute.xlu0 %3166
        %3168 = vrot.lane.b32.xlu0 %v2336, 64
        %v3169 = vpop.permute.xlu0 %3168
        %3170 = vrot.lane.b32.xlu0 %v2448, 64
        %v3171 = vpop.permute.xlu0 %3170
        %3172 = vrot.lane.b32.xlu0 %v2560, 64
        %v3173 = vpop.permute.xlu0 %3172
        %3174 = vrot.lane.b32.xlu0 %v2672, 64
        %v3175 = vpop.permute.xlu0 %3174
        %3176 = vrot.lane.b32.xlu0 %v2784, 64
        %v3177 = vpop.permute.xlu0 %3176
        %3196 = vrot.lane.b32.xlu0 %v1890, 80
        %v3197 = vpop.permute.xlu0 %3196
        %3198 = vrot.lane.b32.xlu0 %v2002, 80
        %v3199 = vpop.permute.xlu0 %3198
        %3200 = vrot.lane.b32.xlu0 %v2114, 80
        %v3201 = vpop.permute.xlu0 %3200
        %3202 = vrot.lane.b32.xlu0 %v2226, 80
        %v3203 = vpop.permute.xlu0 %3202
        %3204 = vrot.lane.b32.xlu0 %v2338, 80
        %v3205 = vpop.permute.xlu0 %3204
        %3206 = vrot.lane.b32.xlu0 %v2450, 80
        %v3207 = vpop.permute.xlu0 %3206
        %3208 = vrot.lane.b32.xlu0 %v2562, 80
        %v3209 = vpop.permute.xlu0 %3208
        %3210 = vrot.lane.b32.xlu0 %v2674, 80
        %v3211 = vpop.permute.xlu0 %3210
        %3212 = vrot.lane.b32.xlu0 %v2786, 80
        %v3213 = vpop.permute.xlu0 %3212
        %3232 = vrot.lane.b32.xlu0 %v1892, 96
        %v3233 = vpop.permute.xlu0 %3232
        %3234 = vrot.lane.b32.xlu0 %v2004, 96
        %v3235 = vpop.permute.xlu0 %3234
        %3236 = vrot.lane.b32.xlu0 %v2116, 96
        %v3237 = vpop.permute.xlu0 %3236
        %3238 = vrot.lane.b32.xlu0 %v2228, 96
        %v3239 = vpop.permute.xlu0 %3238
        %3240 = vrot.lane.b32.xlu0 %v2340, 96
        %v3241 = vpop.permute.xlu0 %3240
        %3242 = vrot.lane.b32.xlu0 %v2452, 96
        %v3243 = vpop.permute.xlu0 %3242
        %3244 = vrot.lane.b32.xlu0 %v2564, 96
        %v3245 = vpop.permute.xlu0 %3244
        %3246 = vrot.lane.b32.xlu0 %v2676, 96
        %v3247 = vpop.permute.xlu0 %3246
        %3248 = vrot.lane.b32.xlu0 %v2788, 96
        %v3249 = vpop.permute.xlu0 %3248
        %3268 = vrot.lane.b32.xlu0 %v1894, 112
        %v3269 = vpop.permute.xlu0 %3268
        %3270 = vrot.lane.b32.xlu0 %v2006, 112
        %v3271 = vpop.permute.xlu0 %3270
        %3272 = vrot.lane.b32.xlu0 %v2118, 112
        %v3273 = vpop.permute.xlu0 %3272
        %3274 = vrot.lane.b32.xlu0 %v2230, 112
        %v3275 = vpop.permute.xlu0 %3274
        %3276 = vrot.lane.b32.xlu0 %v2342, 112
        %v3277 = vpop.permute.xlu0 %3276
        %3278 = vrot.lane.b32.xlu0 %v2454, 112
        %v3279 = vpop.permute.xlu0 %3278
        %3280 = vrot.lane.b32.xlu0 %v2566, 112
        %v3281 = vpop.permute.xlu0 %3280
        %3282 = vrot.lane.b32.xlu0 %v2678, 112
        %v3283 = vpop.permute.xlu0 %3282
        %3284 = vrot.lane.b32.xlu0 %v2790, 112
        %v3285 = vpop.permute.xlu0 %3284
        %vm3295 = vcmask 130048
        %v3296 = vsel %vm3295, %v872, %v2801
        %v3297 = vsel %vm3295, %v984, %v2803
        %v3298 = vsel %vm3295, %v1096, %v2805
        %v3299 = vsel %vm3295, %v1208, %v2807
        %v3300 = vsel %vm3295, %v1320, %v2809
        %v3301 = vsel %vm3295, %v1432, %v2811
        %v3302 = vsel %vm3295, %v1544, %v2813
        %v3303 = vsel %vm3295, %v1656, %v2815
        %v3304 = vsel %vm3295, %v1768, %v2817
        %vm3305 = vcmask 261120
        %v3306 = vsel %vm3305, %v3296, %v2837
        %v3307 = vsel %vm3305, %v3297, %v2839
        %v3308 = vsel %vm3305, %v3298, %v2841
        %v3309 = vsel %vm3305, %v3299, %v2843
        %v3310 = vsel %vm3305, %v3300, %v2845
        %v3311 = vsel %vm3305, %v3301, %v2847
        %v3312 = vsel %vm3305, %v3302, %v2849
        %v3313 = vsel %vm3305, %v3303, %v2851
        %v3314 = vsel %vm3305, %v3304, %v2853
        %vm3315 = vcmask 392192
        %v3316 = vsel %vm3315, %v3306, %v2873
        %v3317 = vsel %vm3315, %v3307, %v2875
        %v3318 = vsel %vm3315, %v3308, %v2877
        %v3319 = vsel %vm3315, %v3309, %v2879
        %v3320 = vsel %vm3315, %v3310, %v2881
        %v3321 = vsel %vm3315, %v3311, %v2883
        %v3322 = vsel %vm3315, %v3312, %v2885
        %v3323 = vsel %vm3315, %v3313, %v2887
        %v3324 = vsel %vm3315, %v3314, %v2889
        %vm3325 = vcmask 523264
        %v3326 = vsel %vm3325, %v3316, %v2909
        %v3327 = vsel %vm3325, %v3317, %v2911
        %v3328 = vsel %vm3325, %v3318, %v2913
        %v3329 = vsel %vm3325, %v3319, %v2915
        %v3330 = vsel %vm3325, %v3320, %v2917
        %v3331 = vsel %vm3325, %v3321, %v2919
        %v3332 = vsel %vm3325, %v3322, %v2921
        %v3333 = vsel %vm3325, %v3323, %v2923
        %v3334 = vsel %vm3325, %v3324, %v2925
        %vm3335 = vcmask 654336
        %v3336 = vsel %vm3335, %v3326, %v2945
        %v3337 = vsel %vm3335, %v3327, %v2947
        %v3338 = vsel %vm3335, %v3328, %v2949
        %v3339 = vsel %vm3335, %v3329, %v2951
        %v3340 = vsel %vm3335, %v3330, %v2953
        %v3341 = vsel %vm3335, %v3331, %v2955
        %v3342 = vsel %vm3335, %v3332, %v2957
        %v3343 = vsel %vm3335, %v3333, %v2959
        %v3344 = vsel %vm3335, %v3334, %v2961
        %vm3345 = vcmask 785408
        %v3346 = vsel %vm3345, %v3336, %v2981
        %v3347 = vsel %vm3345, %v3337, %v2983
        %v3348 = vsel %vm3345, %v3338, %v2985
        %v3349 = vsel %vm3345, %v3339, %v2987
        %v3350 = vsel %vm3345, %v3340, %v2989
        %v3351 = vsel %vm3345, %v3341, %v2991
        %v3352 = vsel %vm3345, %v3342, %v2993
        %v3353 = vsel %vm3345, %v3343, %v2995
        %v3354 = vsel %vm3345, %v3344, %v2997
        %vm3355 = vcmask 916480
        %v3356 = vsel %vm3355, %v3346, %v3017
        %v3357 = vsel %vm3355, %v3347, %v3019
        %v3358 = vsel %vm3355, %v3348, %v3021
        %v3359 = vsel %vm3355, %v3349, %v3023
        %v3360 = vsel %vm3355, %v3350, %v3025
        %v3361 = vsel %vm3355, %v3351, %v3027
        %v3362 = vsel %vm3355, %v3352, %v3029
        %v3363 = vsel %vm3355, %v3353, %v3031
        %v3364 = vsel %vm3355, %v3354, %v3033
        %v3365 = vsel %vm3295, %v1880, %v3053
        %v3366 = vsel %vm3295, %v1992, %v3055
        %v3367 = vsel %vm3295, %v2104, %v3057
        %v3368 = vsel %vm3295, %v2216, %v3059
        %v3369 = vsel %vm3295, %v2328, %v3061
        %v3370 = vsel %vm3295, %v2440, %v3063
        %v3371 = vsel %vm3295, %v2552, %v3065
        %v3372 = vsel %vm3295, %v2664, %v3067
        %v3373 = vsel %vm3295, %v2776, %v3069
        %v3374 = vsel %vm3305, %v3365, %v3089
        %v3375 = vsel %vm3305, %v3366, %v3091
        %v3376 = vsel %vm3305, %v3367, %v3093
        %v3377 = vsel %vm3305, %v3368, %v3095
        %v3378 = vsel %vm3305, %v3369, %v3097
        %v3379 = vsel %vm3305, %v3370, %v3099
        %v3380 = vsel %vm3305, %v3371, %v3101
        %v3381 = vsel %vm3305, %v3372, %v3103
        %v3382 = vsel %vm3305, %v3373, %v3105
        %v3383 = vsel %vm3315, %v3374, %v3125
        %v3384 = vsel %vm3315, %v3375, %v3127
        %v3385 = vsel %vm3315, %v3376, %v3129
        %v3386 = vsel %vm3315, %v3377, %v3131
        %v3387 = vsel %vm3315, %v3378, %v3133
        %v3388 = vsel %vm3315, %v3379, %v3135
        %v3389 = vsel %vm3315, %v3380, %v3137
        %v3390 = vsel %vm3315, %v3381, %v3139
        %v3391 = vsel %vm3315, %v3382, %v3141
        %v3392 = vsel %vm3325, %v3383, %v3161
        %v3393 = vsel %vm3325, %v3384, %v3163
        %v3394 = vsel %vm3325, %v3385, %v3165
        %v3395 = vsel %vm3325, %v3386, %v3167
        %v3396 = vsel %vm3325, %v3387, %v3169
        %v3397 = vsel %vm3325, %v3388, %v3171
        %v3398 = vsel %vm3325, %v3389, %v3173
        %v3399 = vsel %vm3325, %v3390, %v3175
        %v3400 = vsel %vm3325, %v3391, %v3177
        %v3401 = vsel %vm3335, %v3392, %v3197
        %v3402 = vsel %vm3335, %v3393, %v3199
        %v3403 = vsel %vm3335, %v3394, %v3201
        %v3404 = vsel %vm3335, %v3395, %v3203
        %v3405 = vsel %vm3335, %v3396, %v3205
        %v3406 = vsel %vm3335, %v3397, %v3207
        %v3407 = vsel %vm3335, %v3398, %v3209
        %v3408 = vsel %vm3335, %v3399, %v3211
        %v3409 = vsel %vm3335, %v3400, %v3213
        %v3410 = vsel %vm3345, %v3401, %v3233
        %v3411 = vsel %vm3345, %v3402, %v3235
        %v3412 = vsel %vm3345, %v3403, %v3237
        %v3413 = vsel %vm3345, %v3404, %v3239
        %v3414 = vsel %vm3345, %v3405, %v3241
        %v3415 = vsel %vm3345, %v3406, %v3243
        %v3416 = vsel %vm3345, %v3407, %v3245
        %v3417 = vsel %vm3345, %v3408, %v3247
        %v3418 = vsel %vm3345, %v3409, %v3249
        %v3419 = vsel %vm3355, %v3410, %v3269
        %v3420 = vsel %vm3355, %v3411, %v3271
        %v3421 = vsel %vm3355, %v3412, %v3273
        %v3422 = vsel %vm3355, %v3413, %v3275
        %v3423 = vsel %vm3355, %v3414, %v3277
        %v3424 = vsel %vm3355, %v3415, %v3279
        %v3425 = vsel %vm3355, %v3416, %v3281
        %v3426 = vsel %vm3355, %v3417, %v3283
        %v3427 = vsel %vm3355, %v3418, %v3285
        %v3428 = vld [vmem:[%s1] sm:$0xff]
        %v3429 = vld [vmem:[%s2] sm:$0xff]
        %3431 = vset.pattern.permute.xlu0 0
        %3432 = vperm.xlu0 %3431, %v3429
        %v3433 = vpop.permute.xlu0 %3432
        %vm3435 = vcmask 588800
        %v3437 = vsel %vm3435, %v3428, 0
        %3439 = vmatpush.msra.mxu0 0.0
        %3440 = vmatpush.msra.mxu0 0.0
        %3441 = vmatpush.msra.mxu0 0.0
        %3442 = vmatpush.msra.mxu0 0.0
        %3443 = vmatpush.msra.mxu0 0.0
        %3444 = vmatpush.msra.mxu0 0.0
        %3445 = vmatpush.msra.mxu0 0.0
        %3446 = vmatpush.msra.mxu0 %v3364
        %3447 = vmatpush.msra.mxu0 %v3363
        %3448 = vmatpush.msra.mxu0 %v3362
        %3449 = vmatpush.msra.mxu0 %v3361
        %3450 = vmatpush.msra.mxu0 %v3360
        %3451 = vmatpush.msra.mxu0 %v3359
        %3452 = vmatpush.msra.mxu0 %v3358
        %3453 = vmatpush.msra.mxu0 %v3357
        %3454 = vmatpush.msra.mxu0 %v3356
        %3455 = vmatmul.f32.gmra.mxu0 %v3437
        %v3456 = vpop.f32.mrf.mxu0
        %v3457 = vadd.f32 %v3433, %v3456
        %3458 = vdwg.mxu0
        %3459 = vmatpush.msra.mxu0 0.0
        %3460 = vmatpush.msra.mxu0 0.0
        %3461 = vmatpush.msra.mxu0 0.0
        %3462 = vmatpush.msra.mxu0 0.0
        %3463 = vmatpush.msra.mxu0 0.0
        %3464 = vmatpush.msra.mxu0 0.0
        %3465 = vmatpush.msra.mxu0 0.0
        %3466 = vmatpush.msra.mxu0 %v3427
        %3467 = vmatpush.msra.mxu0 %v3426
        %3468 = vmatpush.msra.mxu0 %v3425
        %3469 = vmatpush.msra.mxu0 %v3424
        %3470 = vmatpush.msra.mxu0 %v3423
        %3471 = vmatpush.msra.mxu0 %v3422
        %3472 = vmatpush.msra.mxu0 %v3421
        %3473 = vmatpush.msra.mxu0 %v3420
        %3474 = vmatpush.msra.mxu0 %v3419
        %3475 = vmatmul.f32.gmra.mxu0 %v3437
        %v3476 = vpop.f32.mrf.mxu0
        %v3477 = vadd.f32 %v3433, %v3476
        %3478 = vdwg.mxu0
        %v3479 = vmax.f32 %v3457, 0.0
        %v3480 = vmax.f32 %v3477, 0.0
        %3482 = vrot.lane.b32.xlu0 %v3479, 112
        %v3483 = vpop.permute.xlu0 %3482
        %3485 = vrot.lane.b32.xlu0 %v3479, 96
        %v3486 = vpop.permute.xlu0 %3485
        %3488 = vrot.lane.b32.xlu0 %v3479, 80
        %v3489 = vpop.permute.xlu0 %3488
        %3491 = vrot.lane.b32.xlu0 %v3479, 64
        %v3492 = vpop.permute.xlu0 %3491
        %3494 = vrot.lane.b32.xlu0 %v3479, 48
        %v3495 = vpop.permute.xlu0 %3494
        %3497 = vrot.lane.b32.xlu0 %v3479, 32
        %v3498 = vpop.permute.xlu0 %3497
        %3500 = vrot.lane.b32.xlu0 %v3479, 16
        %v3501 = vpop.permute.xlu0 %3500
        %3504 = vrot.lane.b32.xlu0 %v3480, 112
        %v3505 = vpop.permute.xlu0 %3504
        %3507 = vrot.lane.b32.xlu0 %v3480, 96
        %v3508 = vpop.permute.xlu0 %3507
        %3510 = vrot.lane.b32.xlu0 %v3480, 80
        %v3511 = vpop.permute.xlu0 %3510
        %3513 = vrot.lane.b32.xlu0 %v3480, 64
        %v3514 = vpop.permute.xlu0 %3513
        %3516 = vrot.lane.b32.xlu0 %v3480, 48
        %v3517 = vpop.permute.xlu0 %3516
        %3519 = vrot.lane.b32.xlu0 %v3480, 32
        %v3520 = vpop.permute.xlu0 %3519
        %3522 = vrot.lane.b32.xlu0 %v3480, 16
        %v3523 = vpop.permute.xlu0 %3522
        %v3525 = vrot.slane %v3486, 4
        %v3526 = vsel %vm775, %v3525, %v3479
        %v3527 = vrot.slane %v3479, 4
        %v3528 = vsel %vm775, %v3486, %v3527
        %v3530 = vunpack.c.l.s4 1983009808
        %v3531 = vunpack.c.0.s8 %v3530
        %v3532 = vperm.slane %v3526, %v3531
        %v3534 = vunpack.c.l.s4 1983009808
        %v3535 = vunpack.c.0.s8 %v3534
        %v3536 = vperm.slane %v3528, %v3535
        %v3537 = vrot.slane %v3489, 4
        %v3538 = vsel %vm775, %v3537, %v3483
        %v3539 = vrot.slane %v3483, 4
        %v3540 = vsel %vm775, %v3489, %v3539
        %v3542 = vunpack.c.l.s4 1983009808
        %v3543 = vunpack.c.0.s8 %v3542
        %v3544 = vperm.slane %v3538, %v3543
        %v3546 = vunpack.c.l.s4 1983009808
        %v3547 = vunpack.c.0.s8 %v3546
        %v3548 = vperm.slane %v3540, %v3547
        %v3549 = vrot.slane %v3498, 4
        %v3550 = vsel %vm775, %v3549, %v3492
        %v3551 = vrot.slane %v3492, 4
        %v3552 = vsel %vm775, %v3498, %v3551
        %v3554 = vunpack.c.l.s4 1983009808
        %v3555 = vunpack.c.0.s8 %v3554
        %v3556 = vperm.slane %v3550, %v3555
        %v3558 = vunpack.c.l.s4 1983009808
        %v3559 = vunpack.c.0.s8 %v3558
        %v3560 = vperm.slane %v3552, %v3559
        %v3561 = vrot.slane %v3501, 4
        %v3562 = vsel %vm775, %v3561, %v3495
        %v3563 = vrot.slane %v3495, 4
        %v3564 = vsel %vm775, %v3501, %v3563
        %v3566 = vunpack.c.l.s4 1983009808
        %v3567 = vunpack.c.0.s8 %v3566
        %v3568 = vperm.slane %v3562, %v3567
        %v3570 = vunpack.c.l.s4 1983009808
        %v3571 = vunpack.c.0.s8 %v3570
        %v3572 = vperm.slane %v3564, %v3571
        %v3573 = vrot.slane %v3544, 4
        %v3574 = vsel %vm775, %v3573, %v3532
        %v3575 = vrot.slane %v3532, 4
        %v3576 = vsel %vm775, %v3544, %v3575
        %v3578 = vunpack.c.l.s4 1934713408
        %v3579 = vunpack.c.0.s8 %v3578
        %v3580 = vperm.slane %v3574, %v3579
        %v3582 = vunpack.c.l.s4 1934713408
        %v3583 = vunpack.c.0.s8 %v3582
        %v3584 = vperm.slane %v3576, %v3583
        %v3585 = vrot.slane %v3548, 4
        %v3586 = vsel %vm775, %v3585, %v3536
        %v3587 = vrot.slane %v3536, 4
        %v3588 = vsel %vm775, %v3548, %v3587
        %v3590 = vunpack.c.l.s4 1934713408
        %v3591 = vunpack.c.0.s8 %v3590
        %v3592 = vperm.slane %v3586, %v3591
        %v3594 = vunpack.c.l.s4 1934713408
        %v3595 = vunpack.c.0.s8 %v3594
        %v3596 = vperm.slane %v3588, %v3595
        %v3597 = vrot.slane %v3568, 4
        %v3598 = vsel %vm775, %v3597, %v3556
        %v3599 = vrot.slane %v3556, 4
        %v3600 = vsel %vm775, %v3568, %v3599
        %v3602 = vunpack.c.l.s4 1934713408
        %v3603 = vunpack.c.0.s8 %v3602
        %v3604 = vperm.slane %v3598, %v3603
        %v3606 = vunpack.c.l.s4 1934713408
        %v3607 = vunpack.c.0.s8 %v3606
        %v3608 = vperm.slane %v3600, %v3607
        %v3609 = vrot.slane %v3572, 4
        %v3610 = vsel %vm775, %v3609, %v3560
        %v3611 = vrot.slane %v3560, 4
        %v3612 = vsel %vm775, %v3572, %v3611
        %v3614 = vunpack.c.l.s4 1934713408
        %v3615 = vunpack.c.0.s8 %v3614
        %v3616 = vperm.slane %v3610, %v3615
        %v3618 = vunpack.c.l.s4 1934713408
        %v3619 = vunpack.c.0.s8 %v3618
        %v3620 = vperm.slane %v3612, %v3619
        %v3621 = vrot.slane %v3604, 4
        %v3622 = vsel %vm775, %v3621, %v3580
        %v3623 = vrot.slane %v3580, 4
        %v3624 = vsel %vm775, %v3604, %v3623
        %v3625 = vrot.slane %v3608, 4
        %v3626 = vsel %vm775, %v3625, %v3584
        %v3627 = vrot.slane %v3584, 4
        %v3628 = vsel %vm775, %v3608, %v3627
        %v3629 = vrot.slane %v3616, 4
        %v3630 = vsel %vm775, %v3629, %v3592
        %v3631 = vrot.slane %v3592, 4
        %v3632 = vsel %vm775, %v3616, %v3631
        %v3633 = vrot.slane %v3620, 4
        %v3634 = vsel %vm775, %v3633, %v3596
        %v3635 = vrot.slane %v3596, 4
        %v3636 = vsel %vm775, %v3620, %v3635
        %v3637 = vrot.slane %v3508, 4
        %v3638 = vsel %vm775, %v3637, %v3480
        %v3639 = vrot.slane %v3480, 4
        %v3640 = vsel %vm775, %v3508, %v3639
        %v3642 = vunpack.c.l.s4 1983009808
        %v3643 = vunpack.c.0.s8 %v3642
        %v3644 = vperm.slane %v3638, %v3643
        %v3646 = vunpack.c.l.s4 1983009808
        %v3647 = vunpack.c.0.s8 %v3646
        %v3648 = vperm.slane %v3640, %v3647
        %v3649 = vrot.slane %v3511, 4
        %v3650 = vsel %vm775, %v3649, %v3505
        %v3651 = vrot.slane %v3505, 4
        %v3652 = vsel %vm775, %v3511, %v3651
        %v3654 = vunpack.c.l.s4 1983009808
        %v3655 = vunpack.c.0.s8 %v3654
        %v3656 = vperm.slane %v3650, %v3655
        %v3658 = vunpack.c.l.s4 1983009808
        %v3659 = vunpack.c.0.s8 %v3658
        %v3660 = vperm.slane %v3652, %v3659
        %v3661 = vrot.slane %v3520, 4
        %v3662 = vsel %vm775, %v3661, %v3514
        %v3663 = vrot.slane %v3514, 4
        %v3664 = vsel %vm775, %v3520, %v3663
        %v3666 = vunpack.c.l.s4 1983009808
        %v3667 = vunpack.c.0.s8 %v3666
        %v3668 = vperm.slane %v3662, %v3667
        %v3670 = vunpack.c.l.s4 1983009808
        %v3671 = vunpack.c.0.s8 %v3670
        %v3672 = vperm.slane %v3664, %v3671
        %v3673 = vrot.slane %v3523, 4
        %v3674 = vsel %vm775, %v3673, %v3517
        %v3675 = vrot.slane %v3517, 4
        %v3676 = vsel %vm775, %v3523, %v3675
        %v3678 = vunpack.c.l.s4 1983009808
        %v3679 = vunpack.c.0.s8 %v3678
        %v3680 = vperm.slane %v3674, %v3679
        %v3682 = vunpack.c.l.s4 1983009808
        %v3683 = vunpack.c.0.s8 %v3682
        %v3684 = vperm.slane %v3676, %v3683
        %v3685 = vrot.slane %v3656, 4
        %v3686 = vsel %vm775, %v3685, %v3644
        %v3687 = vrot.slane %v3644, 4
        %v3688 = vsel %vm775, %v3656, %v3687
        %v3690 = vunpack.c.l.s4 1934713408
        %v3691 = vunpack.c.0.s8 %v3690
        %v3692 = vperm.slane %v3686, %v3691
        %v3694 = vunpack.c.l.s4 1934713408
        %v3695 = vunpack.c.0.s8 %v3694
        %v3696 = vperm.slane %v3688, %v3695
        %v3697 = vrot.slane %v3660, 4
        %v3698 = vsel %vm775, %v3697, %v3648
        %v3699 = vrot.slane %v3648, 4
        %v3700 = vsel %vm775, %v3660, %v3699
        %v3702 = vunpack.c.l.s4 1934713408
        %v3703 = vunpack.c.0.s8 %v3702
        %v3704 = vperm.slane %v3698, %v3703
        %v3706 = vunpack.c.l.s4 1934713408
        %v3707 = vunpack.c.0.s8 %v3706
        %v3708 = vperm.slane %v3700, %v3707
        %v3709 = vrot.slane %v3680, 4
        %v3710 = vsel %vm775, %v3709, %v3668
        %v3711 = vrot.slane %v3668, 4
        %v3712 = vsel %vm775, %v3680, %v3711
        %v3714 = vunpack.c.l.s4 1934713408
        %v3715 = vunpack.c.0.s8 %v3714
        %v3716 = vperm.slane %v3710, %v3715
        %v3718 = vunpack.c.l.s4 1934713408
        %v3719 = vunpack.c.0.s8 %v3718
        %v3720 = vperm.slane %v3712, %v3719
        %v3721 = vrot.slane %v3684, 4
        %v3722 = vsel %vm775, %v3721, %v3672
        %v3723 = vrot.slane %v3672, 4
        %v3724 = vsel %vm775, %v3684, %v3723
        %v3726 = vunpack.c.l.s4 1934713408
        %v3727 = vunpack.c.0.s8 %v3726
        %v3728 = vperm.slane %v3722, %v3727
        %v3730 = vunpack.c.l.s4 1934713408
        %v3731 = vunpack.c.0.s8 %v3730
        %v3732 = vperm.slane %v3724, %v3731
        %v3733 = vrot.slane %v3716, 4
        %v3734 = vsel %vm775, %v3733, %v3692
        %v3735 = vrot.slane %v3692, 4
        %v3736 = vsel %vm775, %v3716, %v3735
        %v3737 = vrot.slane %v3720, 4
        %v3738 = vsel %vm775, %v3737, %v3696
        %v3739 = vrot.slane %v3696, 4
        %v3740 = vsel %vm775, %v3720, %v3739
        %v3741 = vrot.slane %v3728, 4
        %v3742 = vsel %vm775, %v3741, %v3704
        %v3743 = vrot.slane %v3704, 4
        %v3744 = vsel %vm775, %v3728, %v3743
        %v3745 = vrot.slane %v3732, 4
        %v3746 = vsel %vm775, %v3745, %v3708
        %v3747 = vrot.slane %v3708, 4
        %v3748 = vsel %vm775, %v3732, %v3747
        %3749 = vst.msk [vmem:[#allocation3] sm:$0xff] %vm323, 0.0
        %3750 = vst.msk [vmem:[#allocation3 + $0x8] sm:$0xff] %vm323, 0.0
        %3751 = vst.msk [vmem:[#allocation3 + $0x10] sm:$0x3] %vm326, 0.0
        %3752 = vst.msk [vmem:[#allocation3 + $0x18] sm:$0xff] %vm323, 0.0
        %3753 = vst.msk [vmem:[#allocation3 + $0x20] sm:$0xff] %vm323, 0.0
        %3754 = vst.msk [vmem:[#allocation3 + $0x28] sm:$0x3] %vm326, 0.0
        %3755 = vst.msk [vmem:[#allocation3 + $0x30] sm:$0xff] %vm323, 0.0
        %3756 = vst.msk [vmem:[#allocation3 + $0x38] sm:$0xff] %vm323, 0.0
        %3757 = vst.msk [vmem:[#allocation3 + $0x40] sm:$0x3] %vm326, 0.0
        %3758 = vst.msk [vmem:[#allocation3 + $0x48] sm:$0xff] %vm323, 0.0
        %3759 = vst.msk [vmem:[#allocation3 + $0x50] sm:$0xff] %vm323, 0.0
        %3760 = vst.msk [vmem:[#allocation3 + $0x58] sm:$0x3] %vm326, 0.0
        %3761 = vst.msk [vmem:[#allocation3 + $0x60] sm:$0xff] %vm323, 0.0
        %3762 = vst.msk [vmem:[#allocation3 + $0x68] sm:$0xff] %vm323, 0.0
        %3763 = vst.msk [vmem:[#allocation3 + $0x70] sm:$0x3] %vm326, 0.0
        %3764 = vst.msk [vmem:[#allocation3 + $0x78] sm:$0xff] %vm323, 0.0
        %3765 = vst.msk [vmem:[#allocation3 + $0x80] sm:$0xff] %vm323, 0.0
        %3766 = vst.msk [vmem:[#allocation3 + $0x88] sm:$0x3] %vm326, 0.0
        %3767 = vst.msk [vmem:[#allocation3 + $0x90] sm:$0xff] %vm323, 0.0
        %3768 = vst.msk [vmem:[#allocation3 + $0x98] sm:$0xff] %vm323, 0.0
        %3769 = vst.msk [vmem:[#allocation3 + $0xa0] sm:$0x3] %vm326, 0.0
        %3770 = vst.msk [vmem:[#allocation3 + $0xa8] sm:$0xff] %vm323, 0.0
        %3771 = vst.msk [vmem:[#allocation3 + $0xb0] sm:$0xff] %vm323, 0.0
        %3772 = vst.msk [vmem:[#allocation3 + $0xb8] sm:$0x3] %vm326, 0.0
        %3789 = vrot.lane.b32.xlu0 %v3622, 1
        %v3790 = vpop.permute.xlu0 %3789
        %3791 = vrot.lane.b32.xlu0 %v3734, 1
        %v3792 = vpop.permute.xlu0 %3791
        %3793 = vrot.lane.b32.xlu0 %v3624, 1
        %v3794 = vpop.permute.xlu0 %3793
        %3795 = vrot.lane.b32.xlu0 %v3736, 1
        %v3796 = vpop.permute.xlu0 %3795
        %3797 = vrot.lane.b32.xlu0 %v3626, 1
        %v3798 = vpop.permute.xlu0 %3797
        %3799 = vrot.lane.b32.xlu0 %v3738, 1
        %v3800 = vpop.permute.xlu0 %3799
        %3801 = vrot.lane.b32.xlu0 %v3628, 1
        %v3802 = vpop.permute.xlu0 %3801
        %3803 = vrot.lane.b32.xlu0 %v3740, 1
        %v3804 = vpop.permute.xlu0 %3803
        %3805 = vrot.lane.b32.xlu0 %v3630, 1
        %v3806 = vpop.permute.xlu0 %3805
        %3807 = vrot.lane.b32.xlu0 %v3742, 1
        %v3808 = vpop.permute.xlu0 %3807
        %3809 = vrot.lane.b32.xlu0 %v3632, 1
        %v3810 = vpop.permute.xlu0 %3809
        %3811 = vrot.lane.b32.xlu0 %v3744, 1
        %v3812 = vpop.permute.xlu0 %3811
        %3813 = vrot.lane.b32.xlu0 %v3634, 1
        %v3814 = vpop.permute.xlu0 %3813
        %3815 = vrot.lane.b32.xlu0 %v3746, 1
        %v3816 = vpop.permute.xlu0 %3815
        %3817 = vrot.lane.b32.xlu0 %v3636, 1
        %v3818 = vpop.permute.xlu0 %3817
        %3819 = vrot.lane.b32.xlu0 %v3748, 1
        %v3820 = vpop.permute.xlu0 %3819
        %3837 = vst.msk [vmem:[#allocation3 + $0x1] sm:$0xff] %vm381, %v3790
        %3838 = vst.msk [vmem:[#allocation3 + $0x9] sm:$0xff] %vm381, %v3792
        %3839 = vst.msk [vmem:[#allocation3 + $0x19] sm:$0xff] %vm381, %v3794
        %3840 = vst.msk [vmem:[#allocation3 + $0x21] sm:$0xff] %vm381, %v3796
        %3841 = vst.msk [vmem:[#allocation3 + $0x31] sm:$0xff] %vm381, %v3798
        %3842 = vst.msk [vmem:[#allocation3 + $0x39] sm:$0xff] %vm381, %v3800
        %3843 = vst.msk [vmem:[#allocation3 + $0x49] sm:$0xff] %vm381, %v3802
        %3844 = vst.msk [vmem:[#allocation3 + $0x51] sm:$0xff] %vm381, %v3804
        %3845 = vst.msk [vmem:[#allocation3 + $0x61] sm:$0xff] %vm381, %v3806
        %3846 = vst.msk [vmem:[#allocation3 + $0x69] sm:$0xff] %vm381, %v3808
        %3847 = vst.msk [vmem:[#allocation3 + $0x79] sm:$0xff] %vm381, %v3810
        %3848 = vst.msk [vmem:[#allocation3 + $0x81] sm:$0xff] %vm381, %v3812
        %3849 = vst.msk [vmem:[#allocation3 + $0x91] sm:$0xff] %vm381, %v3814
        %3850 = vst.msk [vmem:[#allocation3 + $0x99] sm:$0xff] %vm381, %v3816
        %3851 = vst.msk [vmem:[#allocation3 + $0xa9] sm:$0xff] %vm381, %v3818
        %3852 = vst.msk [vmem:[#allocation3 + $0xb1] sm:$0xff] %vm381, %v3820
        %v3853 = vld [vmem:[#allocation3] sm:$0xff]
        %v3854 = vld [vmem:[#allocation3 + $0x8] sm:$0xff]
        %v3855 = vld [vmem:[#allocation3 + $0x18] sm:$0xff]
        %v3856 = vld [vmem:[#allocation3 + $0x20] sm:$0xff]
        %v3857 = vld [vmem:[#allocation3 + $0x30] sm:$0xff]
        %v3858 = vld [vmem:[#allocation3 + $0x38] sm:$0xff]
        %v3859 = vld [vmem:[#allocation3 + $0x48] sm:$0xff]
        %v3860 = vld [vmem:[#allocation3 + $0x50] sm:$0xff]
        %v3861 = vld [vmem:[#allocation3 + $0x60] sm:$0xff]
        %v3862 = vld [vmem:[#allocation3 + $0x68] sm:$0xff]
        %v3863 = vld [vmem:[#allocation3 + $0x78] sm:$0xff]
        %v3864 = vld [vmem:[#allocation3 + $0x80] sm:$0xff]
        %v3865 = vld [vmem:[#allocation3 + $0x90] sm:$0xff]
        %v3866 = vld [vmem:[#allocation3 + $0x98] sm:$0xff]
        %v3867 = vld [vmem:[#allocation3 + $0xa8] sm:$0xff]
        %v3868 = vld [vmem:[#allocation3 + $0xb0] sm:$0xff]
        %v3869 = vld [vmem:[#allocation3 + $0x1] sm:$0xff]
        %v3870 = vld [vmem:[#allocation3 + $0x9] sm:$0xff]
        %v3871 = vld [vmem:[#allocation3 + $0x19] sm:$0xff]
        %v3872 = vld [vmem:[#allocation3 + $0x21] sm:$0xff]
        %v3873 = vld [vmem:[#allocation3 + $0x31] sm:$0xff]
        %v3874 = vld [vmem:[#allocation3 + $0x39] sm:$0xff]
        %v3875 = vld [vmem:[#allocation3 + $0x49] sm:$0xff]
        %v3876 = vld [vmem:[#allocation3 + $0x51] sm:$0xff]
        %v3877 = vld [vmem:[#allocation3 + $0x61] sm:$0xff]
        %v3878 = vld [vmem:[#allocation3 + $0x69] sm:$0xff]
        %v3879 = vld [vmem:[#allocation3 + $0x79] sm:$0xff]
        %v3880 = vld [vmem:[#allocation3 + $0x81] sm:$0xff]
        %v3881 = vld [vmem:[#allocation3 + $0x91] sm:$0xff]
        %v3882 = vld [vmem:[#allocation3 + $0x99] sm:$0xff]
        %v3883 = vld [vmem:[#allocation3 + $0xa9] sm:$0xff]
        %v3884 = vld [vmem:[#allocation3 + $0xb1] sm:$0xff]
        %v3885 = vld [vmem:[#allocation3 + $0x2] sm:$0xff]
        %v3886 = vld [vmem:[#allocation3 + $0xa] sm:$0xff]
        %v3887 = vld [vmem:[#allocation3 + $0x1a] sm:$0xff]
        %v3888 = vld [vmem:[#allocation3 + $0x22] sm:$0xff]
        %v3889 = vld [vmem:[#allocation3 + $0x32] sm:$0xff]
        %v3890 = vld [vmem:[#allocation3 + $0x3a] sm:$0xff]
        %v3891 = vld [vmem:[#allocation3 + $0x4a] sm:$0xff]
        %v3892 = vld [vmem:[#allocation3 + $0x52] sm:$0xff]
        %v3893 = vld [vmem:[#allocation3 + $0x62] sm:$0xff]
        %v3894 = vld [vmem:[#allocation3 + $0x6a] sm:$0xff]
        %v3895 = vld [vmem:[#allocation3 + $0x7a] sm:$0xff]
        %v3896 = vld [vmem:[#allocation3 + $0x82] sm:$0xff]
        %v3897 = vld [vmem:[#allocation3 + $0x92] sm:$0xff]
        %v3898 = vld [vmem:[#allocation3 + $0x9a] sm:$0xff]
        %v3899 = vld [vmem:[#allocation3 + $0xaa] sm:$0xff]
        %v3900 = vld [vmem:[#allocation3 + $0xb2] sm:$0xff]
        %3917 = vrot.lane.b32.xlu0 %v3853, 127
        %v3918 = vpop.permute.xlu0 %3917
        %3919 = vrot.lane.b32.xlu0 %v3854, 127
        %v3920 = vpop.permute.xlu0 %3919
        %3921 = vrot.lane.b32.xlu0 %v3855, 127
        %v3922 = vpop.permute.xlu0 %3921
        %3923 = vrot.lane.b32.xlu0 %v3856, 127
        %v3924 = vpop.permute.xlu0 %3923
        %3925 = vrot.lane.b32.xlu0 %v3857, 127
        %v3926 = vpop.permute.xlu0 %3925
        %3927 = vrot.lane.b32.xlu0 %v3858, 127
        %v3928 = vpop.permute.xlu0 %3927
        %3929 = vrot.lane.b32.xlu0 %v3859, 127
        %v3930 = vpop.permute.xlu0 %3929
        %3931 = vrot.lane.b32.xlu0 %v3860, 127
        %v3932 = vpop.permute.xlu0 %3931
        %3933 = vrot.lane.b32.xlu0 %v3861, 127
        %v3934 = vpop.permute.xlu0 %3933
        %3935 = vrot.lane.b32.xlu0 %v3862, 127
        %v3936 = vpop.permute.xlu0 %3935
        %3937 = vrot.lane.b32.xlu0 %v3863, 127
        %v3938 = vpop.permute.xlu0 %3937
        %3939 = vrot.lane.b32.xlu0 %v3864, 127
        %v3940 = vpop.permute.xlu0 %3939
        %3941 = vrot.lane.b32.xlu0 %v3865, 127
        %v3942 = vpop.permute.xlu0 %3941
        %3943 = vrot.lane.b32.xlu0 %v3866, 127
        %v3944 = vpop.permute.xlu0 %3943
        %3945 = vrot.lane.b32.xlu0 %v3867, 127
        %v3946 = vpop.permute.xlu0 %3945
        %3947 = vrot.lane.b32.xlu0 %v3868, 127
        %v3948 = vpop.permute.xlu0 %3947
        %3965 = vrot.lane.b32.xlu0 %v3853, 126
        %v3966 = vpop.permute.xlu0 %3965
        %3967 = vrot.lane.b32.xlu0 %v3854, 126
        %v3968 = vpop.permute.xlu0 %3967
        %3969 = vrot.lane.b32.xlu0 %v3855, 126
        %v3970 = vpop.permute.xlu0 %3969
        %3971 = vrot.lane.b32.xlu0 %v3856, 126
        %v3972 = vpop.permute.xlu0 %3971
        %3973 = vrot.lane.b32.xlu0 %v3857, 126
        %v3974 = vpop.permute.xlu0 %3973
        %3975 = vrot.lane.b32.xlu0 %v3858, 126
        %v3976 = vpop.permute.xlu0 %3975
        %3977 = vrot.lane.b32.xlu0 %v3859, 126
        %v3978 = vpop.permute.xlu0 %3977
        %3979 = vrot.lane.b32.xlu0 %v3860, 126
        %v3980 = vpop.permute.xlu0 %3979
        %3981 = vrot.lane.b32.xlu0 %v3861, 126
        %v3982 = vpop.permute.xlu0 %3981
        %3983 = vrot.lane.b32.xlu0 %v3862, 126
        %v3984 = vpop.permute.xlu0 %3983
        %3985 = vrot.lane.b32.xlu0 %v3863, 126
        %v3986 = vpop.permute.xlu0 %3985
        %3987 = vrot.lane.b32.xlu0 %v3864, 126
        %v3988 = vpop.permute.xlu0 %3987
        %3989 = vrot.lane.b32.xlu0 %v3865, 126
        %v3990 = vpop.permute.xlu0 %3989
        %3991 = vrot.lane.b32.xlu0 %v3866, 126
        %v3992 = vpop.permute.xlu0 %3991
        %3993 = vrot.lane.b32.xlu0 %v3867, 126
        %v3994 = vpop.permute.xlu0 %3993
        %3995 = vrot.lane.b32.xlu0 %v3868, 126
        %v3996 = vpop.permute.xlu0 %3995
        %4029 = vrot.lane.b32.xlu0 %v3869, 127
        %v4030 = vpop.permute.xlu0 %4029
        %4031 = vrot.lane.b32.xlu0 %v3870, 127
        %v4032 = vpop.permute.xlu0 %4031
        %4033 = vrot.lane.b32.xlu0 %v3871, 127
        %v4034 = vpop.permute.xlu0 %4033
        %4035 = vrot.lane.b32.xlu0 %v3872, 127
        %v4036 = vpop.permute.xlu0 %4035
        %4037 = vrot.lane.b32.xlu0 %v3873, 127
        %v4038 = vpop.permute.xlu0 %4037
        %4039 = vrot.lane.b32.xlu0 %v3874, 127
        %v4040 = vpop.permute.xlu0 %4039
        %4041 = vrot.lane.b32.xlu0 %v3875, 127
        %v4042 = vpop.permute.xlu0 %4041
        %4043 = vrot.lane.b32.xlu0 %v3876, 127
        %v4044 = vpop.permute.xlu0 %4043
        %4045 = vrot.lane.b32.xlu0 %v3877, 127
        %v4046 = vpop.permute.xlu0 %4045
        %4047 = vrot.lane.b32.xlu0 %v3878, 127
        %v4048 = vpop.permute.xlu0 %4047
        %4049 = vrot.lane.b32.xlu0 %v3879, 127
        %v4050 = vpop.permute.xlu0 %4049
        %4051 = vrot.lane.b32.xlu0 %v3880, 127
        %v4052 = vpop.permute.xlu0 %4051
        %4053 = vrot.lane.b32.xlu0 %v3881, 127
        %v4054 = vpop.permute.xlu0 %4053
        %4055 = vrot.lane.b32.xlu0 %v3882, 127
        %v4056 = vpop.permute.xlu0 %4055
        %4057 = vrot.lane.b32.xlu0 %v3883, 127
        %v4058 = vpop.permute.xlu0 %4057
        %4059 = vrot.lane.b32.xlu0 %v3884, 127
        %v4060 = vpop.permute.xlu0 %4059
        %4077 = vrot.lane.b32.xlu0 %v3869, 126
        %v4078 = vpop.permute.xlu0 %4077
        %4079 = vrot.lane.b32.xlu0 %v3870, 126
        %v4080 = vpop.permute.xlu0 %4079
        %4081 = vrot.lane.b32.xlu0 %v3871, 126
        %v4082 = vpop.permute.xlu0 %4081
        %4083 = vrot.lane.b32.xlu0 %v3872, 126
        %v4084 = vpop.permute.xlu0 %4083
        %4085 = vrot.lane.b32.xlu0 %v3873, 126
        %v4086 = vpop.permute.xlu0 %4085
        %4087 = vrot.lane.b32.xlu0 %v3874, 126
        %v4088 = vpop.permute.xlu0 %4087
        %4089 = vrot.lane.b32.xlu0 %v3875, 126
        %v4090 = vpop.permute.xlu0 %4089
        %4091 = vrot.lane.b32.xlu0 %v3876, 126
        %v4092 = vpop.permute.xlu0 %4091
        %4093 = vrot.lane.b32.xlu0 %v3877, 126
        %v4094 = vpop.permute.xlu0 %4093
        %4095 = vrot.lane.b32.xlu0 %v3878, 126
        %v4096 = vpop.permute.xlu0 %4095
        %4097 = vrot.lane.b32.xlu0 %v3879, 126
        %v4098 = vpop.permute.xlu0 %4097
        %4099 = vrot.lane.b32.xlu0 %v3880, 126
        %v4100 = vpop.permute.xlu0 %4099
        %4101 = vrot.lane.b32.xlu0 %v3881, 126
        %v4102 = vpop.permute.xlu0 %4101
        %4103 = vrot.lane.b32.xlu0 %v3882, 126
        %v4104 = vpop.permute.xlu0 %4103
        %4105 = vrot.lane.b32.xlu0 %v3883, 126
        %v4106 = vpop.permute.xlu0 %4105
        %4107 = vrot.lane.b32.xlu0 %v3884, 126
        %v4108 = vpop.permute.xlu0 %4107
        %4141 = vrot.lane.b32.xlu0 %v3885, 127
        %v4142 = vpop.permute.xlu0 %4141
        %4143 = vrot.lane.b32.xlu0 %v3886, 127
        %v4144 = vpop.permute.xlu0 %4143
        %4145 = vrot.lane.b32.xlu0 %v3887, 127
        %v4146 = vpop.permute.xlu0 %4145
        %4147 = vrot.lane.b32.xlu0 %v3888, 127
        %v4148 = vpop.permute.xlu0 %4147
        %4149 = vrot.lane.b32.xlu0 %v3889, 127
        %v4150 = vpop.permute.xlu0 %4149
        %4151 = vrot.lane.b32.xlu0 %v3890, 127
        %v4152 = vpop.permute.xlu0 %4151
        %4153 = vrot.lane.b32.xlu0 %v3891, 127
        %v4154 = vpop.permute.xlu0 %4153
        %4155 = vrot.lane.b32.xlu0 %v3892, 127
        %v4156 = vpop.permute.xlu0 %4155
        %4157 = vrot.lane.b32.xlu0 %v3893, 127
        %v4158 = vpop.permute.xlu0 %4157
        %4159 = vrot.lane.b32.xlu0 %v3894, 127
        %v4160 = vpop.permute.xlu0 %4159
        %4161 = vrot.lane.b32.xlu0 %v3895, 127
        %v4162 = vpop.permute.xlu0 %4161
        %4163 = vrot.lane.b32.xlu0 %v3896, 127
        %v4164 = vpop.permute.xlu0 %4163
        %4165 = vrot.lane.b32.xlu0 %v3897, 127
        %v4166 = vpop.permute.xlu0 %4165
        %4167 = vrot.lane.b32.xlu0 %v3898, 127
        %v4168 = vpop.permute.xlu0 %4167
        %4169 = vrot.lane.b32.xlu0 %v3899, 127
        %v4170 = vpop.permute.xlu0 %4169
        %4171 = vrot.lane.b32.xlu0 %v3900, 127
        %v4172 = vpop.permute.xlu0 %4171
        %4189 = vrot.lane.b32.xlu0 %v3885, 126
        %v4190 = vpop.permute.xlu0 %4189
        %4191 = vrot.lane.b32.xlu0 %v3886, 126
        %v4192 = vpop.permute.xlu0 %4191
        %4193 = vrot.lane.b32.xlu0 %v3887, 126
        %v4194 = vpop.permute.xlu0 %4193
        %4195 = vrot.lane.b32.xlu0 %v3888, 126
        %v4196 = vpop.permute.xlu0 %4195
        %4197 = vrot.lane.b32.xlu0 %v3889, 126
        %v4198 = vpop.permute.xlu0 %4197
        %4199 = vrot.lane.b32.xlu0 %v3890, 126
        %v4200 = vpop.permute.xlu0 %4199
        %4201 = vrot.lane.b32.xlu0 %v3891, 126
        %v4202 = vpop.permute.xlu0 %4201
        %4203 = vrot.lane.b32.xlu0 %v3892, 126
        %v4204 = vpop.permute.xlu0 %4203
        %4205 = vrot.lane.b32.xlu0 %v3893, 126
        %v4206 = vpop.permute.xlu0 %4205
        %4207 = vrot.lane.b32.xlu0 %v3894, 126
        %v4208 = vpop.permute.xlu0 %4207
        %4209 = vrot.lane.b32.xlu0 %v3895, 126
        %v4210 = vpop.permute.xlu0 %4209
        %4211 = vrot.lane.b32.xlu0 %v3896, 126
        %v4212 = vpop.permute.xlu0 %4211
        %4213 = vrot.lane.b32.xlu0 %v3897, 126
        %v4214 = vpop.permute.xlu0 %4213
        %4215 = vrot.lane.b32.xlu0 %v3898, 126
        %v4216 = vpop.permute.xlu0 %4215
        %4217 = vrot.lane.b32.xlu0 %v3899, 126
        %v4218 = vpop.permute.xlu0 %4217
        %4219 = vrot.lane.b32.xlu0 %v3900, 126
        %v4220 = vpop.permute.xlu0 %4219
        %v4237 = vrot.slane %v3857, 4
        %v4238 = vsel %vm775, %v4237, %v3853
        %v4239 = vrot.slane %v3853, 4
        %v4240 = vsel %vm775, %v3857, %v4239
        %v4242 = vunpack.c.l.s4 1983009808
        %v4243 = vunpack.c.0.s8 %v4242
        %v4244 = vperm.slane %v4238, %v4243
        %v4246 = vunpack.c.l.s4 1983009808
        %v4247 = vunpack.c.0.s8 %v4246
        %v4248 = vperm.slane %v4240, %v4247
        %v4249 = vrot.slane %v3859, 4
        %v4250 = vsel %vm775, %v4249, %v3855
        %v4251 = vrot.slane %v3855, 4
        %v4252 = vsel %vm775, %v3859, %v4251
        %v4254 = vunpack.c.l.s4 1983009808
        %v4255 = vunpack.c.0.s8 %v4254
        %v4256 = vperm.slane %v4250, %v4255
        %v4258 = vunpack.c.l.s4 1983009808
        %v4259 = vunpack.c.0.s8 %v4258
        %v4260 = vperm.slane %v4252, %v4259
        %v4261 = vrot.slane %v3865, 4
        %v4262 = vsel %vm775, %v4261, %v3861
        %v4263 = vrot.slane %v3861, 4
        %v4264 = vsel %vm775, %v3865, %v4263
        %v4266 = vunpack.c.l.s4 1983009808
        %v4267 = vunpack.c.0.s8 %v4266
        %v4268 = vperm.slane %v4262, %v4267
        %v4270 = vunpack.c.l.s4 1983009808
        %v4271 = vunpack.c.0.s8 %v4270
        %v4272 = vperm.slane %v4264, %v4271
        %v4273 = vrot.slane %v3867, 4
        %v4274 = vsel %vm775, %v4273, %v3863
        %v4275 = vrot.slane %v3863, 4
        %v4276 = vsel %vm775, %v3867, %v4275
        %v4278 = vunpack.c.l.s4 1983009808
        %v4279 = vunpack.c.0.s8 %v4278
        %v4280 = vperm.slane %v4274, %v4279
        %v4282 = vunpack.c.l.s4 1983009808
        %v4283 = vunpack.c.0.s8 %v4282
        %v4284 = vperm.slane %v4276, %v4283
        %v4285 = vrot.slane %v4256, 4
        %v4286 = vsel %vm775, %v4285, %v4244
        %v4287 = vrot.slane %v4244, 4
        %v4288 = vsel %vm775, %v4256, %v4287
        %v4290 = vunpack.c.l.s4 1934713408
        %v4291 = vunpack.c.0.s8 %v4290
        %v4292 = vperm.slane %v4286, %v4291
        %v4294 = vunpack.c.l.s4 1934713408
        %v4295 = vunpack.c.0.s8 %v4294
        %v4296 = vperm.slane %v4288, %v4295
        %v4297 = vrot.slane %v4260, 4
        %v4298 = vsel %vm775, %v4297, %v4248
        %v4299 = vrot.slane %v4248, 4
        %v4300 = vsel %vm775, %v4260, %v4299
        %v4302 = vunpack.c.l.s4 1934713408
        %v4303 = vunpack.c.0.s8 %v4302
        %v4304 = vperm.slane %v4298, %v4303
        %v4306 = vunpack.c.l.s4 1934713408
        %v4307 = vunpack.c.0.s8 %v4306
        %v4308 = vperm.slane %v4300, %v4307
        %v4309 = vrot.slane %v4280, 4
        %v4310 = vsel %vm775, %v4309, %v4268
        %v4311 = vrot.slane %v4268, 4
        %v4312 = vsel %vm775, %v4280, %v4311
        %v4314 = vunpack.c.l.s4 1934713408
        %v4315 = vunpack.c.0.s8 %v4314
        %v4316 = vperm.slane %v4310, %v4315
        %v4318 = vunpack.c.l.s4 1934713408
        %v4319 = vunpack.c.0.s8 %v4318
        %v4320 = vperm.slane %v4312, %v4319
        %v4321 = vrot.slane %v4284, 4
        %v4322 = vsel %vm775, %v4321, %v4272
        %v4323 = vrot.slane %v4272, 4
        %v4324 = vsel %vm775, %v4284, %v4323
        %v4326 = vunpack.c.l.s4 1934713408
        %v4327 = vunpack.c.0.s8 %v4326
        %v4328 = vperm.slane %v4322, %v4327
        %v4330 = vunpack.c.l.s4 1934713408
        %v4331 = vunpack.c.0.s8 %v4330
        %v4332 = vperm.slane %v4324, %v4331
        %v4333 = vrot.slane %v4316, 4
        %v4334 = vsel %vm775, %v4333, %v4292
        %v4335 = vrot.slane %v4292, 4
        %v4336 = vsel %vm775, %v4316, %v4335
        %v4337 = vrot.slane %v4320, 4
        %v4338 = vsel %vm775, %v4337, %v4296
        %v4339 = vrot.slane %v4296, 4
        %v4340 = vsel %vm775, %v4320, %v4339
        %v4341 = vrot.slane %v4328, 4
        %v4342 = vsel %vm775, %v4341, %v4304
        %v4343 = vrot.slane %v4304, 4
        %v4344 = vsel %vm775, %v4328, %v4343
        %v4345 = vrot.slane %v4332, 4
        %v4346 = vsel %vm775, %v4345, %v4308
        %v4347 = vrot.slane %v4308, 4
        %v4348 = vsel %vm775, %v4332, %v4347
        %v4349 = vrot.slane %v3926, 4
        %v4350 = vsel %vm775, %v4349, %v3918
        %v4351 = vrot.slane %v3918, 4
        %v4352 = vsel %vm775, %v3926, %v4351
        %v4354 = vunpack.c.l.s4 1983009808
        %v4355 = vunpack.c.0.s8 %v4354
        %v4356 = vperm.slane %v4350, %v4355
        %v4358 = vunpack.c.l.s4 1983009808
        %v4359 = vunpack.c.0.s8 %v4358
        %v4360 = vperm.slane %v4352, %v4359
        %v4361 = vrot.slane %v3930, 4
        %v4362 = vsel %vm775, %v4361, %v3922
        %v4363 = vrot.slane %v3922, 4
        %v4364 = vsel %vm775, %v3930, %v4363
        %v4366 = vunpack.c.l.s4 1983009808
        %v4367 = vunpack.c.0.s8 %v4366
        %v4368 = vperm.slane %v4362, %v4367
        %v4370 = vunpack.c.l.s4 1983009808
        %v4371 = vunpack.c.0.s8 %v4370
        %v4372 = vperm.slane %v4364, %v4371
        %v4373 = vrot.slane %v3942, 4
        %v4374 = vsel %vm775, %v4373, %v3934
        %v4375 = vrot.slane %v3934, 4
        %v4376 = vsel %vm775, %v3942, %v4375
        %v4378 = vunpack.c.l.s4 1983009808
        %v4379 = vunpack.c.0.s8 %v4378
        %v4380 = vperm.slane %v4374, %v4379
        %v4382 = vunpack.c.l.s4 1983009808
        %v4383 = vunpack.c.0.s8 %v4382
        %v4384 = vperm.slane %v4376, %v4383
        %v4385 = vrot.slane %v3946, 4
        %v4386 = vsel %vm775, %v4385, %v3938
        %v4387 = vrot.slane %v3938, 4
        %v4388 = vsel %vm775, %v3946, %v4387
        %v4390 = vunpack.c.l.s4 1983009808
        %v4391 = vunpack.c.0.s8 %v4390
        %v4392 = vperm.slane %v4386, %v4391
        %v4394 = vunpack.c.l.s4 1983009808
        %v4395 = vunpack.c.0.s8 %v4394
        %v4396 = vperm.slane %v4388, %v4395
        %v4397 = vrot.slane %v4368, 4
        %v4398 = vsel %vm775, %v4397, %v4356
        %v4399 = vrot.slane %v4356, 4
        %v4400 = vsel %vm775, %v4368, %v4399
        %v4402 = vunpack.c.l.s4 1934713408
        %v4403 = vunpack.c.0.s8 %v4402
        %v4404 = vperm.slane %v4398, %v4403
        %v4406 = vunpack.c.l.s4 1934713408
        %v4407 = vunpack.c.0.s8 %v4406
        %v4408 = vperm.slane %v4400, %v4407
        %v4409 = vrot.slane %v4372, 4
        %v4410 = vsel %vm775, %v4409, %v4360
        %v4411 = vrot.slane %v4360, 4
        %v4412 = vsel %vm775, %v4372, %v4411
        %v4414 = vunpack.c.l.s4 1934713408
        %v4415 = vunpack.c.0.s8 %v4414
        %v4416 = vperm.slane %v4410, %v4415
        %v4418 = vunpack.c.l.s4 1934713408
        %v4419 = vunpack.c.0.s8 %v4418
        %v4420 = vperm.slane %v4412, %v4419
        %v4421 = vrot.slane %v4392, 4
        %v4422 = vsel %vm775, %v4421, %v4380
        %v4423 = vrot.slane %v4380, 4
        %v4424 = vsel %vm775, %v4392, %v4423
        %v4426 = vunpack.c.l.s4 1934713408
        %v4427 = vunpack.c.0.s8 %v4426
        %v4428 = vperm.slane %v4422, %v4427
        %v4430 = vunpack.c.l.s4 1934713408
        %v4431 = vunpack.c.0.s8 %v4430
        %v4432 = vperm.slane %v4424, %v4431
        %v4433 = vrot.slane %v4396, 4
        %v4434 = vsel %vm775, %v4433, %v4384
        %v4435 = vrot.slane %v4384, 4
        %v4436 = vsel %vm775, %v4396, %v4435
        %v4438 = vunpack.c.l.s4 1934713408
        %v4439 = vunpack.c.0.s8 %v4438
        %v4440 = vperm.slane %v4434, %v4439
        %v4442 = vunpack.c.l.s4 1934713408
        %v4443 = vunpack.c.0.s8 %v4442
        %v4444 = vperm.slane %v4436, %v4443
        %v4445 = vrot.slane %v4428, 4
        %v4446 = vsel %vm775, %v4445, %v4404
        %v4447 = vrot.slane %v4404, 4
        %v4448 = vsel %vm775, %v4428, %v4447
        %v4449 = vrot.slane %v4432, 4
        %v4450 = vsel %vm775, %v4449, %v4408
        %v4451 = vrot.slane %v4408, 4
        %v4452 = vsel %vm775, %v4432, %v4451
        %v4453 = vrot.slane %v4440, 4
        %v4454 = vsel %vm775, %v4453, %v4416
        %v4455 = vrot.slane %v4416, 4
        %v4456 = vsel %vm775, %v4440, %v4455
        %v4457 = vrot.slane %v4444, 4
        %v4458 = vsel %vm775, %v4457, %v4420
        %v4459 = vrot.slane %v4420, 4
        %v4460 = vsel %vm775, %v4444, %v4459
        %v4461 = vrot.slane %v3974, 4
        %v4462 = vsel %vm775, %v4461, %v3966
        %v4463 = vrot.slane %v3966, 4
        %v4464 = vsel %vm775, %v3974, %v4463
        %v4466 = vunpack.c.l.s4 1983009808
        %v4467 = vunpack.c.0.s8 %v4466
        %v4468 = vperm.slane %v4462, %v4467
        %v4470 = vunpack.c.l.s4 1983009808
        %v4471 = vunpack.c.0.s8 %v4470
        %v4472 = vperm.slane %v4464, %v4471
        %v4473 = vrot.slane %v3978, 4
        %v4474 = vsel %vm775, %v4473, %v3970
        %v4475 = vrot.slane %v3970, 4
        %v4476 = vsel %vm775, %v3978, %v4475
        %v4478 = vunpack.c.l.s4 1983009808
        %v4479 = vunpack.c.0.s8 %v4478
        %v4480 = vperm.slane %v4474, %v4479
        %v4482 = vunpack.c.l.s4 1983009808
        %v4483 = vunpack.c.0.s8 %v4482
        %v4484 = vperm.slane %v4476, %v4483
        %v4485 = vrot.slane %v3990, 4
        %v4486 = vsel %vm775, %v4485, %v3982
        %v4487 = vrot.slane %v3982, 4
        %v4488 = vsel %vm775, %v3990, %v4487
        %v4490 = vunpack.c.l.s4 1983009808
        %v4491 = vunpack.c.0.s8 %v4490
        %v4492 = vperm.slane %v4486, %v4491
        %v4494 = vunpack.c.l.s4 1983009808
        %v4495 = vunpack.c.0.s8 %v4494
        %v4496 = vperm.slane %v4488, %v4495
        %v4497 = vrot.slane %v3994, 4
        %v4498 = vsel %vm775, %v4497, %v3986
        %v4499 = vrot.slane %v3986, 4
        %v4500 = vsel %vm775, %v3994, %v4499
        %v4502 = vunpack.c.l.s4 1983009808
        %v4503 = vunpack.c.0.s8 %v4502
        %v4504 = vperm.slane %v4498, %v4503
        %v4506 = vunpack.c.l.s4 1983009808
        %v4507 = vunpack.c.0.s8 %v4506
        %v4508 = vperm.slane %v4500, %v4507
        %v4509 = vrot.slane %v4480, 4
        %v4510 = vsel %vm775, %v4509, %v4468
        %v4511 = vrot.slane %v4468, 4
        %v4512 = vsel %vm775, %v4480, %v4511
        %v4514 = vunpack.c.l.s4 1934713408
        %v4515 = vunpack.c.0.s8 %v4514
        %v4516 = vperm.slane %v4510, %v4515
        %v4518 = vunpack.c.l.s4 1934713408
        %v4519 = vunpack.c.0.s8 %v4518
        %v4520 = vperm.slane %v4512, %v4519
        %v4521 = vrot.slane %v4484, 4
        %v4522 = vsel %vm775, %v4521, %v4472
        %v4523 = vrot.slane %v4472, 4
        %v4524 = vsel %vm775, %v4484, %v4523
        %v4526 = vunpack.c.l.s4 1934713408
        %v4527 = vunpack.c.0.s8 %v4526
        %v4528 = vperm.slane %v4522, %v4527
        %v4530 = vunpack.c.l.s4 1934713408
        %v4531 = vunpack.c.0.s8 %v4530
        %v4532 = vperm.slane %v4524, %v4531
        %v4533 = vrot.slane %v4504, 4
        %v4534 = vsel %vm775, %v4533, %v4492
        %v4535 = vrot.slane %v4492, 4
        %v4536 = vsel %vm775, %v4504, %v4535
        %v4538 = vunpack.c.l.s4 1934713408
        %v4539 = vunpack.c.0.s8 %v4538
        %v4540 = vperm.slane %v4534, %v4539
        %v4542 = vunpack.c.l.s4 1934713408
        %v4543 = vunpack.c.0.s8 %v4542
        %v4544 = vperm.slane %v4536, %v4543
        %v4545 = vrot.slane %v4508, 4
        %v4546 = vsel %vm775, %v4545, %v4496
        %v4547 = vrot.slane %v4496, 4
        %v4548 = vsel %vm775, %v4508, %v4547
        %v4550 = vunpack.c.l.s4 1934713408
        %v4551 = vunpack.c.0.s8 %v4550
        %v4552 = vperm.slane %v4546, %v4551
        %v4554 = vunpack.c.l.s4 1934713408
        %v4555 = vunpack.c.0.s8 %v4554
        %v4556 = vperm.slane %v4548, %v4555
        %v4557 = vrot.slane %v4540, 4
        %v4558 = vsel %vm775, %v4557, %v4516
        %v4559 = vrot.slane %v4516, 4
        %v4560 = vsel %vm775, %v4540, %v4559
        %v4561 = vrot.slane %v4544, 4
        %v4562 = vsel %vm775, %v4561, %v4520
        %v4563 = vrot.slane %v4520, 4
        %v4564 = vsel %vm775, %v4544, %v4563
        %v4565 = vrot.slane %v4552, 4
        %v4566 = vsel %vm775, %v4565, %v4528
        %v4567 = vrot.slane %v4528, 4
        %v4568 = vsel %vm775, %v4552, %v4567
        %v4569 = vrot.slane %v4556, 4
        %v4570 = vsel %vm775, %v4569, %v4532
        %v4571 = vrot.slane %v4532, 4
        %v4572 = vsel %vm775, %v4556, %v4571
        %v4573 = vrot.slane %v3873, 4
        %v4574 = vsel %vm775, %v4573, %v3869
        %v4575 = vrot.slane %v3869, 4
        %v4576 = vsel %vm775, %v3873, %v4575
        %v4578 = vunpack.c.l.s4 1983009808
        %v4579 = vunpack.c.0.s8 %v4578
        %v4580 = vperm.slane %v4574, %v4579
        %v4582 = vunpack.c.l.s4 1983009808
        %v4583 = vunpack.c.0.s8 %v4582
        %v4584 = vperm.slane %v4576, %v4583
        %v4585 = vrot.slane %v3875, 4
        %v4586 = vsel %vm775, %v4585, %v3871
        %v4587 = vrot.slane %v3871, 4
        %v4588 = vsel %vm775, %v3875, %v4587
        %v4590 = vunpack.c.l.s4 1983009808
        %v4591 = vunpack.c.0.s8 %v4590
        %v4592 = vperm.slane %v4586, %v4591
        %v4594 = vunpack.c.l.s4 1983009808
        %v4595 = vunpack.c.0.s8 %v4594
        %v4596 = vperm.slane %v4588, %v4595
        %v4597 = vrot.slane %v3881, 4
        %v4598 = vsel %vm775, %v4597, %v3877
        %v4599 = vrot.slane %v3877, 4
        %v4600 = vsel %vm775, %v3881, %v4599
        %v4602 = vunpack.c.l.s4 1983009808
        %v4603 = vunpack.c.0.s8 %v4602
        %v4604 = vperm.slane %v4598, %v4603
        %v4606 = vunpack.c.l.s4 1983009808
        %v4607 = vunpack.c.0.s8 %v4606
        %v4608 = vperm.slane %v4600, %v4607
        %v4609 = vrot.slane %v3883, 4
        %v4610 = vsel %vm775, %v4609, %v3879
        %v4611 = vrot.slane %v3879, 4
        %v4612 = vsel %vm775, %v3883, %v4611
        %v4614 = vunpack.c.l.s4 1983009808
        %v4615 = vunpack.c.0.s8 %v4614
        %v4616 = vperm.slane %v4610, %v4615
        %v4618 = vunpack.c.l.s4 1983009808
        %v4619 = vunpack.c.0.s8 %v4618
        %v4620 = vperm.slane %v4612, %v4619
        %v4621 = vrot.slane %v4592, 4
        %v4622 = vsel %vm775, %v4621, %v4580
        %v4623 = vrot.slane %v4580, 4
        %v4624 = vsel %vm775, %v4592, %v4623
        %v4626 = vunpack.c.l.s4 1934713408
        %v4627 = vunpack.c.0.s8 %v4626
        %v4628 = vperm.slane %v4622, %v4627
        %v4630 = vunpack.c.l.s4 1934713408
        %v4631 = vunpack.c.0.s8 %v4630
        %v4632 = vperm.slane %v4624, %v4631
        %v4633 = vrot.slane %v4596, 4
        %v4634 = vsel %vm775, %v4633, %v4584
        %v4635 = vrot.slane %v4584, 4
        %v4636 = vsel %vm775, %v4596, %v4635
        %v4638 = vunpack.c.l.s4 1934713408
        %v4639 = vunpack.c.0.s8 %v4638
        %v4640 = vperm.slane %v4634, %v4639
        %v4642 = vunpack.c.l.s4 1934713408
        %v4643 = vunpack.c.0.s8 %v4642
        %v4644 = vperm.slane %v4636, %v4643
        %v4645 = vrot.slane %v4616, 4
        %v4646 = vsel %vm775, %v4645, %v4604
        %v4647 = vrot.slane %v4604, 4
        %v4648 = vsel %vm775, %v4616, %v4647
        %v4650 = vunpack.c.l.s4 1934713408
        %v4651 = vunpack.c.0.s8 %v4650
        %v4652 = vperm.slane %v4646, %v4651
        %v4654 = vunpack.c.l.s4 1934713408
        %v4655 = vunpack.c.0.s8 %v4654
        %v4656 = vperm.slane %v4648, %v4655
        %v4657 = vrot.slane %v4620, 4
        %v4658 = vsel %vm775, %v4657, %v4608
        %v4659 = vrot.slane %v4608, 4
        %v4660 = vsel %vm775, %v4620, %v4659
        %v4662 = vunpack.c.l.s4 1934713408
        %v4663 = vunpack.c.0.s8 %v4662
        %v4664 = vperm.slane %v4658, %v4663
        %v4666 = vunpack.c.l.s4 1934713408
        %v4667 = vunpack.c.0.s8 %v4666
        %v4668 = vperm.slane %v4660, %v4667
        %v4669 = vrot.slane %v4652, 4
        %v4670 = vsel %vm775, %v4669, %v4628
        %v4671 = vrot.slane %v4628, 4
        %v4672 = vsel %vm775, %v4652, %v4671
        %v4673 = vrot.slane %v4656, 4
        %v4674 = vsel %vm775, %v4673, %v4632
        %v4675 = vrot.slane %v4632, 4
        %v4676 = vsel %vm775, %v4656, %v4675
        %v4677 = vrot.slane %v4664, 4
        %v4678 = vsel %vm775, %v4677, %v4640
        %v4679 = vrot.slane %v4640, 4
        %v4680 = vsel %vm775, %v4664, %v4679
        %v4681 = vrot.slane %v4668, 4
        %v4682 = vsel %vm775, %v4681, %v4644
        %v4683 = vrot.slane %v4644, 4
        %v4684 = vsel %vm775, %v4668, %v4683
        %v4685 = vrot.slane %v4038, 4
        %v4686 = vsel %vm775, %v4685, %v4030
        %v4687 = vrot.slane %v4030, 4
        %v4688 = vsel %vm775, %v4038, %v4687
        %v4690 = vunpack.c.l.s4 1983009808
        %v4691 = vunpack.c.0.s8 %v4690
        %v4692 = vperm.slane %v4686, %v4691
        %v4694 = vunpack.c.l.s4 1983009808
        %v4695 = vunpack.c.0.s8 %v4694
        %v4696 = vperm.slane %v4688, %v4695
        %v4697 = vrot.slane %v4042, 4
        %v4698 = vsel %vm775, %v4697, %v4034
        %v4699 = vrot.slane %v4034, 4
        %v4700 = vsel %vm775, %v4042, %v4699
        %v4702 = vunpack.c.l.s4 1983009808
        %v4703 = vunpack.c.0.s8 %v4702
        %v4704 = vperm.slane %v4698, %v4703
        %v4706 = vunpack.c.l.s4 1983009808
        %v4707 = vunpack.c.0.s8 %v4706
        %v4708 = vperm.slane %v4700, %v4707
        %v4709 = vrot.slane %v4054, 4
        %v4710 = vsel %vm775, %v4709, %v4046
        %v4711 = vrot.slane %v4046, 4
        %v4712 = vsel %vm775, %v4054, %v4711
        %v4714 = vunpack.c.l.s4 1983009808
        %v4715 = vunpack.c.0.s8 %v4714
        %v4716 = vperm.slane %v4710, %v4715
        %v4718 = vunpack.c.l.s4 1983009808
        %v4719 = vunpack.c.0.s8 %v4718
        %v4720 = vperm.slane %v4712, %v4719
        %v4721 = vrot.slane %v4058, 4
        %v4722 = vsel %vm775, %v4721, %v4050
        %v4723 = vrot.slane %v4050, 4
        %v4724 = vsel %vm775, %v4058, %v4723
        %v4726 = vunpack.c.l.s4 1983009808
        %v4727 = vunpack.c.0.s8 %v4726
        %v4728 = vperm.slane %v4722, %v4727
        %v4730 = vunpack.c.l.s4 1983009808
        %v4731 = vunpack.c.0.s8 %v4730
        %v4732 = vperm.slane %v4724, %v4731
        %v4733 = vrot.slane %v4704, 4
        %v4734 = vsel %vm775, %v4733, %v4692
        %v4735 = vrot.slane %v4692, 4
        %v4736 = vsel %vm775, %v4704, %v4735
        %v4738 = vunpack.c.l.s4 1934713408
        %v4739 = vunpack.c.0.s8 %v4738
        %v4740 = vperm.slane %v4734, %v4739
        %v4742 = vunpack.c.l.s4 1934713408
        %v4743 = vunpack.c.0.s8 %v4742
        %v4744 = vperm.slane %v4736, %v4743
        %v4745 = vrot.slane %v4708, 4
        %v4746 = vsel %vm775, %v4745, %v4696
        %v4747 = vrot.slane %v4696, 4
        %v4748 = vsel %vm775, %v4708, %v4747
        %v4750 = vunpack.c.l.s4 1934713408
        %v4751 = vunpack.c.0.s8 %v4750
        %v4752 = vperm.slane %v4746, %v4751
        %v4754 = vunpack.c.l.s4 1934713408
        %v4755 = vunpack.c.0.s8 %v4754
        %v4756 = vperm.slane %v4748, %v4755
        %v4757 = vrot.slane %v4728, 4
        %v4758 = vsel %vm775, %v4757, %v4716
        %v4759 = vrot.slane %v4716, 4
        %v4760 = vsel %vm775, %v4728, %v4759
        %v4762 = vunpack.c.l.s4 1934713408
        %v4763 = vunpack.c.0.s8 %v4762
        %v4764 = vperm.slane %v4758, %v4763
        %v4766 = vunpack.c.l.s4 1934713408
        %v4767 = vunpack.c.0.s8 %v4766
        %v4768 = vperm.slane %v4760, %v4767
        %v4769 = vrot.slane %v4732, 4
        %v4770 = vsel %vm775, %v4769, %v4720
        %v4771 = vrot.slane %v4720, 4
        %v4772 = vsel %vm775, %v4732, %v4771
        %v4774 = vunpack.c.l.s4 1934713408
        %v4775 = vunpack.c.0.s8 %v4774
        %v4776 = vperm.slane %v4770, %v4775
        %v4778 = vunpack.c.l.s4 1934713408
        %v4779 = vunpack.c.0.s8 %v4778
        %v4780 = vperm.slane %v4772, %v4779
        %v4781 = vrot.slane %v4764, 4
        %v4782 = vsel %vm775, %v4781, %v4740
        %v4783 = vrot.slane %v4740, 4
        %v4784 = vsel %vm775, %v4764, %v4783
        %v4785 = vrot.slane %v4768, 4
        %v4786 = vsel %vm775, %v4785, %v4744
        %v4787 = vrot.slane %v4744, 4
        %v4788 = vsel %vm775, %v4768, %v4787
        %v4789 = vrot.slane %v4776, 4
        %v4790 = vsel %vm775, %v4789, %v4752
        %v4791 = vrot.slane %v4752, 4
        %v4792 = vsel %vm775, %v4776, %v4791
        %v4793 = vrot.slane %v4780, 4
        %v4794 = vsel %vm775, %v4793, %v4756
        %v4795 = vrot.slane %v4756, 4
        %v4796 = vsel %vm775, %v4780, %v4795
        %v4797 = vrot.slane %v4086, 4
        %v4798 = vsel %vm775, %v4797, %v4078
        %v4799 = vrot.slane %v4078, 4
        %v4800 = vsel %vm775, %v4086, %v4799
        %v4802 = vunpack.c.l.s4 1983009808
        %v4803 = vunpack.c.0.s8 %v4802
        %v4804 = vperm.slane %v4798, %v4803
        %v4806 = vunpack.c.l.s4 1983009808
        %v4807 = vunpack.c.0.s8 %v4806
        %v4808 = vperm.slane %v4800, %v4807
        %v4809 = vrot.slane %v4090, 4
        %v4810 = vsel %vm775, %v4809, %v4082
        %v4811 = vrot.slane %v4082, 4
        %v4812 = vsel %vm775, %v4090, %v4811
        %v4814 = vunpack.c.l.s4 1983009808
        %v4815 = vunpack.c.0.s8 %v4814
        %v4816 = vperm.slane %v4810, %v4815
        %v4818 = vunpack.c.l.s4 1983009808
        %v4819 = vunpack.c.0.s8 %v4818
        %v4820 = vperm.slane %v4812, %v4819
        %v4821 = vrot.slane %v4102, 4
        %v4822 = vsel %vm775, %v4821, %v4094
        %v4823 = vrot.slane %v4094, 4
        %v4824 = vsel %vm775, %v4102, %v4823
        %v4826 = vunpack.c.l.s4 1983009808
        %v4827 = vunpack.c.0.s8 %v4826
        %v4828 = vperm.slane %v4822, %v4827
        %v4830 = vunpack.c.l.s4 1983009808
        %v4831 = vunpack.c.0.s8 %v4830
        %v4832 = vperm.slane %v4824, %v4831
        %v4833 = vrot.slane %v4106, 4
        %v4834 = vsel %vm775, %v4833, %v4098
        %v4835 = vrot.slane %v4098, 4
        %v4836 = vsel %vm775, %v4106, %v4835
        %v4838 = vunpack.c.l.s4 1983009808
        %v4839 = vunpack.c.0.s8 %v4838
        %v4840 = vperm.slane %v4834, %v4839
        %v4842 = vunpack.c.l.s4 1983009808
        %v4843 = vunpack.c.0.s8 %v4842
        %v4844 = vperm.slane %v4836, %v4843
        %v4845 = vrot.slane %v4816, 4
        %v4846 = vsel %vm775, %v4845, %v4804
        %v4847 = vrot.slane %v4804, 4
        %v4848 = vsel %vm775, %v4816, %v4847
        %v4850 = vunpack.c.l.s4 1934713408
        %v4851 = vunpack.c.0.s8 %v4850
        %v4852 = vperm.slane %v4846, %v4851
        %v4854 = vunpack.c.l.s4 1934713408
        %v4855 = vunpack.c.0.s8 %v4854
        %v4856 = vperm.slane %v4848, %v4855
        %v4857 = vrot.slane %v4820, 4
        %v4858 = vsel %vm775, %v4857, %v4808
        %v4859 = vrot.slane %v4808, 4
        %v4860 = vsel %vm775, %v4820, %v4859
        %v4862 = vunpack.c.l.s4 1934713408
        %v4863 = vunpack.c.0.s8 %v4862
        %v4864 = vperm.slane %v4858, %v4863
        %v4866 = vunpack.c.l.s4 1934713408
        %v4867 = vunpack.c.0.s8 %v4866
        %v4868 = vperm.slane %v4860, %v4867
        %v4869 = vrot.slane %v4840, 4
        %v4870 = vsel %vm775, %v4869, %v4828
        %v4871 = vrot.slane %v4828, 4
        %v4872 = vsel %vm775, %v4840, %v4871
        %v4874 = vunpack.c.l.s4 1934713408
        %v4875 = vunpack.c.0.s8 %v4874
        %v4876 = vperm.slane %v4870, %v4875
        %v4878 = vunpack.c.l.s4 1934713408
        %v4879 = vunpack.c.0.s8 %v4878
        %v4880 = vperm.slane %v4872, %v4879
        %v4881 = vrot.slane %v4844, 4
        %v4882 = vsel %vm775, %v4881, %v4832
        %v4883 = vrot.slane %v4832, 4
        %v4884 = vsel %vm775, %v4844, %v4883
        %v4886 = vunpack.c.l.s4 1934713408
        %v4887 = vunpack.c.0.s8 %v4886
        %v4888 = vperm.slane %v4882, %v4887
        %v4890 = vunpack.c.l.s4 1934713408
        %v4891 = vunpack.c.0.s8 %v4890
        %v4892 = vperm.slane %v4884, %v4891
        %v4893 = vrot.slane %v4876, 4
        %v4894 = vsel %vm775, %v4893, %v4852
        %v4895 = vrot.slane %v4852, 4
        %v4896 = vsel %vm775, %v4876, %v4895
        %v4897 = vrot.slane %v4880, 4
        %v4898 = vsel %vm775, %v4897, %v4856
        %v4899 = vrot.slane %v4856, 4
        %v4900 = vsel %vm775, %v4880, %v4899
        %v4901 = vrot.slane %v4888, 4
        %v4902 = vsel %vm775, %v4901, %v4864
        %v4903 = vrot.slane %v4864, 4
        %v4904 = vsel %vm775, %v4888, %v4903
        %v4905 = vrot.slane %v4892, 4
        %v4906 = vsel %vm775, %v4905, %v4868
        %v4907 = vrot.slane %v4868, 4
        %v4908 = vsel %vm775, %v4892, %v4907
        %v4909 = vrot.slane %v3889, 4
        %v4910 = vsel %vm775, %v4909, %v3885
        %v4911 = vrot.slane %v3885, 4
        %v4912 = vsel %vm775, %v3889, %v4911
        %v4914 = vunpack.c.l.s4 1983009808
        %v4915 = vunpack.c.0.s8 %v4914
        %v4916 = vperm.slane %v4910, %v4915
        %v4918 = vunpack.c.l.s4 1983009808
        %v4919 = vunpack.c.0.s8 %v4918
        %v4920 = vperm.slane %v4912, %v4919
        %v4921 = vrot.slane %v3891, 4
        %v4922 = vsel %vm775, %v4921, %v3887
        %v4923 = vrot.slane %v3887, 4
        %v4924 = vsel %vm775, %v3891, %v4923
        %v4926 = vunpack.c.l.s4 1983009808
        %v4927 = vunpack.c.0.s8 %v4926
        %v4928 = vperm.slane %v4922, %v4927
        %v4930 = vunpack.c.l.s4 1983009808
        %v4931 = vunpack.c.0.s8 %v4930
        %v4932 = vperm.slane %v4924, %v4931
        %v4933 = vrot.slane %v3897, 4
        %v4934 = vsel %vm775, %v4933, %v3893
        %v4935 = vrot.slane %v3893, 4
        %v4936 = vsel %vm775, %v3897, %v4935
        %v4938 = vunpack.c.l.s4 1983009808
        %v4939 = vunpack.c.0.s8 %v4938
        %v4940 = vperm.slane %v4934, %v4939
        %v4942 = vunpack.c.l.s4 1983009808
        %v4943 = vunpack.c.0.s8 %v4942
        %v4944 = vperm.slane %v4936, %v4943
        %v4945 = vrot.slane %v3899, 4
        %v4946 = vsel %vm775, %v4945, %v3895
        %v4947 = vrot.slane %v3895, 4
        %v4948 = vsel %vm775, %v3899, %v4947
        %v4950 = vunpack.c.l.s4 1983009808
        %v4951 = vunpack.c.0.s8 %v4950
        %v4952 = vperm.slane %v4946, %v4951
        %v4954 = vunpack.c.l.s4 1983009808
        %v4955 = vunpack.c.0.s8 %v4954
        %v4956 = vperm.slane %v4948, %v4955
        %v4957 = vrot.slane %v4928, 4
        %v4958 = vsel %vm775, %v4957, %v4916
        %v4959 = vrot.slane %v4916, 4
        %v4960 = vsel %vm775, %v4928, %v4959
        %v4962 = vunpack.c.l.s4 1934713408
        %v4963 = vunpack.c.0.s8 %v4962
        %v4964 = vperm.slane %v4958, %v4963
        %v4966 = vunpack.c.l.s4 1934713408
        %v4967 = vunpack.c.0.s8 %v4966
        %v4968 = vperm.slane %v4960, %v4967
        %v4969 = vrot.slane %v4932, 4
        %v4970 = vsel %vm775, %v4969, %v4920
        %v4971 = vrot.slane %v4920, 4
        %v4972 = vsel %vm775, %v4932, %v4971
        %v4974 = vunpack.c.l.s4 1934713408
        %v4975 = vunpack.c.0.s8 %v4974
        %v4976 = vperm.slane %v4970, %v4975
        %v4978 = vunpack.c.l.s4 1934713408
        %v4979 = vunpack.c.0.s8 %v4978
        %v4980 = vperm.slane %v4972, %v4979
        %v4981 = vrot.slane %v4952, 4
        %v4982 = vsel %vm775, %v4981, %v4940
        %v4983 = vrot.slane %v4940, 4
        %v4984 = vsel %vm775, %v4952, %v4983
        %v4986 = vunpack.c.l.s4 1934713408
        %v4987 = vunpack.c.0.s8 %v4986
        %v4988 = vperm.slane %v4982, %v4987
        %v4990 = vunpack.c.l.s4 1934713408
        %v4991 = vunpack.c.0.s8 %v4990
        %v4992 = vperm.slane %v4984, %v4991
        %v4993 = vrot.slane %v4956, 4
        %v4994 = vsel %vm775, %v4993, %v4944
        %v4995 = vrot.slane %v4944, 4
        %v4996 = vsel %vm775, %v4956, %v4995
        %v4998 = vunpack.c.l.s4 1934713408
        %v4999 = vunpack.c.0.s8 %v4998
        %v5000 = vperm.slane %v4994, %v4999
        %v5002 = vunpack.c.l.s4 1934713408
        %v5003 = vunpack.c.0.s8 %v5002
        %v5004 = vperm.slane %v4996, %v5003
        %v5005 = vrot.slane %v4988, 4
        %v5006 = vsel %vm775, %v5005, %v4964
        %v5007 = vrot.slane %v4964, 4
        %v5008 = vsel %vm775, %v4988, %v5007
        %v5009 = vrot.slane %v4992, 4
        %v5010 = vsel %vm775, %v5009, %v4968
        %v5011 = vrot.slane %v4968, 4
        %v5012 = vsel %vm775, %v4992, %v5011
        %v5013 = vrot.slane %v5000, 4
        %v5014 = vsel %vm775, %v5013, %v4976
        %v5015 = vrot.slane %v4976, 4
        %v5016 = vsel %vm775, %v5000, %v5015
        %v5017 = vrot.slane %v5004, 4
        %v5018 = vsel %vm775, %v5017, %v4980
        %v5019 = vrot.slane %v4980, 4
        %v5020 = vsel %vm775, %v5004, %v5019
        %v5021 = vrot.slane %v4150, 4
        %v5022 = vsel %vm775, %v5021, %v4142
        %v5023 = vrot.slane %v4142, 4
        %v5024 = vsel %vm775, %v4150, %v5023
        %v5026 = vunpack.c.l.s4 1983009808
        %v5027 = vunpack.c.0.s8 %v5026
        %v5028 = vperm.slane %v5022, %v5027
        %v5030 = vunpack.c.l.s4 1983009808
        %v5031 = vunpack.c.0.s8 %v5030
        %v5032 = vperm.slane %v5024, %v5031
        %v5033 = vrot.slane %v4154, 4
        %v5034 = vsel %vm775, %v5033, %v4146
        %v5035 = vrot.slane %v4146, 4
        %v5036 = vsel %vm775, %v4154, %v5035
        %v5038 = vunpack.c.l.s4 1983009808
        %v5039 = vunpack.c.0.s8 %v5038
        %v5040 = vperm.slane %v5034, %v5039
        %v5042 = vunpack.c.l.s4 1983009808
        %v5043 = vunpack.c.0.s8 %v5042
        %v5044 = vperm.slane %v5036, %v5043
        %v5045 = vrot.slane %v4166, 4
        %v5046 = vsel %vm775, %v5045, %v4158
        %v5047 = vrot.slane %v4158, 4
        %v5048 = vsel %vm775, %v4166, %v5047
        %v5050 = vunpack.c.l.s4 1983009808
        %v5051 = vunpack.c.0.s8 %v5050
        %v5052 = vperm.slane %v5046, %v5051
        %v5054 = vunpack.c.l.s4 1983009808
        %v5055 = vunpack.c.0.s8 %v5054
        %v5056 = vperm.slane %v5048, %v5055
        %v5057 = vrot.slane %v4170, 4
        %v5058 = vsel %vm775, %v5057, %v4162
        %v5059 = vrot.slane %v4162, 4
        %v5060 = vsel %vm775, %v4170, %v5059
        %v5062 = vunpack.c.l.s4 1983009808
        %v5063 = vunpack.c.0.s8 %v5062
        %v5064 = vperm.slane %v5058, %v5063
        %v5066 = vunpack.c.l.s4 1983009808
        %v5067 = vunpack.c.0.s8 %v5066
        %v5068 = vperm.slane %v5060, %v5067
        %v5069 = vrot.slane %v5040, 4
        %v5070 = vsel %vm775, %v5069, %v5028
        %v5071 = vrot.slane %v5028, 4
        %v5072 = vsel %vm775, %v5040, %v5071
        %v5074 = vunpack.c.l.s4 1934713408
        %v5075 = vunpack.c.0.s8 %v5074
        %v5076 = vperm.slane %v5070, %v5075
        %v5078 = vunpack.c.l.s4 1934713408
        %v5079 = vunpack.c.0.s8 %v5078
        %v5080 = vperm.slane %v5072, %v5079
        %v5081 = vrot.slane %v5044, 4
        %v5082 = vsel %vm775, %v5081, %v5032
        %v5083 = vrot.slane %v5032, 4
        %v5084 = vsel %vm775, %v5044, %v5083
        %v5086 = vunpack.c.l.s4 1934713408
        %v5087 = vunpack.c.0.s8 %v5086
        %v5088 = vperm.slane %v5082, %v5087
        %v5090 = vunpack.c.l.s4 1934713408
        %v5091 = vunpack.c.0.s8 %v5090
        %v5092 = vperm.slane %v5084, %v5091
        %v5093 = vrot.slane %v5064, 4
        %v5094 = vsel %vm775, %v5093, %v5052
        %v5095 = vrot.slane %v5052, 4
        %v5096 = vsel %vm775, %v5064, %v5095
        %v5098 = vunpack.c.l.s4 1934713408
        %v5099 = vunpack.c.0.s8 %v5098
        %v5100 = vperm.slane %v5094, %v5099
        %v5102 = vunpack.c.l.s4 1934713408
        %v5103 = vunpack.c.0.s8 %v5102
        %v5104 = vperm.slane %v5096, %v5103
        %v5105 = vrot.slane %v5068, 4
        %v5106 = vsel %vm775, %v5105, %v5056
        %v5107 = vrot.slane %v5056, 4
        %v5108 = vsel %vm775, %v5068, %v5107
        %v5110 = vunpack.c.l.s4 1934713408
        %v5111 = vunpack.c.0.s8 %v5110
        %v5112 = vperm.slane %v5106, %v5111
        %v5114 = vunpack.c.l.s4 1934713408
        %v5115 = vunpack.c.0.s8 %v5114
        %v5116 = vperm.slane %v5108, %v5115
        %v5117 = vrot.slane %v5100, 4
        %v5118 = vsel %vm775, %v5117, %v5076
        %v5119 = vrot.slane %v5076, 4
        %v5120 = vsel %vm775, %v5100, %v5119
        %v5121 = vrot.slane %v5104, 4
        %v5122 = vsel %vm775, %v5121, %v5080
        %v5123 = vrot.slane %v5080, 4
        %v5124 = vsel %vm775, %v5104, %v5123
        %v5125 = vrot.slane %v5112, 4
        %v5126 = vsel %vm775, %v5125, %v5088
        %v5127 = vrot.slane %v5088, 4
        %v5128 = vsel %vm775, %v5112, %v5127
        %v5129 = vrot.slane %v5116, 4
        %v5130 = vsel %vm775, %v5129, %v5092
        %v5131 = vrot.slane %v5092, 4
        %v5132 = vsel %vm775, %v5116, %v5131
        %v5133 = vrot.slane %v4198, 4
        %v5134 = vsel %vm775, %v5133, %v4190
        %v5135 = vrot.slane %v4190, 4
        %v5136 = vsel %vm775, %v4198, %v5135
        %v5138 = vunpack.c.l.s4 1983009808
        %v5139 = vunpack.c.0.s8 %v5138
        %v5140 = vperm.slane %v5134, %v5139
        %v5142 = vunpack.c.l.s4 1983009808
        %v5143 = vunpack.c.0.s8 %v5142
        %v5144 = vperm.slane %v5136, %v5143
        %v5145 = vrot.slane %v4202, 4
        %v5146 = vsel %vm775, %v5145, %v4194
        %v5147 = vrot.slane %v4194, 4
        %v5148 = vsel %vm775, %v4202, %v5147
        %v5150 = vunpack.c.l.s4 1983009808
        %v5151 = vunpack.c.0.s8 %v5150
        %v5152 = vperm.slane %v5146, %v5151
        %v5154 = vunpack.c.l.s4 1983009808
        %v5155 = vunpack.c.0.s8 %v5154
        %v5156 = vperm.slane %v5148, %v5155
        %v5157 = vrot.slane %v4214, 4
        %v5158 = vsel %vm775, %v5157, %v4206
        %v5159 = vrot.slane %v4206, 4
        %v5160 = vsel %vm775, %v4214, %v5159
        %v5162 = vunpack.c.l.s4 1983009808
        %v5163 = vunpack.c.0.s8 %v5162
        %v5164 = vperm.slane %v5158, %v5163
        %v5166 = vunpack.c.l.s4 1983009808
        %v5167 = vunpack.c.0.s8 %v5166
        %v5168 = vperm.slane %v5160, %v5167
        %v5169 = vrot.slane %v4218, 4
        %v5170 = vsel %vm775, %v5169, %v4210
        %v5171 = vrot.slane %v4210, 4
        %v5172 = vsel %vm775, %v4218, %v5171
        %v5174 = vunpack.c.l.s4 1983009808
        %v5175 = vunpack.c.0.s8 %v5174
        %v5176 = vperm.slane %v5170, %v5175
        %v5178 = vunpack.c.l.s4 1983009808
        %v5179 = vunpack.c.0.s8 %v5178
        %v5180 = vperm.slane %v5172, %v5179
        %v5181 = vrot.slane %v5152, 4
        %v5182 = vsel %vm775, %v5181, %v5140
        %v5183 = vrot.slane %v5140, 4
        %v5184 = vsel %vm775, %v5152, %v5183
        %v5186 = vunpack.c.l.s4 1934713408
        %v5187 = vunpack.c.0.s8 %v5186
        %v5188 = vperm.slane %v5182, %v5187
        %v5190 = vunpack.c.l.s4 1934713408
        %v5191 = vunpack.c.0.s8 %v5190
        %v5192 = vperm.slane %v5184, %v5191
        %v5193 = vrot.slane %v5156, 4
        %v5194 = vsel %vm775, %v5193, %v5144
        %v5195 = vrot.slane %v5144, 4
        %v5196 = vsel %vm775, %v5156, %v5195
        %v5198 = vunpack.c.l.s4 1934713408
        %v5199 = vunpack.c.0.s8 %v5198
        %v5200 = vperm.slane %v5194, %v5199
        %v5202 = vunpack.c.l.s4 1934713408
        %v5203 = vunpack.c.0.s8 %v5202
        %v5204 = vperm.slane %v5196, %v5203
        %v5205 = vrot.slane %v5176, 4
        %v5206 = vsel %vm775, %v5205, %v5164
        %v5207 = vrot.slane %v5164, 4
        %v5208 = vsel %vm775, %v5176, %v5207
        %v5210 = vunpack.c.l.s4 1934713408
        %v5211 = vunpack.c.0.s8 %v5210
        %v5212 = vperm.slane %v5206, %v5211
        %v5214 = vunpack.c.l.s4 1934713408
        %v5215 = vunpack.c.0.s8 %v5214
        %v5216 = vperm.slane %v5208, %v5215
        %v5217 = vrot.slane %v5180, 4
        %v5218 = vsel %vm775, %v5217, %v5168
        %v5219 = vrot.slane %v5168, 4
        %v5220 = vsel %vm775, %v5180, %v5219
        %v5222 = vunpack.c.l.s4 1934713408
        %v5223 = vunpack.c.0.s8 %v5222
        %v5224 = vperm.slane %v5218, %v5223
        %v5226 = vunpack.c.l.s4 1934713408
        %v5227 = vunpack.c.0.s8 %v5226
        %v5228 = vperm.slane %v5220, %v5227
        %v5229 = vrot.slane %v5212, 4
        %v5230 = vsel %vm775, %v5229, %v5188
        %v5231 = vrot.slane %v5188, 4
        %v5232 = vsel %vm775, %v5212, %v5231
        %v5233 = vrot.slane %v5216, 4
        %v5234 = vsel %vm775, %v5233, %v5192
        %v5235 = vrot.slane %v5192, 4
        %v5236 = vsel %vm775, %v5216, %v5235
        %v5237 = vrot.slane %v5224, 4
        %v5238 = vsel %vm775, %v5237, %v5200
        %v5239 = vrot.slane %v5200, 4
        %v5240 = vsel %vm775, %v5224, %v5239
        %v5241 = vrot.slane %v5228, 4
        %v5242 = vsel %vm775, %v5241, %v5204
        %v5243 = vrot.slane %v5204, 4
        %v5244 = vsel %vm775, %v5228, %v5243
        %v5245 = vrot.slane %v3858, 4
        %v5246 = vsel %vm775, %v5245, %v3854
        %v5247 = vrot.slane %v3854, 4
        %v5248 = vsel %vm775, %v3858, %v5247
        %v5250 = vunpack.c.l.s4 1983009808
        %v5251 = vunpack.c.0.s8 %v5250
        %v5252 = vperm.slane %v5246, %v5251
        %v5254 = vunpack.c.l.s4 1983009808
        %v5255 = vunpack.c.0.s8 %v5254
        %v5256 = vperm.slane %v5248, %v5255
        %v5257 = vrot.slane %v3860, 4
        %v5258 = vsel %vm775, %v5257, %v3856
        %v5259 = vrot.slane %v3856, 4
        %v5260 = vsel %vm775, %v3860, %v5259
        %v5262 = vunpack.c.l.s4 1983009808
        %v5263 = vunpack.c.0.s8 %v5262
        %v5264 = vperm.slane %v5258, %v5263
        %v5266 = vunpack.c.l.s4 1983009808
        %v5267 = vunpack.c.0.s8 %v5266
        %v5268 = vperm.slane %v5260, %v5267
        %v5269 = vrot.slane %v3866, 4
        %v5270 = vsel %vm775, %v5269, %v3862
        %v5271 = vrot.slane %v3862, 4
        %v5272 = vsel %vm775, %v3866, %v5271
        %v5274 = vunpack.c.l.s4 1983009808
        %v5275 = vunpack.c.0.s8 %v5274
        %v5276 = vperm.slane %v5270, %v5275
        %v5278 = vunpack.c.l.s4 1983009808
        %v5279 = vunpack.c.0.s8 %v5278
        %v5280 = vperm.slane %v5272, %v5279
        %v5281 = vrot.slane %v3868, 4
        %v5282 = vsel %vm775, %v5281, %v3864
        %v5283 = vrot.slane %v3864, 4
        %v5284 = vsel %vm775, %v3868, %v5283
        %v5286 = vunpack.c.l.s4 1983009808
        %v5287 = vunpack.c.0.s8 %v5286
        %v5288 = vperm.slane %v5282, %v5287
        %v5290 = vunpack.c.l.s4 1983009808
        %v5291 = vunpack.c.0.s8 %v5290
        %v5292 = vperm.slane %v5284, %v5291
        %v5293 = vrot.slane %v5264, 4
        %v5294 = vsel %vm775, %v5293, %v5252
        %v5295 = vrot.slane %v5252, 4
        %v5296 = vsel %vm775, %v5264, %v5295
        %v5298 = vunpack.c.l.s4 1934713408
        %v5299 = vunpack.c.0.s8 %v5298
        %v5300 = vperm.slane %v5294, %v5299
        %v5302 = vunpack.c.l.s4 1934713408
        %v5303 = vunpack.c.0.s8 %v5302
        %v5304 = vperm.slane %v5296, %v5303
        %v5305 = vrot.slane %v5268, 4
        %v5306 = vsel %vm775, %v5305, %v5256
        %v5307 = vrot.slane %v5256, 4
        %v5308 = vsel %vm775, %v5268, %v5307
        %v5310 = vunpack.c.l.s4 1934713408
        %v5311 = vunpack.c.0.s8 %v5310
        %v5312 = vperm.slane %v5306, %v5311
        %v5314 = vunpack.c.l.s4 1934713408
        %v5315 = vunpack.c.0.s8 %v5314
        %v5316 = vperm.slane %v5308, %v5315
        %v5317 = vrot.slane %v5288, 4
        %v5318 = vsel %vm775, %v5317, %v5276
        %v5319 = vrot.slane %v5276, 4
        %v5320 = vsel %vm775, %v5288, %v5319
        %v5322 = vunpack.c.l.s4 1934713408
        %v5323 = vunpack.c.0.s8 %v5322
        %v5324 = vperm.slane %v5318, %v5323
        %v5326 = vunpack.c.l.s4 1934713408
        %v5327 = vunpack.c.0.s8 %v5326
        %v5328 = vperm.slane %v5320, %v5327
        %v5329 = vrot.slane %v5292, 4
        %v5330 = vsel %vm775, %v5329, %v5280
        %v5331 = vrot.slane %v5280, 4
        %v5332 = vsel %vm775, %v5292, %v5331
        %v5334 = vunpack.c.l.s4 1934713408
        %v5335 = vunpack.c.0.s8 %v5334
        %v5336 = vperm.slane %v5330, %v5335
        %v5338 = vunpack.c.l.s4 1934713408
        %v5339 = vunpack.c.0.s8 %v5338
        %v5340 = vperm.slane %v5332, %v5339
        %v5341 = vrot.slane %v5324, 4
        %v5342 = vsel %vm775, %v5341, %v5300
        %v5343 = vrot.slane %v5300, 4
        %v5344 = vsel %vm775, %v5324, %v5343
        %v5345 = vrot.slane %v5328, 4
        %v5346 = vsel %vm775, %v5345, %v5304
        %v5347 = vrot.slane %v5304, 4
        %v5348 = vsel %vm775, %v5328, %v5347
        %v5349 = vrot.slane %v5336, 4
        %v5350 = vsel %vm775, %v5349, %v5312
        %v5351 = vrot.slane %v5312, 4
        %v5352 = vsel %vm775, %v5336, %v5351
        %v5353 = vrot.slane %v5340, 4
        %v5354 = vsel %vm775, %v5353, %v5316
        %v5355 = vrot.slane %v5316, 4
        %v5356 = vsel %vm775, %v5340, %v5355
        %v5357 = vrot.slane %v3928, 4
        %v5358 = vsel %vm775, %v5357, %v3920
        %v5359 = vrot.slane %v3920, 4
        %v5360 = vsel %vm775, %v3928, %v5359
        %v5362 = vunpack.c.l.s4 1983009808
        %v5363 = vunpack.c.0.s8 %v5362
        %v5364 = vperm.slane %v5358, %v5363
        %v5366 = vunpack.c.l.s4 1983009808
        %v5367 = vunpack.c.0.s8 %v5366
        %v5368 = vperm.slane %v5360, %v5367
        %v5369 = vrot.slane %v3932, 4
        %v5370 = vsel %vm775, %v5369, %v3924
        %v5371 = vrot.slane %v3924, 4
        %v5372 = vsel %vm775, %v3932, %v5371
        %v5374 = vunpack.c.l.s4 1983009808
        %v5375 = vunpack.c.0.s8 %v5374
        %v5376 = vperm.slane %v5370, %v5375
        %v5378 = vunpack.c.l.s4 1983009808
        %v5379 = vunpack.c.0.s8 %v5378
        %v5380 = vperm.slane %v5372, %v5379
        %v5381 = vrot.slane %v3944, 4
        %v5382 = vsel %vm775, %v5381, %v3936
        %v5383 = vrot.slane %v3936, 4
        %v5384 = vsel %vm775, %v3944, %v5383
        %v5386 = vunpack.c.l.s4 1983009808
        %v5387 = vunpack.c.0.s8 %v5386
        %v5388 = vperm.slane %v5382, %v5387
        %v5390 = vunpack.c.l.s4 1983009808
        %v5391 = vunpack.c.0.s8 %v5390
        %v5392 = vperm.slane %v5384, %v5391
        %v5393 = vrot.slane %v3948, 4
        %v5394 = vsel %vm775, %v5393, %v3940
        %v5395 = vrot.slane %v3940, 4
        %v5396 = vsel %vm775, %v3948, %v5395
        %v5398 = vunpack.c.l.s4 1983009808
        %v5399 = vunpack.c.0.s8 %v5398
        %v5400 = vperm.slane %v5394, %v5399
        %v5402 = vunpack.c.l.s4 1983009808
        %v5403 = vunpack.c.0.s8 %v5402
        %v5404 = vperm.slane %v5396, %v5403
        %v5405 = vrot.slane %v5376, 4
        %v5406 = vsel %vm775, %v5405, %v5364
        %v5407 = vrot.slane %v5364, 4
        %v5408 = vsel %vm775, %v5376, %v5407
        %v5410 = vunpack.c.l.s4 1934713408
        %v5411 = vunpack.c.0.s8 %v5410
        %v5412 = vperm.slane %v5406, %v5411
        %v5414 = vunpack.c.l.s4 1934713408
        %v5415 = vunpack.c.0.s8 %v5414
        %v5416 = vperm.slane %v5408, %v5415
        %v5417 = vrot.slane %v5380, 4
        %v5418 = vsel %vm775, %v5417, %v5368
        %v5419 = vrot.slane %v5368, 4
        %v5420 = vsel %vm775, %v5380, %v5419
        %v5422 = vunpack.c.l.s4 1934713408
        %v5423 = vunpack.c.0.s8 %v5422
        %v5424 = vperm.slane %v5418, %v5423
        %v5426 = vunpack.c.l.s4 1934713408
        %v5427 = vunpack.c.0.s8 %v5426
        %v5428 = vperm.slane %v5420, %v5427
        %v5429 = vrot.slane %v5400, 4
        %v5430 = vsel %vm775, %v5429, %v5388
        %v5431 = vrot.slane %v5388, 4
        %v5432 = vsel %vm775, %v5400, %v5431
        %v5434 = vunpack.c.l.s4 1934713408
        %v5435 = vunpack.c.0.s8 %v5434
        %v5436 = vperm.slane %v5430, %v5435
        %v5438 = vunpack.c.l.s4 1934713408
        %v5439 = vunpack.c.0.s8 %v5438
        %v5440 = vperm.slane %v5432, %v5439
        %v5441 = vrot.slane %v5404, 4
        %v5442 = vsel %vm775, %v5441, %v5392
        %v5443 = vrot.slane %v5392, 4
        %v5444 = vsel %vm775, %v5404, %v5443
        %v5446 = vunpack.c.l.s4 1934713408
        %v5447 = vunpack.c.0.s8 %v5446
        %v5448 = vperm.slane %v5442, %v5447
        %v5450 = vunpack.c.l.s4 1934713408
        %v5451 = vunpack.c.0.s8 %v5450
        %v5452 = vperm.slane %v5444, %v5451
        %v5453 = vrot.slane %v5436, 4
        %v5454 = vsel %vm775, %v5453, %v5412
        %v5455 = vrot.slane %v5412, 4
        %v5456 = vsel %vm775, %v5436, %v5455
        %v5457 = vrot.slane %v5440, 4
        %v5458 = vsel %vm775, %v5457, %v5416
        %v5459 = vrot.slane %v5416, 4
        %v5460 = vsel %vm775, %v5440, %v5459
        %v5461 = vrot.slane %v5448, 4
        %v5462 = vsel %vm775, %v5461, %v5424
        %v5463 = vrot.slane %v5424, 4
        %v5464 = vsel %vm775, %v5448, %v5463
        %v5465 = vrot.slane %v5452, 4
        %v5466 = vsel %vm775, %v5465, %v5428
        %v5467 = vrot.slane %v5428, 4
        %v5468 = vsel %vm775, %v5452, %v5467
        %v5469 = vrot.slane %v3976, 4
        %v5470 = vsel %vm775, %v5469, %v3968
        %v5471 = vrot.slane %v3968, 4
        %v5472 = vsel %vm775, %v3976, %v5471
        %v5474 = vunpack.c.l.s4 1983009808
        %v5475 = vunpack.c.0.s8 %v5474
        %v5476 = vperm.slane %v5470, %v5475
        %v5478 = vunpack.c.l.s4 1983009808
        %v5479 = vunpack.c.0.s8 %v5478
        %v5480 = vperm.slane %v5472, %v5479
        %v5481 = vrot.slane %v3980, 4
        %v5482 = vsel %vm775, %v5481, %v3972
        %v5483 = vrot.slane %v3972, 4
        %v5484 = vsel %vm775, %v3980, %v5483
        %v5486 = vunpack.c.l.s4 1983009808
        %v5487 = vunpack.c.0.s8 %v5486
        %v5488 = vperm.slane %v5482, %v5487
        %v5490 = vunpack.c.l.s4 1983009808
        %v5491 = vunpack.c.0.s8 %v5490
        %v5492 = vperm.slane %v5484, %v5491
        %v5493 = vrot.slane %v3992, 4
        %v5494 = vsel %vm775, %v5493, %v3984
        %v5495 = vrot.slane %v3984, 4
        %v5496 = vsel %vm775, %v3992, %v5495
        %v5498 = vunpack.c.l.s4 1983009808
        %v5499 = vunpack.c.0.s8 %v5498
        %v5500 = vperm.slane %v5494, %v5499
        %v5502 = vunpack.c.l.s4 1983009808
        %v5503 = vunpack.c.0.s8 %v5502
        %v5504 = vperm.slane %v5496, %v5503
        %v5505 = vrot.slane %v3996, 4
        %v5506 = vsel %vm775, %v5505, %v3988
        %v5507 = vrot.slane %v3988, 4
        %v5508 = vsel %vm775, %v3996, %v5507
        %v5510 = vunpack.c.l.s4 1983009808
        %v5511 = vunpack.c.0.s8 %v5510
        %v5512 = vperm.slane %v5506, %v5511
        %v5514 = vunpack.c.l.s4 1983009808
        %v5515 = vunpack.c.0.s8 %v5514
        %v5516 = vperm.slane %v5508, %v5515
        %v5517 = vrot.slane %v5488, 4
        %v5518 = vsel %vm775, %v5517, %v5476
        %v5519 = vrot.slane %v5476, 4
        %v5520 = vsel %vm775, %v5488, %v5519
        %v5522 = vunpack.c.l.s4 1934713408
        %v5523 = vunpack.c.0.s8 %v5522
        %v5524 = vperm.slane %v5518, %v5523
        %v5526 = vunpack.c.l.s4 1934713408
        %v5527 = vunpack.c.0.s8 %v5526
        %v5528 = vperm.slane %v5520, %v5527
        %v5529 = vrot.slane %v5492, 4
        %v5530 = vsel %vm775, %v5529, %v5480
        %v5531 = vrot.slane %v5480, 4
        %v5532 = vsel %vm775, %v5492, %v5531
        %v5534 = vunpack.c.l.s4 1934713408
        %v5535 = vunpack.c.0.s8 %v5534
        %v5536 = vperm.slane %v5530, %v5535
        %v5538 = vunpack.c.l.s4 1934713408
        %v5539 = vunpack.c.0.s8 %v5538
        %v5540 = vperm.slane %v5532, %v5539
        %v5541 = vrot.slane %v5512, 4
        %v5542 = vsel %vm775, %v5541, %v5500
        %v5543 = vrot.slane %v5500, 4
        %v5544 = vsel %vm775, %v5512, %v5543
        %v5546 = vunpack.c.l.s4 1934713408
        %v5547 = vunpack.c.0.s8 %v5546
        %v5548 = vperm.slane %v5542, %v5547
        %v5550 = vunpack.c.l.s4 1934713408
        %v5551 = vunpack.c.0.s8 %v5550
        %v5552 = vperm.slane %v5544, %v5551
        %v5553 = vrot.slane %v5516, 4
        %v5554 = vsel %vm775, %v5553, %v5504
        %v5555 = vrot.slane %v5504, 4
        %v5556 = vsel %vm775, %v5516, %v5555
        %v5558 = vunpack.c.l.s4 1934713408
        %v5559 = vunpack.c.0.s8 %v5558
        %v5560 = vperm.slane %v5554, %v5559
        %v5562 = vunpack.c.l.s4 1934713408
        %v5563 = vunpack.c.0.s8 %v5562
        %v5564 = vperm.slane %v5556, %v5563
        %v5565 = vrot.slane %v5548, 4
        %v5566 = vsel %vm775, %v5565, %v5524
        %v5567 = vrot.slane %v5524, 4
        %v5568 = vsel %vm775, %v5548, %v5567
        %v5569 = vrot.slane %v5552, 4
        %v5570 = vsel %vm775, %v5569, %v5528
        %v5571 = vrot.slane %v5528, 4
        %v5572 = vsel %vm775, %v5552, %v5571
        %v5573 = vrot.slane %v5560, 4
        %v5574 = vsel %vm775, %v5573, %v5536
        %v5575 = vrot.slane %v5536, 4
        %v5576 = vsel %vm775, %v5560, %v5575
        %v5577 = vrot.slane %v5564, 4
        %v5578 = vsel %vm775, %v5577, %v5540
        %v5579 = vrot.slane %v5540, 4
        %v5580 = vsel %vm775, %v5564, %v5579
        %v5581 = vrot.slane %v3874, 4
        %v5582 = vsel %vm775, %v5581, %v3870
        %v5583 = vrot.slane %v3870, 4
        %v5584 = vsel %vm775, %v3874, %v5583
        %v5586 = vunpack.c.l.s4 1983009808
        %v5587 = vunpack.c.0.s8 %v5586
        %v5588 = vperm.slane %v5582, %v5587
        %v5590 = vunpack.c.l.s4 1983009808
        %v5591 = vunpack.c.0.s8 %v5590
        %v5592 = vperm.slane %v5584, %v5591
        %v5593 = vrot.slane %v3876, 4
        %v5594 = vsel %vm775, %v5593, %v3872
        %v5595 = vrot.slane %v3872, 4
        %v5596 = vsel %vm775, %v3876, %v5595
        %v5598 = vunpack.c.l.s4 1983009808
        %v5599 = vunpack.c.0.s8 %v5598
        %v5600 = vperm.slane %v5594, %v5599
        %v5602 = vunpack.c.l.s4 1983009808
        %v5603 = vunpack.c.0.s8 %v5602
        %v5604 = vperm.slane %v5596, %v5603
        %v5605 = vrot.slane %v3882, 4
        %v5606 = vsel %vm775, %v5605, %v3878
        %v5607 = vrot.slane %v3878, 4
        %v5608 = vsel %vm775, %v3882, %v5607
        %v5610 = vunpack.c.l.s4 1983009808
        %v5611 = vunpack.c.0.s8 %v5610
        %v5612 = vperm.slane %v5606, %v5611
        %v5614 = vunpack.c.l.s4 1983009808
        %v5615 = vunpack.c.0.s8 %v5614
        %v5616 = vperm.slane %v5608, %v5615
        %v5617 = vrot.slane %v3884, 4
        %v5618 = vsel %vm775, %v5617, %v3880
        %v5619 = vrot.slane %v3880, 4
        %v5620 = vsel %vm775, %v3884, %v5619
        %v5622 = vunpack.c.l.s4 1983009808
        %v5623 = vunpack.c.0.s8 %v5622
        %v5624 = vperm.slane %v5618, %v5623
        %v5626 = vunpack.c.l.s4 1983009808
        %v5627 = vunpack.c.0.s8 %v5626
        %v5628 = vperm.slane %v5620, %v5627
        %v5629 = vrot.slane %v5600, 4
        %v5630 = vsel %vm775, %v5629, %v5588
        %v5631 = vrot.slane %v5588, 4
        %v5632 = vsel %vm775, %v5600, %v5631
        %v5634 = vunpack.c.l.s4 1934713408
        %v5635 = vunpack.c.0.s8 %v5634
        %v5636 = vperm.slane %v5630, %v5635
        %v5638 = vunpack.c.l.s4 1934713408
        %v5639 = vunpack.c.0.s8 %v5638
        %v5640 = vperm.slane %v5632, %v5639
        %v5641 = vrot.slane %v5604, 4
        %v5642 = vsel %vm775, %v5641, %v5592
        %v5643 = vrot.slane %v5592, 4
        %v5644 = vsel %vm775, %v5604, %v5643
        %v5646 = vunpack.c.l.s4 1934713408
        %v5647 = vunpack.c.0.s8 %v5646
        %v5648 = vperm.slane %v5642, %v5647
        %v5650 = vunpack.c.l.s4 1934713408
        %v5651 = vunpack.c.0.s8 %v5650
        %v5652 = vperm.slane %v5644, %v5651
        %v5653 = vrot.slane %v5624, 4
        %v5654 = vsel %vm775, %v5653, %v5612
        %v5655 = vrot.slane %v5612, 4
        %v5656 = vsel %vm775, %v5624, %v5655
        %v5658 = vunpack.c.l.s4 1934713408
        %v5659 = vunpack.c.0.s8 %v5658
        %v5660 = vperm.slane %v5654, %v5659
        %v5662 = vunpack.c.l.s4 1934713408
        %v5663 = vunpack.c.0.s8 %v5662
        %v5664 = vperm.slane %v5656, %v5663
        %v5665 = vrot.slane %v5628, 4
        %v5666 = vsel %vm775, %v5665, %v5616
        %v5667 = vrot.slane %v5616, 4
        %v5668 = vsel %vm775, %v5628, %v5667
        %v5670 = vunpack.c.l.s4 1934713408
        %v5671 = vunpack.c.0.s8 %v5670
        %v5672 = vperm.slane %v5666, %v5671
        %v5674 = vunpack.c.l.s4 1934713408
        %v5675 = vunpack.c.0.s8 %v5674
        %v5676 = vperm.slane %v5668, %v5675
        %v5677 = vrot.slane %v5660, 4
        %v5678 = vsel %vm775, %v5677, %v5636
        %v5679 = vrot.slane %v5636, 4
        %v5680 = vsel %vm775, %v5660, %v5679
        %v5681 = vrot.slane %v5664, 4
        %v5682 = vsel %vm775, %v5681, %v5640
        %v5683 = vrot.slane %v5640, 4
        %v5684 = vsel %vm775, %v5664, %v5683
        %v5685 = vrot.slane %v5672, 4
        %v5686 = vsel %vm775, %v5685, %v5648
        %v5687 = vrot.slane %v5648, 4
        %v5688 = vsel %vm775, %v5672, %v5687
        %v5689 = vrot.slane %v5676, 4
        %v5690 = vsel %vm775, %v5689, %v5652
        %v5691 = vrot.slane %v5652, 4
        %v5692 = vsel %vm775, %v5676, %v5691
        %v5693 = vrot.slane %v4040, 4
        %v5694 = vsel %vm775, %v5693, %v4032
        %v5695 = vrot.slane %v4032, 4
        %v5696 = vsel %vm775, %v4040, %v5695
        %v5698 = vunpack.c.l.s4 1983009808
        %v5699 = vunpack.c.0.s8 %v5698
        %v5700 = vperm.slane %v5694, %v5699
        %v5702 = vunpack.c.l.s4 1983009808
        %v5703 = vunpack.c.0.s8 %v5702
        %v5704 = vperm.slane %v5696, %v5703
        %v5705 = vrot.slane %v4044, 4
        %v5706 = vsel %vm775, %v5705, %v4036
        %v5707 = vrot.slane %v4036, 4
        %v5708 = vsel %vm775, %v4044, %v5707
        %v5710 = vunpack.c.l.s4 1983009808
        %v5711 = vunpack.c.0.s8 %v5710
        %v5712 = vperm.slane %v5706, %v5711
        %v5714 = vunpack.c.l.s4 1983009808
        %v5715 = vunpack.c.0.s8 %v5714
        %v5716 = vperm.slane %v5708, %v5715
        %v5717 = vrot.slane %v4056, 4
        %v5718 = vsel %vm775, %v5717, %v4048
        %v5719 = vrot.slane %v4048, 4
        %v5720 = vsel %vm775, %v4056, %v5719
        %v5722 = vunpack.c.l.s4 1983009808
        %v5723 = vunpack.c.0.s8 %v5722
        %v5724 = vperm.slane %v5718, %v5723
        %v5726 = vunpack.c.l.s4 1983009808
        %v5727 = vunpack.c.0.s8 %v5726
        %v5728 = vperm.slane %v5720, %v5727
        %v5729 = vrot.slane %v4060, 4
        %v5730 = vsel %vm775, %v5729, %v4052
        %v5731 = vrot.slane %v4052, 4
        %v5732 = vsel %vm775, %v4060, %v5731
        %v5734 = vunpack.c.l.s4 1983009808
        %v5735 = vunpack.c.0.s8 %v5734
        %v5736 = vperm.slane %v5730, %v5735
        %v5738 = vunpack.c.l.s4 1983009808
        %v5739 = vunpack.c.0.s8 %v5738
        %v5740 = vperm.slane %v5732, %v5739
        %v5741 = vrot.slane %v5712, 4
        %v5742 = vsel %vm775, %v5741, %v5700
        %v5743 = vrot.slane %v5700, 4
        %v5744 = vsel %vm775, %v5712, %v5743
        %v5746 = vunpack.c.l.s4 1934713408
        %v5747 = vunpack.c.0.s8 %v5746
        %v5748 = vperm.slane %v5742, %v5747
        %v5750 = vunpack.c.l.s4 1934713408
        %v5751 = vunpack.c.0.s8 %v5750
        %v5752 = vperm.slane %v5744, %v5751
        %v5753 = vrot.slane %v5716, 4
        %v5754 = vsel %vm775, %v5753, %v5704
        %v5755 = vrot.slane %v5704, 4
        %v5756 = vsel %vm775, %v5716, %v5755
        %v5758 = vunpack.c.l.s4 1934713408
        %v5759 = vunpack.c.0.s8 %v5758
        %v5760 = vperm.slane %v5754, %v5759
        %v5762 = vunpack.c.l.s4 1934713408
        %v5763 = vunpack.c.0.s8 %v5762
        %v5764 = vperm.slane %v5756, %v5763
        %v5765 = vrot.slane %v5736, 4
        %v5766 = vsel %vm775, %v5765, %v5724
        %v5767 = vrot.slane %v5724, 4
        %v5768 = vsel %vm775, %v5736, %v5767
        %v5770 = vunpack.c.l.s4 1934713408
        %v5771 = vunpack.c.0.s8 %v5770
        %v5772 = vperm.slane %v5766, %v5771
        %v5774 = vunpack.c.l.s4 1934713408
        %v5775 = vunpack.c.0.s8 %v5774
        %v5776 = vperm.slane %v5768, %v5775
        %v5777 = vrot.slane %v5740, 4
        %v5778 = vsel %vm775, %v5777, %v5728
        %v5779 = vrot.slane %v5728, 4
        %v5780 = vsel %vm775, %v5740, %v5779
        %v5782 = vunpack.c.l.s4 1934713408
        %v5783 = vunpack.c.0.s8 %v5782
        %v5784 = vperm.slane %v5778, %v5783
        %v5786 = vunpack.c.l.s4 1934713408
        %v5787 = vunpack.c.0.s8 %v5786
        %v5788 = vperm.slane %v5780, %v5787
        %v5789 = vrot.slane %v5772, 4
        %v5790 = vsel %vm775, %v5789, %v5748
        %v5791 = vrot.slane %v5748, 4
        %v5792 = vsel %vm775, %v5772, %v5791
        %v5793 = vrot.slane %v5776, 4
        %v5794 = vsel %vm775, %v5793, %v5752
        %v5795 = vrot.slane %v5752, 4
        %v5796 = vsel %vm775, %v5776, %v5795
        %v5797 = vrot.slane %v5784, 4
        %v5798 = vsel %vm775, %v5797, %v5760
        %v5799 = vrot.slane %v5760, 4
        %v5800 = vsel %vm775, %v5784, %v5799
        %v5801 = vrot.slane %v5788, 4
        %v5802 = vsel %vm775, %v5801, %v5764
        %v5803 = vrot.slane %v5764, 4
        %v5804 = vsel %vm775, %v5788, %v5803
        %v5805 = vrot.slane %v4088, 4
        %v5806 = vsel %vm775, %v5805, %v4080
        %v5807 = vrot.slane %v4080, 4
        %v5808 = vsel %vm775, %v4088, %v5807
        %v5810 = vunpack.c.l.s4 1983009808
        %v5811 = vunpack.c.0.s8 %v5810
        %v5812 = vperm.slane %v5806, %v5811
        %v5814 = vunpack.c.l.s4 1983009808
        %v5815 = vunpack.c.0.s8 %v5814
        %v5816 = vperm.slane %v5808, %v5815
        %v5817 = vrot.slane %v4092, 4
        %v5818 = vsel %vm775, %v5817, %v4084
        %v5819 = vrot.slane %v4084, 4
        %v5820 = vsel %vm775, %v4092, %v5819
        %v5822 = vunpack.c.l.s4 1983009808
        %v5823 = vunpack.c.0.s8 %v5822
        %v5824 = vperm.slane %v5818, %v5823
        %v5826 = vunpack.c.l.s4 1983009808
        %v5827 = vunpack.c.0.s8 %v5826
        %v5828 = vperm.slane %v5820, %v5827
        %v5829 = vrot.slane %v4104, 4
        %v5830 = vsel %vm775, %v5829, %v4096
        %v5831 = vrot.slane %v4096, 4
        %v5832 = vsel %vm775, %v4104, %v5831
        %v5834 = vunpack.c.l.s4 1983009808
        %v5835 = vunpack.c.0.s8 %v5834
        %v5836 = vperm.slane %v5830, %v5835
        %v5838 = vunpack.c.l.s4 1983009808
        %v5839 = vunpack.c.0.s8 %v5838
        %v5840 = vperm.slane %v5832, %v5839
        %v5841 = vrot.slane %v4108, 4
        %v5842 = vsel %vm775, %v5841, %v4100
        %v5843 = vrot.slane %v4100, 4
        %v5844 = vsel %vm775, %v4108, %v5843
        %v5846 = vunpack.c.l.s4 1983009808
        %v5847 = vunpack.c.0.s8 %v5846
        %v5848 = vperm.slane %v5842, %v5847
        %v5850 = vunpack.c.l.s4 1983009808
        %v5851 = vunpack.c.0.s8 %v5850
        %v5852 = vperm.slane %v5844, %v5851
        %v5853 = vrot.slane %v5824, 4
        %v5854 = vsel %vm775, %v5853, %v5812
        %v5855 = vrot.slane %v5812, 4
        %v5856 = vsel %vm775, %v5824, %v5855
        %v5858 = vunpack.c.l.s4 1934713408
        %v5859 = vunpack.c.0.s8 %v5858
        %v5860 = vperm.slane %v5854, %v5859
        %v5862 = vunpack.c.l.s4 1934713408
        %v5863 = vunpack.c.0.s8 %v5862
        %v5864 = vperm.slane %v5856, %v5863
        %v5865 = vrot.slane %v5828, 4
        %v5866 = vsel %vm775, %v5865, %v5816
        %v5867 = vrot.slane %v5816, 4
        %v5868 = vsel %vm775, %v5828, %v5867
        %v5870 = vunpack.c.l.s4 1934713408
        %v5871 = vunpack.c.0.s8 %v5870
        %v5872 = vperm.slane %v5866, %v5871
        %v5874 = vunpack.c.l.s4 1934713408
        %v5875 = vunpack.c.0.s8 %v5874
        %v5876 = vperm.slane %v5868, %v5875
        %v5877 = vrot.slane %v5848, 4
        %v5878 = vsel %vm775, %v5877, %v5836
        %v5879 = vrot.slane %v5836, 4
        %v5880 = vsel %vm775, %v5848, %v5879
        %v5882 = vunpack.c.l.s4 1934713408
        %v5883 = vunpack.c.0.s8 %v5882
        %v5884 = vperm.slane %v5878, %v5883
        %v5886 = vunpack.c.l.s4 1934713408
        %v5887 = vunpack.c.0.s8 %v5886
        %v5888 = vperm.slane %v5880, %v5887
        %v5889 = vrot.slane %v5852, 4
        %v5890 = vsel %vm775, %v5889, %v5840
        %v5891 = vrot.slane %v5840, 4
        %v5892 = vsel %vm775, %v5852, %v5891
        %v5894 = vunpack.c.l.s4 1934713408
        %v5895 = vunpack.c.0.s8 %v5894
        %v5896 = vperm.slane %v5890, %v5895
        %v5898 = vunpack.c.l.s4 1934713408
        %v5899 = vunpack.c.0.s8 %v5898
        %v5900 = vperm.slane %v5892, %v5899
        %v5901 = vrot.slane %v5884, 4
        %v5902 = vsel %vm775, %v5901, %v5860
        %v5903 = vrot.slane %v5860, 4
        %v5904 = vsel %vm775, %v5884, %v5903
        %v5905 = vrot.slane %v5888, 4
        %v5906 = vsel %vm775, %v5905, %v5864
        %v5907 = vrot.slane %v5864, 4
        %v5908 = vsel %vm775, %v5888, %v5907
        %v5909 = vrot.slane %v5896, 4
        %v5910 = vsel %vm775, %v5909, %v5872
        %v5911 = vrot.slane %v5872, 4
        %v5912 = vsel %vm775, %v5896, %v5911
        %v5913 = vrot.slane %v5900, 4
        %v5914 = vsel %vm775, %v5913, %v5876
        %v5915 = vrot.slane %v5876, 4
        %v5916 = vsel %vm775, %v5900, %v5915
        %v5917 = vrot.slane %v3890, 4
        %v5918 = vsel %vm775, %v5917, %v3886
        %v5919 = vrot.slane %v3886, 4
        %v5920 = vsel %vm775, %v3890, %v5919
        %v5922 = vunpack.c.l.s4 1983009808
        %v5923 = vunpack.c.0.s8 %v5922
        %v5924 = vperm.slane %v5918, %v5923
        %v5926 = vunpack.c.l.s4 1983009808
        %v5927 = vunpack.c.0.s8 %v5926
        %v5928 = vperm.slane %v5920, %v5927
        %v5929 = vrot.slane %v3892, 4
        %v5930 = vsel %vm775, %v5929, %v3888
        %v5931 = vrot.slane %v3888, 4
        %v5932 = vsel %vm775, %v3892, %v5931
        %v5934 = vunpack.c.l.s4 1983009808
        %v5935 = vunpack.c.0.s8 %v5934
        %v5936 = vperm.slane %v5930, %v5935
        %v5938 = vunpack.c.l.s4 1983009808
        %v5939 = vunpack.c.0.s8 %v5938
        %v5940 = vperm.slane %v5932, %v5939
        %v5941 = vrot.slane %v3898, 4
        %v5942 = vsel %vm775, %v5941, %v3894
        %v5943 = vrot.slane %v3894, 4
        %v5944 = vsel %vm775, %v3898, %v5943
        %v5946 = vunpack.c.l.s4 1983009808
        %v5947 = vunpack.c.0.s8 %v5946
        %v5948 = vperm.slane %v5942, %v5947
        %v5950 = vunpack.c.l.s4 1983009808
        %v5951 = vunpack.c.0.s8 %v5950
        %v5952 = vperm.slane %v5944, %v5951
        %v5953 = vrot.slane %v3900, 4
        %v5954 = vsel %vm775, %v5953, %v3896
        %v5955 = vrot.slane %v3896, 4
        %v5956 = vsel %vm775, %v3900, %v5955
        %v5958 = vunpack.c.l.s4 1983009808
        %v5959 = vunpack.c.0.s8 %v5958
        %v5960 = vperm.slane %v5954, %v5959
        %v5962 = vunpack.c.l.s4 1983009808
        %v5963 = vunpack.c.0.s8 %v5962
        %v5964 = vperm.slane %v5956, %v5963
        %v5965 = vrot.slane %v5936, 4
        %v5966 = vsel %vm775, %v5965, %v5924
        %v5967 = vrot.slane %v5924, 4
        %v5968 = vsel %vm775, %v5936, %v5967
        %v5970 = vunpack.c.l.s4 1934713408
        %v5971 = vunpack.c.0.s8 %v5970
        %v5972 = vperm.slane %v5966, %v5971
        %v5974 = vunpack.c.l.s4 1934713408
        %v5975 = vunpack.c.0.s8 %v5974
        %v5976 = vperm.slane %v5968, %v5975
        %v5977 = vrot.slane %v5940, 4
        %v5978 = vsel %vm775, %v5977, %v5928
        %v5979 = vrot.slane %v5928, 4
        %v5980 = vsel %vm775, %v5940, %v5979
        %v5982 = vunpack.c.l.s4 1934713408
        %v5983 = vunpack.c.0.s8 %v5982
        %v5984 = vperm.slane %v5978, %v5983
        %v5986 = vunpack.c.l.s4 1934713408
        %v5987 = vunpack.c.0.s8 %v5986
        %v5988 = vperm.slane %v5980, %v5987
        %v5989 = vrot.slane %v5960, 4
        %v5990 = vsel %vm775, %v5989, %v5948
        %v5991 = vrot.slane %v5948, 4
        %v5992 = vsel %vm775, %v5960, %v5991
        %v5994 = vunpack.c.l.s4 1934713408
        %v5995 = vunpack.c.0.s8 %v5994
        %v5996 = vperm.slane %v5990, %v5995
        %v5998 = vunpack.c.l.s4 1934713408
        %v5999 = vunpack.c.0.s8 %v5998
        %v6000 = vperm.slane %v5992, %v5999
        %v6001 = vrot.slane %v5964, 4
        %v6002 = vsel %vm775, %v6001, %v5952
        %v6003 = vrot.slane %v5952, 4
        %v6004 = vsel %vm775, %v5964, %v6003
        %v6006 = vunpack.c.l.s4 1934713408
        %v6007 = vunpack.c.0.s8 %v6006
        %v6008 = vperm.slane %v6002, %v6007
        %v6010 = vunpack.c.l.s4 1934713408
        %v6011 = vunpack.c.0.s8 %v6010
        %v6012 = vperm.slane %v6004, %v6011
        %v6013 = vrot.slane %v5996, 4
        %v6014 = vsel %vm775, %v6013, %v5972
        %v6015 = vrot.slane %v5972, 4
        %v6016 = vsel %vm775, %v5996, %v6015
        %v6017 = vrot.slane %v6000, 4
        %v6018 = vsel %vm775, %v6017, %v5976
        %v6019 = vrot.slane %v5976, 4
        %v6020 = vsel %vm775, %v6000, %v6019
        %v6021 = vrot.slane %v6008, 4
        %v6022 = vsel %vm775, %v6021, %v5984
        %v6023 = vrot.slane %v5984, 4
        %v6024 = vsel %vm775, %v6008, %v6023
        %v6025 = vrot.slane %v6012, 4
        %v6026 = vsel %vm775, %v6025, %v5988
        %v6027 = vrot.slane %v5988, 4
        %v6028 = vsel %vm775, %v6012, %v6027
        %v6029 = vrot.slane %v4152, 4
        %v6030 = vsel %vm775, %v6029, %v4144
        %v6031 = vrot.slane %v4144, 4
        %v6032 = vsel %vm775, %v4152, %v6031
        %v6034 = vunpack.c.l.s4 1983009808
        %v6035 = vunpack.c.0.s8 %v6034
        %v6036 = vperm.slane %v6030, %v6035
        %v6038 = vunpack.c.l.s4 1983009808
        %v6039 = vunpack.c.0.s8 %v6038
        %v6040 = vperm.slane %v6032, %v6039
        %v6041 = vrot.slane %v4156, 4
        %v6042 = vsel %vm775, %v6041, %v4148
        %v6043 = vrot.slane %v4148, 4
        %v6044 = vsel %vm775, %v4156, %v6043
        %v6046 = vunpack.c.l.s4 1983009808
        %v6047 = vunpack.c.0.s8 %v6046
        %v6048 = vperm.slane %v6042, %v6047
        %v6050 = vunpack.c.l.s4 1983009808
        %v6051 = vunpack.c.0.s8 %v6050
        %v6052 = vperm.slane %v6044, %v6051
        %v6053 = vrot.slane %v4168, 4
        %v6054 = vsel %vm775, %v6053, %v4160
        %v6055 = vrot.slane %v4160, 4
        %v6056 = vsel %vm775, %v4168, %v6055
        %v6058 = vunpack.c.l.s4 1983009808
        %v6059 = vunpack.c.0.s8 %v6058
        %v6060 = vperm.slane %v6054, %v6059
        %v6062 = vunpack.c.l.s4 1983009808
        %v6063 = vunpack.c.0.s8 %v6062
        %v6064 = vperm.slane %v6056, %v6063
        %v6065 = vrot.slane %v4172, 4
        %v6066 = vsel %vm775, %v6065, %v4164
        %v6067 = vrot.slane %v4164, 4
        %v6068 = vsel %vm775, %v4172, %v6067
        %v6070 = vunpack.c.l.s4 1983009808
        %v6071 = vunpack.c.0.s8 %v6070
        %v6072 = vperm.slane %v6066, %v6071
        %v6074 = vunpack.c.l.s4 1983009808
        %v6075 = vunpack.c.0.s8 %v6074
        %v6076 = vperm.slane %v6068, %v6075
        %v6077 = vrot.slane %v6048, 4
        %v6078 = vsel %vm775, %v6077, %v6036
        %v6079 = vrot.slane %v6036, 4
        %v6080 = vsel %vm775, %v6048, %v6079
        %v6082 = vunpack.c.l.s4 1934713408
        %v6083 = vunpack.c.0.s8 %v6082
        %v6084 = vperm.slane %v6078, %v6083
        %v6086 = vunpack.c.l.s4 1934713408
        %v6087 = vunpack.c.0.s8 %v6086
        %v6088 = vperm.slane %v6080, %v6087
        %v6089 = vrot.slane %v6052, 4
        %v6090 = vsel %vm775, %v6089, %v6040
        %v6091 = vrot.slane %v6040, 4
        %v6092 = vsel %vm775, %v6052, %v6091
        %v6094 = vunpack.c.l.s4 1934713408
        %v6095 = vunpack.c.0.s8 %v6094
        %v6096 = vperm.slane %v6090, %v6095
        %v6098 = vunpack.c.l.s4 1934713408
        %v6099 = vunpack.c.0.s8 %v6098
        %v6100 = vperm.slane %v6092, %v6099
        %v6101 = vrot.slane %v6072, 4
        %v6102 = vsel %vm775, %v6101, %v6060
        %v6103 = vrot.slane %v6060, 4
        %v6104 = vsel %vm775, %v6072, %v6103
        %v6106 = vunpack.c.l.s4 1934713408
        %v6107 = vunpack.c.0.s8 %v6106
        %v6108 = vperm.slane %v6102, %v6107
        %v6110 = vunpack.c.l.s4 1934713408
        %v6111 = vunpack.c.0.s8 %v6110
        %v6112 = vperm.slane %v6104, %v6111
        %v6113 = vrot.slane %v6076, 4
        %v6114 = vsel %vm775, %v6113, %v6064
        %v6115 = vrot.slane %v6064, 4
        %v6116 = vsel %vm775, %v6076, %v6115
        %v6118 = vunpack.c.l.s4 1934713408
        %v6119 = vunpack.c.0.s8 %v6118
        %v6120 = vperm.slane %v6114, %v6119
        %v6122 = vunpack.c.l.s4 1934713408
        %v6123 = vunpack.c.0.s8 %v6122
        %v6124 = vperm.slane %v6116, %v6123
        %v6125 = vrot.slane %v6108, 4
        %v6126 = vsel %vm775, %v6125, %v6084
        %v6127 = vrot.slane %v6084, 4
        %v6128 = vsel %vm775, %v6108, %v6127
        %v6129 = vrot.slane %v6112, 4
        %v6130 = vsel %vm775, %v6129, %v6088
        %v6131 = vrot.slane %v6088, 4
        %v6132 = vsel %vm775, %v6112, %v6131
        %v6133 = vrot.slane %v6120, 4
        %v6134 = vsel %vm775, %v6133, %v6096
        %v6135 = vrot.slane %v6096, 4
        %v6136 = vsel %vm775, %v6120, %v6135
        %v6137 = vrot.slane %v6124, 4
        %v6138 = vsel %vm775, %v6137, %v6100
        %v6139 = vrot.slane %v6100, 4
        %v6140 = vsel %vm775, %v6124, %v6139
        %v6141 = vrot.slane %v4200, 4
        %v6142 = vsel %vm775, %v6141, %v4192
        %v6143 = vrot.slane %v4192, 4
        %v6144 = vsel %vm775, %v4200, %v6143
        %v6146 = vunpack.c.l.s4 1983009808
        %v6147 = vunpack.c.0.s8 %v6146
        %v6148 = vperm.slane %v6142, %v6147
        %v6150 = vunpack.c.l.s4 1983009808
        %v6151 = vunpack.c.0.s8 %v6150
        %v6152 = vperm.slane %v6144, %v6151
        %v6153 = vrot.slane %v4204, 4
        %v6154 = vsel %vm775, %v6153, %v4196
        %v6155 = vrot.slane %v4196, 4
        %v6156 = vsel %vm775, %v4204, %v6155
        %v6158 = vunpack.c.l.s4 1983009808
        %v6159 = vunpack.c.0.s8 %v6158
        %v6160 = vperm.slane %v6154, %v6159
        %v6162 = vunpack.c.l.s4 1983009808
        %v6163 = vunpack.c.0.s8 %v6162
        %v6164 = vperm.slane %v6156, %v6163
        %v6165 = vrot.slane %v4216, 4
        %v6166 = vsel %vm775, %v6165, %v4208
        %v6167 = vrot.slane %v4208, 4
        %v6168 = vsel %vm775, %v4216, %v6167
        %v6170 = vunpack.c.l.s4 1983009808
        %v6171 = vunpack.c.0.s8 %v6170
        %v6172 = vperm.slane %v6166, %v6171
        %v6174 = vunpack.c.l.s4 1983009808
        %v6175 = vunpack.c.0.s8 %v6174
        %v6176 = vperm.slane %v6168, %v6175
        %v6177 = vrot.slane %v4220, 4
        %v6178 = vsel %vm775, %v6177, %v4212
        %v6179 = vrot.slane %v4212, 4
        %v6180 = vsel %vm775, %v4220, %v6179
        %v6182 = vunpack.c.l.s4 1983009808
        %v6183 = vunpack.c.0.s8 %v6182
        %v6184 = vperm.slane %v6178, %v6183
        %v6186 = vunpack.c.l.s4 1983009808
        %v6187 = vunpack.c.0.s8 %v6186
        %v6188 = vperm.slane %v6180, %v6187
        %v6189 = vrot.slane %v6160, 4
        %v6190 = vsel %vm775, %v6189, %v6148
        %v6191 = vrot.slane %v6148, 4
        %v6192 = vsel %vm775, %v6160, %v6191
        %v6194 = vunpack.c.l.s4 1934713408
        %v6195 = vunpack.c.0.s8 %v6194
        %v6196 = vperm.slane %v6190, %v6195
        %v6198 = vunpack.c.l.s4 1934713408
        %v6199 = vunpack.c.0.s8 %v6198
        %v6200 = vperm.slane %v6192, %v6199
        %v6201 = vrot.slane %v6164, 4
        %v6202 = vsel %vm775, %v6201, %v6152
        %v6203 = vrot.slane %v6152, 4
        %v6204 = vsel %vm775, %v6164, %v6203
        %v6206 = vunpack.c.l.s4 1934713408
        %v6207 = vunpack.c.0.s8 %v6206
        %v6208 = vperm.slane %v6202, %v6207
        %v6210 = vunpack.c.l.s4 1934713408
        %v6211 = vunpack.c.0.s8 %v6210
        %v6212 = vperm.slane %v6204, %v6211
        %v6213 = vrot.slane %v6184, 4
        %v6214 = vsel %vm775, %v6213, %v6172
        %v6215 = vrot.slane %v6172, 4
        %v6216 = vsel %vm775, %v6184, %v6215
        %v6218 = vunpack.c.l.s4 1934713408
        %v6219 = vunpack.c.0.s8 %v6218
        %v6220 = vperm.slane %v6214, %v6219
        %v6222 = vunpack.c.l.s4 1934713408
        %v6223 = vunpack.c.0.s8 %v6222
        %v6224 = vperm.slane %v6216, %v6223
        %v6225 = vrot.slane %v6188, 4
        %v6226 = vsel %vm775, %v6225, %v6176
        %v6227 = vrot.slane %v6176, 4
        %v6228 = vsel %vm775, %v6188, %v6227
        %v6230 = vunpack.c.l.s4 1934713408
        %v6231 = vunpack.c.0.s8 %v6230
        %v6232 = vperm.slane %v6226, %v6231
        %v6234 = vunpack.c.l.s4 1934713408
        %v6235 = vunpack.c.0.s8 %v6234
        %v6236 = vperm.slane %v6228, %v6235
        %v6237 = vrot.slane %v6220, 4
        %v6238 = vsel %vm775, %v6237, %v6196
        %v6239 = vrot.slane %v6196, 4
        %v6240 = vsel %vm775, %v6220, %v6239
        %v6241 = vrot.slane %v6224, 4
        %v6242 = vsel %vm775, %v6241, %v6200
        %v6243 = vrot.slane %v6200, 4
        %v6244 = vsel %vm775, %v6224, %v6243
        %v6245 = vrot.slane %v6232, 4
        %v6246 = vsel %vm775, %v6245, %v6208
        %v6247 = vrot.slane %v6208, 4
        %v6248 = vsel %vm775, %v6232, %v6247
        %v6249 = vrot.slane %v6236, 4
        %v6250 = vsel %vm775, %v6249, %v6212
        %v6251 = vrot.slane %v6212, 4
        %v6252 = vsel %vm775, %v6236, %v6251
        %6262 = vrot.lane.b32.xlu0 %v4336, 16
        %v6263 = vpop.permute.xlu0 %6262
        %6264 = vrot.lane.b32.xlu0 %v4448, 16
        %v6265 = vpop.permute.xlu0 %6264
        %6266 = vrot.lane.b32.xlu0 %v4560, 16
        %v6267 = vpop.permute.xlu0 %6266
        %6268 = vrot.lane.b32.xlu0 %v4672, 16
        %v6269 = vpop.permute.xlu0 %6268
        %6270 = vrot.lane.b32.xlu0 %v4784, 16
        %v6271 = vpop.permute.xlu0 %6270
        %6272 = vrot.lane.b32.xlu0 %v4896, 16
        %v6273 = vpop.permute.xlu0 %6272
        %6274 = vrot.lane.b32.xlu0 %v5008, 16
        %v6275 = vpop.permute.xlu0 %6274
        %6276 = vrot.lane.b32.xlu0 %v5120, 16
        %v6277 = vpop.permute.xlu0 %6276
        %6278 = vrot.lane.b32.xlu0 %v5232, 16
        %v6279 = vpop.permute.xlu0 %6278
        %6298 = vrot.lane.b32.xlu0 %v4338, 32
        %v6299 = vpop.permute.xlu0 %6298
        %6300 = vrot.lane.b32.xlu0 %v4450, 32
        %v6301 = vpop.permute.xlu0 %6300
        %6302 = vrot.lane.b32.xlu0 %v4562, 32
        %v6303 = vpop.permute.xlu0 %6302
        %6304 = vrot.lane.b32.xlu0 %v4674, 32
        %v6305 = vpop.permute.xlu0 %6304
        %6306 = vrot.lane.b32.xlu0 %v4786, 32
        %v6307 = vpop.permute.xlu0 %6306
        %6308 = vrot.lane.b32.xlu0 %v4898, 32
        %v6309 = vpop.permute.xlu0 %6308
        %6310 = vrot.lane.b32.xlu0 %v5010, 32
        %v6311 = vpop.permute.xlu0 %6310
        %6312 = vrot.lane.b32.xlu0 %v5122, 32
        %v6313 = vpop.permute.xlu0 %6312
        %6314 = vrot.lane.b32.xlu0 %v5234, 32
        %v6315 = vpop.permute.xlu0 %6314
        %6334 = vrot.lane.b32.xlu0 %v4340, 48
        %v6335 = vpop.permute.xlu0 %6334
        %6336 = vrot.lane.b32.xlu0 %v4452, 48
        %v6337 = vpop.permute.xlu0 %6336
        %6338 = vrot.lane.b32.xlu0 %v4564, 48
        %v6339 = vpop.permute.xlu0 %6338
        %6340 = vrot.lane.b32.xlu0 %v4676, 48
        %v6341 = vpop.permute.xlu0 %6340
        %6342 = vrot.lane.b32.xlu0 %v4788, 48
        %v6343 = vpop.permute.xlu0 %6342
        %6344 = vrot.lane.b32.xlu0 %v4900, 48
        %v6345 = vpop.permute.xlu0 %6344
        %6346 = vrot.lane.b32.xlu0 %v5012, 48
        %v6347 = vpop.permute.xlu0 %6346
        %6348 = vrot.lane.b32.xlu0 %v5124, 48
        %v6349 = vpop.permute.xlu0 %6348
        %6350 = vrot.lane.b32.xlu0 %v5236, 48
        %v6351 = vpop.permute.xlu0 %6350
        %6370 = vrot.lane.b32.xlu0 %v4342, 64
        %v6371 = vpop.permute.xlu0 %6370
        %6372 = vrot.lane.b32.xlu0 %v4454, 64
        %v6373 = vpop.permute.xlu0 %6372
        %6374 = vrot.lane.b32.xlu0 %v4566, 64
        %v6375 = vpop.permute.xlu0 %6374
        %6376 = vrot.lane.b32.xlu0 %v4678, 64
        %v6377 = vpop.permute.xlu0 %6376
        %6378 = vrot.lane.b32.xlu0 %v4790, 64
        %v6379 = vpop.permute.xlu0 %6378
        %6380 = vrot.lane.b32.xlu0 %v4902, 64
        %v6381 = vpop.permute.xlu0 %6380
        %6382 = vrot.lane.b32.xlu0 %v5014, 64
        %v6383 = vpop.permute.xlu0 %6382
        %6384 = vrot.lane.b32.xlu0 %v5126, 64
        %v6385 = vpop.permute.xlu0 %6384
        %6386 = vrot.lane.b32.xlu0 %v5238, 64
        %v6387 = vpop.permute.xlu0 %6386
        %6406 = vrot.lane.b32.xlu0 %v4344, 80
        %v6407 = vpop.permute.xlu0 %6406
        %6408 = vrot.lane.b32.xlu0 %v4456, 80
        %v6409 = vpop.permute.xlu0 %6408
        %6410 = vrot.lane.b32.xlu0 %v4568, 80
        %v6411 = vpop.permute.xlu0 %6410
        %6412 = vrot.lane.b32.xlu0 %v4680, 80
        %v6413 = vpop.permute.xlu0 %6412
        %6414 = vrot.lane.b32.xlu0 %v4792, 80
        %v6415 = vpop.permute.xlu0 %6414
        %6416 = vrot.lane.b32.xlu0 %v4904, 80
        %v6417 = vpop.permute.xlu0 %6416
        %6418 = vrot.lane.b32.xlu0 %v5016, 80
        %v6419 = vpop.permute.xlu0 %6418
        %6420 = vrot.lane.b32.xlu0 %v5128, 80
        %v6421 = vpop.permute.xlu0 %6420
        %6422 = vrot.lane.b32.xlu0 %v5240, 80
        %v6423 = vpop.permute.xlu0 %6422
        %6442 = vrot.lane.b32.xlu0 %v4346, 96
        %v6443 = vpop.permute.xlu0 %6442
        %6444 = vrot.lane.b32.xlu0 %v4458, 96
        %v6445 = vpop.permute.xlu0 %6444
        %6446 = vrot.lane.b32.xlu0 %v4570, 96
        %v6447 = vpop.permute.xlu0 %6446
        %6448 = vrot.lane.b32.xlu0 %v4682, 96
        %v6449 = vpop.permute.xlu0 %6448
        %6450 = vrot.lane.b32.xlu0 %v4794, 96
        %v6451 = vpop.permute.xlu0 %6450
        %6452 = vrot.lane.b32.xlu0 %v4906, 96
        %v6453 = vpop.permute.xlu0 %6452
        %6454 = vrot.lane.b32.xlu0 %v5018, 96
        %v6455 = vpop.permute.xlu0 %6454
        %6456 = vrot.lane.b32.xlu0 %v5130, 96
        %v6457 = vpop.permute.xlu0 %6456
        %6458 = vrot.lane.b32.xlu0 %v5242, 96
        %v6459 = vpop.permute.xlu0 %6458
        %6478 = vrot.lane.b32.xlu0 %v4348, 112
        %v6479 = vpop.permute.xlu0 %6478
        %6480 = vrot.lane.b32.xlu0 %v4460, 112
        %v6481 = vpop.permute.xlu0 %6480
        %6482 = vrot.lane.b32.xlu0 %v4572, 112
        %v6483 = vpop.permute.xlu0 %6482
        %6484 = vrot.lane.b32.xlu0 %v4684, 112
        %v6485 = vpop.permute.xlu0 %6484
        %6486 = vrot.lane.b32.xlu0 %v4796, 112
        %v6487 = vpop.permute.xlu0 %6486
        %6488 = vrot.lane.b32.xlu0 %v4908, 112
        %v6489 = vpop.permute.xlu0 %6488
        %6490 = vrot.lane.b32.xlu0 %v5020, 112
        %v6491 = vpop.permute.xlu0 %6490
        %6492 = vrot.lane.b32.xlu0 %v5132, 112
        %v6493 = vpop.permute.xlu0 %6492
        %6494 = vrot.lane.b32.xlu0 %v5244, 112
        %v6495 = vpop.permute.xlu0 %6494
        %6514 = vrot.lane.b32.xlu0 %v5344, 16
        %v6515 = vpop.permute.xlu0 %6514
        %6516 = vrot.lane.b32.xlu0 %v5456, 16
        %v6517 = vpop.permute.xlu0 %6516
        %6518 = vrot.lane.b32.xlu0 %v5568, 16
        %v6519 = vpop.permute.xlu0 %6518
        %6520 = vrot.lane.b32.xlu0 %v5680, 16
        %v6521 = vpop.permute.xlu0 %6520
        %6522 = vrot.lane.b32.xlu0 %v5792, 16
        %v6523 = vpop.permute.xlu0 %6522
        %6524 = vrot.lane.b32.xlu0 %v5904, 16
        %v6525 = vpop.permute.xlu0 %6524
        %6526 = vrot.lane.b32.xlu0 %v6016, 16
        %v6527 = vpop.permute.xlu0 %6526
        %6528 = vrot.lane.b32.xlu0 %v6128, 16
        %v6529 = vpop.permute.xlu0 %6528
        %6530 = vrot.lane.b32.xlu0 %v6240, 16
        %v6531 = vpop.permute.xlu0 %6530
        %6550 = vrot.lane.b32.xlu0 %v5346, 32
        %v6551 = vpop.permute.xlu0 %6550
        %6552 = vrot.lane.b32.xlu0 %v5458, 32
        %v6553 = vpop.permute.xlu0 %6552
        %6554 = vrot.lane.b32.xlu0 %v5570, 32
        %v6555 = vpop.permute.xlu0 %6554
        %6556 = vrot.lane.b32.xlu0 %v5682, 32
        %v6557 = vpop.permute.xlu0 %6556
        %6558 = vrot.lane.b32.xlu0 %v5794, 32
        %v6559 = vpop.permute.xlu0 %6558
        %6560 = vrot.lane.b32.xlu0 %v5906, 32
        %v6561 = vpop.permute.xlu0 %6560
        %6562 = vrot.lane.b32.xlu0 %v6018, 32
        %v6563 = vpop.permute.xlu0 %6562
        %6564 = vrot.lane.b32.xlu0 %v6130, 32
        %v6565 = vpop.permute.xlu0 %6564
        %6566 = vrot.lane.b32.xlu0 %v6242, 32
        %v6567 = vpop.permute.xlu0 %6566
        %6586 = vrot.lane.b32.xlu0 %v5348, 48
        %v6587 = vpop.permute.xlu0 %6586
        %6588 = vrot.lane.b32.xlu0 %v5460, 48
        %v6589 = vpop.permute.xlu0 %6588
        %6590 = vrot.lane.b32.xlu0 %v5572, 48
        %v6591 = vpop.permute.xlu0 %6590
        %6592 = vrot.lane.b32.xlu0 %v5684, 48
        %v6593 = vpop.permute.xlu0 %6592
        %6594 = vrot.lane.b32.xlu0 %v5796, 48
        %v6595 = vpop.permute.xlu0 %6594
        %6596 = vrot.lane.b32.xlu0 %v5908, 48
        %v6597 = vpop.permute.xlu0 %6596
        %6598 = vrot.lane.b32.xlu0 %v6020, 48
        %v6599 = vpop.permute.xlu0 %6598
        %6600 = vrot.lane.b32.xlu0 %v6132, 48
        %v6601 = vpop.permute.xlu0 %6600
        %6602 = vrot.lane.b32.xlu0 %v6244, 48
        %v6603 = vpop.permute.xlu0 %6602
        %6622 = vrot.lane.b32.xlu0 %v5350, 64
        %v6623 = vpop.permute.xlu0 %6622
        %6624 = vrot.lane.b32.xlu0 %v5462, 64
        %v6625 = vpop.permute.xlu0 %6624
        %6626 = vrot.lane.b32.xlu0 %v5574, 64
        %v6627 = vpop.permute.xlu0 %6626
        %6628 = vrot.lane.b32.xlu0 %v5686, 64
        %v6629 = vpop.permute.xlu0 %6628
        %6630 = vrot.lane.b32.xlu0 %v5798, 64
        %v6631 = vpop.permute.xlu0 %6630
        %6632 = vrot.lane.b32.xlu0 %v5910, 64
        %v6633 = vpop.permute.xlu0 %6632
        %6634 = vrot.lane.b32.xlu0 %v6022, 64
        %v6635 = vpop.permute.xlu0 %6634
        %6636 = vrot.lane.b32.xlu0 %v6134, 64
        %v6637 = vpop.permute.xlu0 %6636
        %6638 = vrot.lane.b32.xlu0 %v6246, 64
        %v6639 = vpop.permute.xlu0 %6638
        %6658 = vrot.lane.b32.xlu0 %v5352, 80
        %v6659 = vpop.permute.xlu0 %6658
        %6660 = vrot.lane.b32.xlu0 %v5464, 80
        %v6661 = vpop.permute.xlu0 %6660
        %6662 = vrot.lane.b32.xlu0 %v5576, 80
        %v6663 = vpop.permute.xlu0 %6662
        %6664 = vrot.lane.b32.xlu0 %v5688, 80
        %v6665 = vpop.permute.xlu0 %6664
        %6666 = vrot.lane.b32.xlu0 %v5800, 80
        %v6667 = vpop.permute.xlu0 %6666
        %6668 = vrot.lane.b32.xlu0 %v5912, 80
        %v6669 = vpop.permute.xlu0 %6668
        %6670 = vrot.lane.b32.xlu0 %v6024, 80
        %v6671 = vpop.permute.xlu0 %6670
        %6672 = vrot.lane.b32.xlu0 %v6136, 80
        %v6673 = vpop.permute.xlu0 %6672
        %6674 = vrot.lane.b32.xlu0 %v6248, 80
        %v6675 = vpop.permute.xlu0 %6674
        %6694 = vrot.lane.b32.xlu0 %v5354, 96
        %v6695 = vpop.permute.xlu0 %6694
        %6696 = vrot.lane.b32.xlu0 %v5466, 96
        %v6697 = vpop.permute.xlu0 %6696
        %6698 = vrot.lane.b32.xlu0 %v5578, 96
        %v6699 = vpop.permute.xlu0 %6698
        %6700 = vrot.lane.b32.xlu0 %v5690, 96
        %v6701 = vpop.permute.xlu0 %6700
        %6702 = vrot.lane.b32.xlu0 %v5802, 96
        %v6703 = vpop.permute.xlu0 %6702
        %6704 = vrot.lane.b32.xlu0 %v5914, 96
        %v6705 = vpop.permute.xlu0 %6704
        %6706 = vrot.lane.b32.xlu0 %v6026, 96
        %v6707 = vpop.permute.xlu0 %6706
        %6708 = vrot.lane.b32.xlu0 %v6138, 96
        %v6709 = vpop.permute.xlu0 %6708
        %6710 = vrot.lane.b32.xlu0 %v6250, 96
        %v6711 = vpop.permute.xlu0 %6710
        %6730 = vrot.lane.b32.xlu0 %v5356, 112
        %v6731 = vpop.permute.xlu0 %6730
        %6732 = vrot.lane.b32.xlu0 %v5468, 112
        %v6733 = vpop.permute.xlu0 %6732
        %6734 = vrot.lane.b32.xlu0 %v5580, 112
        %v6735 = vpop.permute.xlu0 %6734
        %6736 = vrot.lane.b32.xlu0 %v5692, 112
        %v6737 = vpop.permute.xlu0 %6736
        %6738 = vrot.lane.b32.xlu0 %v5804, 112
        %v6739 = vpop.permute.xlu0 %6738
        %6740 = vrot.lane.b32.xlu0 %v5916, 112
        %v6741 = vpop.permute.xlu0 %6740
        %6742 = vrot.lane.b32.xlu0 %v6028, 112
        %v6743 = vpop.permute.xlu0 %6742
        %6744 = vrot.lane.b32.xlu0 %v6140, 112
        %v6745 = vpop.permute.xlu0 %6744
        %6746 = vrot.lane.b32.xlu0 %v6252, 112
        %v6747 = vpop.permute.xlu0 %6746
        %v6757 = vsel %vm3295, %v4334, %v6263
        %v6758 = vsel %vm3295, %v4446, %v6265
        %v6759 = vsel %vm3295, %v4558, %v6267
        %v6760 = vsel %vm3295, %v4670, %v6269
        %v6761 = vsel %vm3295, %v4782, %v6271
        %v6762 = vsel %vm3295, %v4894, %v6273
        %v6763 = vsel %vm3295, %v5006, %v6275
        %v6764 = vsel %vm3295, %v5118, %v6277
        %v6765 = vsel %vm3295, %v5230, %v6279
        %v6766 = vsel %vm3305, %v6757, %v6299
        %v6767 = vsel %vm3305, %v6758, %v6301
        %v6768 = vsel %vm3305, %v6759, %v6303
        %v6769 = vsel %vm3305, %v6760, %v6305
        %v6770 = vsel %vm3305, %v6761, %v6307
        %v6771 = vsel %vm3305, %v6762, %v6309
        %v6772 = vsel %vm3305, %v6763, %v6311
        %v6773 = vsel %vm3305, %v6764, %v6313
        %v6774 = vsel %vm3305, %v6765, %v6315
        %v6775 = vsel %vm3315, %v6766, %v6335
        %v6776 = vsel %vm3315, %v6767, %v6337
        %v6777 = vsel %vm3315, %v6768, %v6339
        %v6778 = vsel %vm3315, %v6769, %v6341
        %v6779 = vsel %vm3315, %v6770, %v6343
        %v6780 = vsel %vm3315, %v6771, %v6345
        %v6781 = vsel %vm3315, %v6772, %v6347
        %v6782 = vsel %vm3315, %v6773, %v6349
        %v6783 = vsel %vm3315, %v6774, %v6351
        %v6784 = vsel %vm3325, %v6775, %v6371
        %v6785 = vsel %vm3325, %v6776, %v6373
        %v6786 = vsel %vm3325, %v6777, %v6375
        %v6787 = vsel %vm3325, %v6778, %v6377
        %v6788 = vsel %vm3325, %v6779, %v6379
        %v6789 = vsel %vm3325, %v6780, %v6381
        %v6790 = vsel %vm3325, %v6781, %v6383
        %v6791 = vsel %vm3325, %v6782, %v6385
        %v6792 = vsel %vm3325, %v6783, %v6387
        %v6793 = vsel %vm3335, %v6784, %v6407
        %v6794 = vsel %vm3335, %v6785, %v6409
        %v6795 = vsel %vm3335, %v6786, %v6411
        %v6796 = vsel %vm3335, %v6787, %v6413
        %v6797 = vsel %vm3335, %v6788, %v6415
        %v6798 = vsel %vm3335, %v6789, %v6417
        %v6799 = vsel %vm3335, %v6790, %v6419
        %v6800 = vsel %vm3335, %v6791, %v6421
        %v6801 = vsel %vm3335, %v6792, %v6423
        %v6802 = vsel %vm3345, %v6793, %v6443
        %v6803 = vsel %vm3345, %v6794, %v6445
        %v6804 = vsel %vm3345, %v6795, %v6447
        %v6805 = vsel %vm3345, %v6796, %v6449
        %v6806 = vsel %vm3345, %v6797, %v6451
        %v6807 = vsel %vm3345, %v6798, %v6453
        %v6808 = vsel %vm3345, %v6799, %v6455
        %v6809 = vsel %vm3345, %v6800, %v6457
        %v6810 = vsel %vm3345, %v6801, %v6459
        %v6811 = vsel %vm3355, %v6802, %v6479
        %v6812 = vsel %vm3355, %v6803, %v6481
        %v6813 = vsel %vm3355, %v6804, %v6483
        %v6814 = vsel %vm3355, %v6805, %v6485
        %v6815 = vsel %vm3355, %v6806, %v6487
        %v6816 = vsel %vm3355, %v6807, %v6489
        %v6817 = vsel %vm3355, %v6808, %v6491
        %v6818 = vsel %vm3355, %v6809, %v6493
        %v6819 = vsel %vm3355, %v6810, %v6495
        %v6820 = vsel %vm3295, %v5342, %v6515
        %v6821 = vsel %vm3295, %v5454, %v6517
        %v6822 = vsel %vm3295, %v5566, %v6519
        %v6823 = vsel %vm3295, %v5678, %v6521
        %v6824 = vsel %vm3295, %v5790, %v6523
        %v6825 = vsel %vm3295, %v5902, %v6525
        %v6826 = vsel %vm3295, %v6014, %v6527
        %v6827 = vsel %vm3295, %v6126, %v6529
        %v6828 = vsel %vm3295, %v6238, %v6531
        %v6829 = vsel %vm3305, %v6820, %v6551
        %v6830 = vsel %vm3305, %v6821, %v6553
        %v6831 = vsel %vm3305, %v6822, %v6555
        %v6832 = vsel %vm3305, %v6823, %v6557
        %v6833 = vsel %vm3305, %v6824, %v6559
        %v6834 = vsel %vm3305, %v6825, %v6561
        %v6835 = vsel %vm3305, %v6826, %v6563
        %v6836 = vsel %vm3305, %v6827, %v6565
        %v6837 = vsel %vm3305, %v6828, %v6567
        %v6838 = vsel %vm3315, %v6829, %v6587
        %v6839 = vsel %vm3315, %v6830, %v6589
        %v6840 = vsel %vm3315, %v6831, %v6591
        %v6841 = vsel %vm3315, %v6832, %v6593
        %v6842 = vsel %vm3315, %v6833, %v6595
        %v6843 = vsel %vm3315, %v6834, %v6597
        %v6844 = vsel %vm3315, %v6835, %v6599
        %v6845 = vsel %vm3315, %v6836, %v6601
        %v6846 = vsel %vm3315, %v6837, %v6603
        %v6847 = vsel %vm3325, %v6838, %v6623
        %v6848 = vsel %vm3325, %v6839, %v6625
        %v6849 = vsel %vm3325, %v6840, %v6627
        %v6850 = vsel %vm3325, %v6841, %v6629
        %v6851 = vsel %vm3325, %v6842, %v6631
        %v6852 = vsel %vm3325, %v6843, %v6633
        %v6853 = vsel %vm3325, %v6844, %v6635
        %v6854 = vsel %vm3325, %v6845, %v6637
        %v6855 = vsel %vm3325, %v6846, %v6639
        %v6856 = vsel %vm3335, %v6847, %v6659
        %v6857 = vsel %vm3335, %v6848, %v6661
        %v6858 = vsel %vm3335, %v6849, %v6663
        %v6859 = vsel %vm3335, %v6850, %v6665
        %v6860 = vsel %vm3335, %v6851, %v6667
        %v6861 = vsel %vm3335, %v6852, %v6669
        %v6862 = vsel %vm3335, %v6853, %v6671
        %v6863 = vsel %vm3335, %v6854, %v6673
        %v6864 = vsel %vm3335, %v6855, %v6675
        %v6865 = vsel %vm3345, %v6856, %v6695
        %v6866 = vsel %vm3345, %v6857, %v6697
        %v6867 = vsel %vm3345, %v6858, %v6699
        %v6868 = vsel %vm3345, %v6859, %v6701
        %v6869 = vsel %vm3345, %v6860, %v6703
        %v6870 = vsel %vm3345, %v6861, %v6705
        %v6871 = vsel %vm3345, %v6862, %v6707
        %v6872 = vsel %vm3345, %v6863, %v6709
        %v6873 = vsel %vm3345, %v6864, %v6711
        %v6874 = vsel %vm3355, %v6865, %v6731
        %v6875 = vsel %vm3355, %v6866, %v6733
        %v6876 = vsel %vm3355, %v6867, %v6735
        %v6877 = vsel %vm3355, %v6868, %v6737
        %v6878 = vsel %vm3355, %v6869, %v6739
        %v6879 = vsel %vm3355, %v6870, %v6741
        %v6880 = vsel %vm3355, %v6871, %v6743
        %v6881 = vsel %vm3355, %v6872, %v6745
        %v6882 = vsel %vm3355, %v6873, %v6747
        %v6883 = vld [vmem:[%s3] sm:$0xff]
        %v6884 = vld [vmem:[%s4] sm:$0xff]
        %6886 = vset.pattern.permute.xlu0 0
        %6887 = vperm.xlu0 %6886, %v6884
        %v6888 = vpop.permute.xlu0 %6887
        %v6891 = vsel %vm3435, %v6883, 0
        %6893 = vmatpush.msra.mxu0 0.0
        %6894 = vmatpush.msra.mxu0 0.0
        %6895 = vmatpush.msra.mxu0 0.0
        %6896 = vmatpush.msra.mxu0 0.0
        %6897 = vmatpush.msra.mxu0 0.0
        %6898 = vmatpush.msra.mxu0 0.0
        %6899 = vmatpush.msra.mxu0 0.0
        %6900 = vmatpush.msra.mxu0 %v6819
        %6901 = vmatpush.msra.mxu0 %v6818
        %6902 = vmatpush.msra.mxu0 %v6817
        %6903 = vmatpush.msra.mxu0 %v6816
        %6904 = vmatpush.msra.mxu0 %v6815
        %6905 = vmatpush.msra.mxu0 %v6814
        %6906 = vmatpush.msra.mxu0 %v6813
        %6907 = vmatpush.msra.mxu0 %v6812
        %6908 = vmatpush.msra.mxu0 %v6811
        %6909 = vmatmul.f32.gmra.mxu0 %v6891
        %v6910 = vpop.f32.mrf.mxu0
        %v6911 = vadd.f32 %v6888, %v6910
        %6912 = vdwg.mxu0
        %6913 = vmatpush.msra.mxu0 0.0
        %6914 = vmatpush.msra.mxu0 0.0
        %6915 = vmatpush.msra.mxu0 0.0
        %6916 = vmatpush.msra.mxu0 0.0
        %6917 = vmatpush.msra.mxu0 0.0
        %6918 = vmatpush.msra.mxu0 0.0
        %6919 = vmatpush.msra.mxu0 0.0
        %6920 = vmatpush.msra.mxu0 %v6882
        %6921 = vmatpush.msra.mxu0 %v6881
        %6922 = vmatpush.msra.mxu0 %v6880
        %6923 = vmatpush.msra.mxu0 %v6879
        %6924 = vmatpush.msra.mxu0 %v6878
        %6925 = vmatpush.msra.mxu0 %v6877
        %6926 = vmatpush.msra.mxu0 %v6876
        %6927 = vmatpush.msra.mxu0 %v6875
        %6928 = vmatpush.msra.mxu0 %v6874
        %6929 = vmatmul.f32.gmra.mxu0 %v6891
        %v6930 = vpop.f32.mrf.mxu0
        %v6931 = vadd.f32 %v6888, %v6930
        %6932 = vdwg.mxu0
        %v6933 = vadd.f32 %v3479, %v6911
        %v6934 = vadd.f32 %v3480, %v6931
        %v6935 = vmax.f32 %v6933, 0.0
        %v6936 = vmax.f32 %v6934, 0.0
        %v6939 = vrot.slane %v6936, 4
        %vm6940 = vcmask 1043456
        %v6941 = vsel %vm6940, %v6935, %v6939
        %v6942 = vsel %vm6940, %v6939, %v6935
        %v6943 = vrot.slane %v6942, 4
        %v6947 = vunpack.c.l.s4 1935823168
        %v6948 = vunpack.c.0.s8 %v6947
        %v6949 = vperm.slane %v6941, %v6948
        %v6951 = vunpack.c.l.s4 1935823168
        %v6952 = vunpack.c.0.s8 %v6951
        %v6953 = vperm.slane %v6943, %v6952
        %v6954 = vld [vmem:[#allocation7] sm:$0xff]
        %v6955 = vld [vmem:[#allocation7 + $0x8] sm:$0xff]
        %v6956 = vld [vmem:[#allocation7 + $0x10] sm:$0xff]
        %v6957 = vld [vmem:[#allocation7 + $0x18] sm:$0xff]
        %v6958 = vld [vmem:[#allocation7 + $0x20] sm:$0xff]
        %v6959 = vld [vmem:[#allocation7 + $0x28] sm:$0xff]
        %v6960 = vld [vmem:[#allocation7 + $0x30] sm:$0xff]
        %v6961 = vld [vmem:[#allocation7 + $0x38] sm:$0xff]
        %v6962 = vld [vmem:[#allocation7 + $0x40] sm:$0xff]
        %v6963 = vld [vmem:[#allocation7 + $0x48] sm:$0xff]
        %v6964 = vld [vmem:[#allocation7 + $0x50] sm:$0xff]
        %v6965 = vld [vmem:[#allocation7 + $0x58] sm:$0xff]
        %v6966 = vld [vmem:[#allocation7 + $0x60] sm:$0xff]
        %v6967 = vld [vmem:[#allocation7 + $0x68] sm:$0xff]
        %v6968 = vld [vmem:[#allocation7 + $0x70] sm:$0xff]
        %v6969 = vld [vmem:[#allocation7 + $0x78] sm:$0xff]
        %v6970 = vld [vmem:[#allocation7 + $0x80] sm:$0x3]
        %v6971 = vld [vmem:[#allocation7 + $0x88] sm:$0x3]
        %v6972 = vld [vmem:[#allocation7 + $0x90] sm:$0x3]
        %v6973 = vld [vmem:[#allocation7 + $0x98] sm:$0x3]
        %v6974 = vld [vmem:[#allocation7 + $0xa0] sm:$0x3]
        %v6975 = vld [vmem:[#allocation7 + $0xa8] sm:$0x3]
        %v6976 = vld [vmem:[#allocation7 + $0xb0] sm:$0x3]
        %v6977 = vld [vmem:[#allocation7 + $0xb8] sm:$0x3]
        %v6978 = vld [vmem:[#allocation7 + $0xc0] sm:$0x3]
        %v6979 = vld [vmem:[#allocation7 + $0xc8] sm:$0x3]
        %v6980 = vld [vmem:[#allocation7 + $0xd0] sm:$0x3]
        %v6981 = vld [vmem:[#allocation7 + $0xd8] sm:$0x3]
        %v6982 = vld [vmem:[#allocation7 + $0xe0] sm:$0x3]
        %v6983 = vld [vmem:[#allocation7 + $0xe8] sm:$0x3]
        %v6984 = vld [vmem:[#allocation7 + $0xf0] sm:$0x3]
        %v6985 = vld [vmem:[#allocation7 + $0xf8] sm:$0x3]
        %v6986 = vld [vmem:[%s6] sm:$0x1]
        %v6989 = vperm.slane %v6949, 0
        %v6990 = vperm.slane %v6949, 1
        %v6991 = vperm.slane %v6949, 2
        %v6992 = vperm.slane %v6949, 3
        %v6993 = vperm.slane %v6949, 4
        %v6994 = vperm.slane %v6949, 5
        %v6995 = vperm.slane %v6949, 6
        %v6996 = vperm.slane %v6949, 7
        %v6997 = vperm.slane %v6953, 0
        %v6998 = vperm.slane %v6953, 1
        %v6999 = vperm.slane %v6953, 2
        %v7000 = vperm.slane %v6953, 3
        %v7001 = vperm.slane %v6953, 4
        %v7002 = vperm.slane %v6953, 5
        %v7003 = vperm.slane %v6953, 6
        %v7004 = vperm.slane %v6953, 7
        %7021 = vmatpush.xpose.msra.mxu0 0.0
        %7022 = vmatpush.xpose.msra.mxu0 0.0
        %7023 = vmatpush.xpose.msra.mxu0 0.0
        %7024 = vmatpush.xpose.msra.mxu0 0.0
        %7025 = vmatpush.xpose.msra.mxu0 0.0
        %7026 = vmatpush.xpose.msra.mxu0 0.0
        %7027 = vmatpush.xpose.msra.mxu0 0.0
        %7028 = vmatpush.xpose.msra.mxu0 0.0
        %7029 = vmatpush.xpose.msra.mxu0 0.0
        %7030 = vmatpush.xpose.msra.mxu0 0.0
        %7031 = vmatpush.xpose.msra.mxu0 0.0
        %7032 = vmatpush.xpose.msra.mxu0 0.0
        %7033 = vmatpush.xpose.msra.mxu0 0.0
        %7034 = vmatpush.xpose.msra.mxu0 0.0
        %7035 = vmatpush.xpose.msra.mxu0 %v6970
        %7036 = vmatpush.xpose.msra.mxu0 %v6954
        %7037 = vmatmul.f32.gmra.mxu0 %v6989
        %v7038 = vpop.f32.mrf.mxu0
        %v7039 = vadd.f32 %v6986, %v7038
        %7040 = vdwg.mxu0
        %7041 = vmatpush.xpose.msra.mxu0 0.0
        %7042 = vmatpush.xpose.msra.mxu0 0.0
        %7043 = vmatpush.xpose.msra.mxu0 0.0
        %7044 = vmatpush.xpose.msra.mxu0 0.0
        %7045 = vmatpush.xpose.msra.mxu0 0.0
        %7046 = vmatpush.xpose.msra.mxu0 0.0
        %7047 = vmatpush.xpose.msra.mxu0 0.0
        %7048 = vmatpush.xpose.msra.mxu0 0.0
        %7049 = vmatpush.xpose.msra.mxu0 0.0
        %7050 = vmatpush.xpose.msra.mxu0 0.0
        %7051 = vmatpush.xpose.msra.mxu0 0.0
        %7052 = vmatpush.xpose.msra.mxu0 0.0
        %7053 = vmatpush.xpose.msra.mxu0 0.0
        %7054 = vmatpush.xpose.msra.mxu0 0.0
        %7055 = vmatpush.xpose.msra.mxu0 %v6971
        %7056 = vmatpush.xpose.msra.mxu0 %v6955
        %7057 = vmatmul.f32.gmra.mxu0 %v6990
        %v7058 = vpop.f32.mrf.mxu0
        %v7059 = vadd.f32 %v7039, %v7058
        %7060 = vdwg.mxu0
        %7061 = vmatpush.xpose.msra.mxu0 0.0
        %7062 = vmatpush.xpose.msra.mxu0 0.0
        %7063 = vmatpush.xpose.msra.mxu0 0.0
        %7064 = vmatpush.xpose.msra.mxu0 0.0
        %7065 = vmatpush.xpose.msra.mxu0 0.0
        %7066 = vmatpush.xpose.msra.mxu0 0.0
        %7067 = vmatpush.xpose.msra.mxu0 0.0
        %7068 = vmatpush.xpose.msra.mxu0 0.0
        %7069 = vmatpush.xpose.msra.mxu0 0.0
        %7070 = vmatpush.xpose.msra.mxu0 0.0
        %7071 = vmatpush.xpose.msra.mxu0 0.0
        %7072 = vmatpush.xpose.msra.mxu0 0.0
        %7073 = vmatpush.xpose.msra.mxu0 0.0
        %7074 = vmatpush.xpose.msra.mxu0 0.0
        %7075 = vmatpush.xpose.msra.mxu0 %v6972
        %7076 = vmatpush.xpose.msra.mxu0 %v6956
        %7077 = vmatmul.f32.gmra.mxu0 %v6991
        %v7078 = vpop.f32.mrf.mxu0
        %v7079 = vadd.f32 %v7059, %v7078
        %7080 = vdwg.mxu0
        %7081 = vmatpush.xpose.msra.mxu0 0.0
        %7082 = vmatpush.xpose.msra.mxu0 0.0
        %7083 = vmatpush.xpose.msra.mxu0 0.0
        %7084 = vmatpush.xpose.msra.mxu0 0.0
        %7085 = vmatpush.xpose.msra.mxu0 0.0
        %7086 = vmatpush.xpose.msra.mxu0 0.0
        %7087 = vmatpush.xpose.msra.mxu0 0.0
        %7088 = vmatpush.xpose.msra.mxu0 0.0
        %7089 = vmatpush.xpose.msra.mxu0 0.0
        %7090 = vmatpush.xpose.msra.mxu0 0.0
        %7091 = vmatpush.xpose.msra.mxu0 0.0
        %7092 = vmatpush.xpose.msra.mxu0 0.0
        %7093 = vmatpush.xpose.msra.mxu0 0.0
        %7094 = vmatpush.xpose.msra.mxu0 0.0
        %7095 = vmatpush.xpose.msra.mxu0 %v6973
        %7096 = vmatpush.xpose.msra.mxu0 %v6957
        %7097 = vmatmul.f32.gmra.mxu0 %v6992
        %v7098 = vpop.f32.mrf.mxu0
        %v7099 = vadd.f32 %v7079, %v7098
        %7100 = vdwg.mxu0
        %7101 = vmatpush.xpose.msra.mxu0 0.0
        %7102 = vmatpush.xpose.msra.mxu0 0.0
        %7103 = vmatpush.xpose.msra.mxu0 0.0
        %7104 = vmatpush.xpose.msra.mxu0 0.0
        %7105 = vmatpush.xpose.msra.mxu0 0.0
        %7106 = vmatpush.xpose.msra.mxu0 0.0
        %7107 = vmatpush.xpose.msra.mxu0 0.0
        %7108 = vmatpush.xpose.msra.mxu0 0.0
        %7109 = vmatpush.xpose.msra.mxu0 0.0
        %7110 = vmatpush.xpose.msra.mxu0 0.0
        %7111 = vmatpush.xpose.msra.mxu0 0.0
        %7112 = vmatpush.xpose.msra.mxu0 0.0
        %7113 = vmatpush.xpose.msra.mxu0 0.0
        %7114 = vmatpush.xpose.msra.mxu0 0.0
        %7115 = vmatpush.xpose.msra.mxu0 %v6974
        %7116 = vmatpush.xpose.msra.mxu0 %v6958
        %7117 = vmatmul.f32.gmra.mxu0 %v6993
        %v7118 = vpop.f32.mrf.mxu0
        %v7119 = vadd.f32 %v7099, %v7118
        %7120 = vdwg.mxu0
        %7121 = vmatpush.xpose.msra.mxu0 0.0
        %7122 = vmatpush.xpose.msra.mxu0 0.0
        %7123 = vmatpush.xpose.msra.mxu0 0.0
        %7124 = vmatpush.xpose.msra.mxu0 0.0
        %7125 = vmatpush.xpose.msra.mxu0 0.0
        %7126 = vmatpush.xpose.msra.mxu0 0.0
        %7127 = vmatpush.xpose.msra.mxu0 0.0
        %7128 = vmatpush.xpose.msra.mxu0 0.0
        %7129 = vmatpush.xpose.msra.mxu0 0.0
        %7130 = vmatpush.xpose.msra.mxu0 0.0
        %7131 = vmatpush.xpose.msra.mxu0 0.0
        %7132 = vmatpush.xpose.msra.mxu0 0.0
        %7133 = vmatpush.xpose.msra.mxu0 0.0
        %7134 = vmatpush.xpose.msra.mxu0 0.0
        %7135 = vmatpush.xpose.msra.mxu0 %v6975
        %7136 = vmatpush.xpose.msra.mxu0 %v6959
        %7137 = vmatmul.f32.gmra.mxu0 %v6994
        %v7138 = vpop.f32.mrf.mxu0
        %v7139 = vadd.f32 %v7119, %v7138
        %7140 = vdwg.mxu0
        %7141 = vmatpush.xpose.msra.mxu0 0.0
        %7142 = vmatpush.xpose.msra.mxu0 0.0
        %7143 = vmatpush.xpose.msra.mxu0 0.0
        %7144 = vmatpush.xpose.msra.mxu0 0.0
        %7145 = vmatpush.xpose.msra.mxu0 0.0
        %7146 = vmatpush.xpose.msra.mxu0 0.0
        %7147 = vmatpush.xpose.msra.mxu0 0.0
        %7148 = vmatpush.xpose.msra.mxu0 0.0
        %7149 = vmatpush.xpose.msra.mxu0 0.0
        %7150 = vmatpush.xpose.msra.mxu0 0.0
        %7151 = vmatpush.xpose.msra.mxu0 0.0
        %7152 = vmatpush.xpose.msra.mxu0 0.0
        %7153 = vmatpush.xpose.msra.mxu0 0.0
        %7154 = vmatpush.xpose.msra.mxu0 0.0
        %7155 = vmatpush.xpose.msra.mxu0 %v6976
        %7156 = vmatpush.xpose.msra.mxu0 %v6960
        %7157 = vmatmul.f32.gmra.mxu0 %v6995
        %v7158 = vpop.f32.mrf.mxu0
        %v7159 = vadd.f32 %v7139, %v7158
        %7160 = vdwg.mxu0
        %7161 = vmatpush.xpose.msra.mxu0 0.0
        %7162 = vmatpush.xpose.msra.mxu0 0.0
        %7163 = vmatpush.xpose.msra.mxu0 0.0
        %7164 = vmatpush.xpose.msra.mxu0 0.0
        %7165 = vmatpush.xpose.msra.mxu0 0.0
        %7166 = vmatpush.xpose.msra.mxu0 0.0
        %7167 = vmatpush.xpose.msra.mxu0 0.0
        %7168 = vmatpush.xpose.msra.mxu0 0.0
        %7169 = vmatpush.xpose.msra.mxu0 0.0
        %7170 = vmatpush.xpose.msra.mxu0 0.0
        %7171 = vmatpush.xpose.msra.mxu0 0.0
        %7172 = vmatpush.xpose.msra.mxu0 0.0
        %7173 = vmatpush.xpose.msra.mxu0 0.0
        %7174 = vmatpush.xpose.msra.mxu0 0.0
        %7175 = vmatpush.xpose.msra.mxu0 %v6977
        %7176 = vmatpush.xpose.msra.mxu0 %v6961
        %7177 = vmatmul.f32.gmra.mxu0 %v6996
        %v7178 = vpop.f32.mrf.mxu0
        %v7179 = vadd.f32 %v7159, %v7178
        %7180 = vdwg.mxu0
        %7181 = vmatpush.xpose.msra.mxu0 0.0
        %7182 = vmatpush.xpose.msra.mxu0 0.0
        %7183 = vmatpush.xpose.msra.mxu0 0.0
        %7184 = vmatpush.xpose.msra.mxu0 0.0
        %7185 = vmatpush.xpose.msra.mxu0 0.0
        %7186 = vmatpush.xpose.msra.mxu0 0.0
        %7187 = vmatpush.xpose.msra.mxu0 0.0
        %7188 = vmatpush.xpose.msra.mxu0 0.0
        %7189 = vmatpush.xpose.msra.mxu0 0.0
        %7190 = vmatpush.xpose.msra.mxu0 0.0
        %7191 = vmatpush.xpose.msra.mxu0 0.0
        %7192 = vmatpush.xpose.msra.mxu0 0.0
        %7193 = vmatpush.xpose.msra.mxu0 0.0
        %7194 = vmatpush.xpose.msra.mxu0 0.0
        %7195 = vmatpush.xpose.msra.mxu0 %v6978
        %7196 = vmatpush.xpose.msra.mxu0 %v6962
        %7197 = vmatmul.f32.gmra.mxu0 %v6997
        %v7198 = vpop.f32.mrf.mxu0
        %v7199 = vadd.f32 %v7179, %v7198
        %7200 = vdwg.mxu0
        %7201 = vmatpush.xpose.msra.mxu0 0.0
        %7202 = vmatpush.xpose.msra.mxu0 0.0
        %7203 = vmatpush.xpose.msra.mxu0 0.0
        %7204 = vmatpush.xpose.msra.mxu0 0.0
        %7205 = vmatpush.xpose.msra.mxu0 0.0
        %7206 = vmatpush.xpose.msra.mxu0 0.0
        %7207 = vmatpush.xpose.msra.mxu0 0.0
        %7208 = vmatpush.xpose.msra.mxu0 0.0
        %7209 = vmatpush.xpose.msra.mxu0 0.0
        %7210 = vmatpush.xpose.msra.mxu0 0.0
        %7211 = vmatpush.xpose.msra.mxu0 0.0
        %7212 = vmatpush.xpose.msra.mxu0 0.0
        %7213 = vmatpush.xpose.msra.mxu0 0.0
        %7214 = vmatpush.xpose.msra.mxu0 0.0
        %7215 = vmatpush.xpose.msra.mxu0 %v6979
        %7216 = vmatpush.xpose.msra.mxu0 %v6963
        %7217 = vmatmul.f32.gmra.mxu0 %v6998
        %v7218 = vpop.f32.mrf.mxu0
        %v7219 = vadd.f32 %v7199, %v7218
        %7220 = vdwg.mxu0
        %7221 = vmatpush.xpose.msra.mxu0 0.0
        %7222 = vmatpush.xpose.msra.mxu0 0.0
        %7223 = vmatpush.xpose.msra.mxu0 0.0
        %7224 = vmatpush.xpose.msra.mxu0 0.0
        %7225 = vmatpush.xpose.msra.mxu0 0.0
        %7226 = vmatpush.xpose.msra.mxu0 0.0
        %7227 = vmatpush.xpose.msra.mxu0 0.0
        %7228 = vmatpush.xpose.msra.mxu0 0.0
        %7229 = vmatpush.xpose.msra.mxu0 0.0
        %7230 = vmatpush.xpose.msra.mxu0 0.0
        %7231 = vmatpush.xpose.msra.mxu0 0.0
        %7232 = vmatpush.xpose.msra.mxu0 0.0
        %7233 = vmatpush.xpose.msra.mxu0 0.0
        %7234 = vmatpush.xpose.msra.mxu0 0.0
        %7235 = vmatpush.xpose.msra.mxu0 %v6980
        %7236 = vmatpush.xpose.msra.mxu0 %v6964
        %7237 = vmatmul.f32.gmra.mxu0 %v6999
        %v7238 = vpop.f32.mrf.mxu0
        %v7239 = vadd.f32 %v7219, %v7238
        %7240 = vdwg.mxu0
        %7241 = vmatpush.xpose.msra.mxu0 0.0
        %7242 = vmatpush.xpose.msra.mxu0 0.0
        %7243 = vmatpush.xpose.msra.mxu0 0.0
        %7244 = vmatpush.xpose.msra.mxu0 0.0
        %7245 = vmatpush.xpose.msra.mxu0 0.0
        %7246 = vmatpush.xpose.msra.mxu0 0.0
        %7247 = vmatpush.xpose.msra.mxu0 0.0
        %7248 = vmatpush.xpose.msra.mxu0 0.0
        %7249 = vmatpush.xpose.msra.mxu0 0.0
        %7250 = vmatpush.xpose.msra.mxu0 0.0
        %7251 = vmatpush.xpose.msra.mxu0 0.0
        %7252 = vmatpush.xpose.msra.mxu0 0.0
        %7253 = vmatpush.xpose.msra.mxu0 0.0
        %7254 = vmatpush.xpose.msra.mxu0 0.0
        %7255 = vmatpush.xpose.msra.mxu0 %v6981
        %7256 = vmatpush.xpose.msra.mxu0 %v6965
        %7257 = vmatmul.f32.gmra.mxu0 %v7000
        %v7258 = vpop.f32.mrf.mxu0
        %v7259 = vadd.f32 %v7239, %v7258
        %7260 = vdwg.mxu0
        %7261 = vmatpush.xpose.msra.mxu0 0.0
        %7262 = vmatpush.xpose.msra.mxu0 0.0
        %7263 = vmatpush.xpose.msra.mxu0 0.0
        %7264 = vmatpush.xpose.msra.mxu0 0.0
        %7265 = vmatpush.xpose.msra.mxu0 0.0
        %7266 = vmatpush.xpose.msra.mxu0 0.0
        %7267 = vmatpush.xpose.msra.mxu0 0.0
        %7268 = vmatpush.xpose.msra.mxu0 0.0
        %7269 = vmatpush.xpose.msra.mxu0 0.0
        %7270 = vmatpush.xpose.msra.mxu0 0.0
        %7271 = vmatpush.xpose.msra.mxu0 0.0
        %7272 = vmatpush.xpose.msra.mxu0 0.0
        %7273 = vmatpush.xpose.msra.mxu0 0.0
        %7274 = vmatpush.xpose.msra.mxu0 0.0
        %7275 = vmatpush.xpose.msra.mxu0 %v6982
        %7276 = vmatpush.xpose.msra.mxu0 %v6966
        %7277 = vmatmul.f32.gmra.mxu0 %v7001
        %v7278 = vpop.f32.mrf.mxu0
        %v7279 = vadd.f32 %v7259, %v7278
        %7280 = vdwg.mxu0
        %7281 = vmatpush.xpose.msra.mxu0 0.0
        %7282 = vmatpush.xpose.msra.mxu0 0.0
        %7283 = vmatpush.xpose.msra.mxu0 0.0
        %7284 = vmatpush.xpose.msra.mxu0 0.0
        %7285 = vmatpush.xpose.msra.mxu0 0.0
        %7286 = vmatpush.xpose.msra.mxu0 0.0
        %7287 = vmatpush.xpose.msra.mxu0 0.0
        %7288 = vmatpush.xpose.msra.mxu0 0.0
        %7289 = vmatpush.xpose.msra.mxu0 0.0
        %7290 = vmatpush.xpose.msra.mxu0 0.0
        %7291 = vmatpush.xpose.msra.mxu0 0.0
        %7292 = vmatpush.xpose.msra.mxu0 0.0
        %7293 = vmatpush.xpose.msra.mxu0 0.0
        %7294 = vmatpush.xpose.msra.mxu0 0.0
        %7295 = vmatpush.xpose.msra.mxu0 %v6983
        %7296 = vmatpush.xpose.msra.mxu0 %v6967
        %7297 = vmatmul.f32.gmra.mxu0 %v7002
        %v7298 = vpop.f32.mrf.mxu0
        %v7299 = vadd.f32 %v7279, %v7298
        %7300 = vdwg.mxu0
        %7301 = vmatpush.xpose.msra.mxu0 0.0
        %7302 = vmatpush.xpose.msra.mxu0 0.0
        %7303 = vmatpush.xpose.msra.mxu0 0.0
        %7304 = vmatpush.xpose.msra.mxu0 0.0
        %7305 = vmatpush.xpose.msra.mxu0 0.0
        %7306 = vmatpush.xpose.msra.mxu0 0.0
        %7307 = vmatpush.xpose.msra.mxu0 0.0
        %7308 = vmatpush.xpose.msra.mxu0 0.0
        %7309 = vmatpush.xpose.msra.mxu0 0.0
        %7310 = vmatpush.xpose.msra.mxu0 0.0
        %7311 = vmatpush.xpose.msra.mxu0 0.0
        %7312 = vmatpush.xpose.msra.mxu0 0.0
        %7313 = vmatpush.xpose.msra.mxu0 0.0
        %7314 = vmatpush.xpose.msra.mxu0 0.0
        %7315 = vmatpush.xpose.msra.mxu0 %v6984
        %7316 = vmatpush.xpose.msra.mxu0 %v6968
        %7317 = vmatmul.f32.gmra.mxu0 %v7003
        %v7318 = vpop.f32.mrf.mxu0
        %v7319 = vadd.f32 %v7299, %v7318
        %7320 = vdwg.mxu0
        %7321 = vmatpush.xpose.msra.mxu0 0.0
        %7322 = vmatpush.xpose.msra.mxu0 0.0
        %7323 = vmatpush.xpose.msra.mxu0 0.0
        %7324 = vmatpush.xpose.msra.mxu0 0.0
        %7325 = vmatpush.xpose.msra.mxu0 0.0
        %7326 = vmatpush.xpose.msra.mxu0 0.0
        %7327 = vmatpush.xpose.msra.mxu0 0.0
        %7328 = vmatpush.xpose.msra.mxu0 0.0
        %7329 = vmatpush.xpose.msra.mxu0 0.0
        %7330 = vmatpush.xpose.msra.mxu0 0.0
        %7331 = vmatpush.xpose.msra.mxu0 0.0
        %7332 = vmatpush.xpose.msra.mxu0 0.0
        %7333 = vmatpush.xpose.msra.mxu0 0.0
        %7334 = vmatpush.xpose.msra.mxu0 0.0
        %7335 = vmatpush.xpose.msra.mxu0 %v6985
        %7336 = vmatpush.xpose.msra.mxu0 %v6969
        %7337 = vmatmul.f32.gmra.mxu0 %v7004
        %v7338 = vpop.f32.mrf.mxu0
        %v7339 = vadd.f32 %v7319, %v7338
        %7340 = vdwg.mxu0
        %vm7341 = vcmask 73728
        %7342 = vst.msk [vmem:[%s314] sm:$0x1] %vm7341, %v7339
        %s7343 = sand.u32 %s185, 1
        %s7344 = scalar_lea.sflag [#allocation6], %s7343
        %s7345 = sand.u32 %s185, 1
        %s7346 = scalar_lea.vmem [#allocation9], %s7345
        // Predicated region
        $region57: #{neural_net_forward.1} parent=47 // pred_check
          %p7347 = pneg %p195
        $region58: #{neural_net_forward.1} parent=47 // pred_check_branch
          %7349 = sbr.rel (%p7347) target = $region60
        $region59: #{neural_net_forward.1} parent=47 // pred_region
          %7351 = vsyncadd %s7344, 0
          %s7352 = scalar_lea.hbm %s7, %s25
          %s7354 = sshll.u32 %s7346, 4
          %s7355 = int_to_ptr.vmem [resolvable:$true] %s7354
          %s7356 = sshll.u32 %s7352, 4
          %s7357 = int_to_ptr.hbm [resolvable:$true] %s7356
          %7359 = dma.vmem_to_hbm [thread:$0]  %s7355, 16, %s7357, %s7344
        $region60: #{neural_net_forward.1} parent=47 // pred_fallthru
          _
      $region48: #{neural_net_forward.1} parent=5 // pred_fallthru
        _
      %p7360 = scmp.le.s32.totalorder 2, %s20
      // Predicated region
      $region61: #{neural_net_forward.1} parent=5 // pred_check
        %p7361 = pneg %p7360
      $region62: #{neural_net_forward.1} parent=5 // pred_check_branch
        %7363 = sbr.rel (%p7361) target = $region64
      $region63: #{neural_net_forward.1} parent=5 // pred_region
        %s7364 = ssub.s32 %s20, 2
        // Predicated region
        $region65: #{neural_net_forward.1} parent=63 // pred_check
          %p7365 = pneg %p201
        $region66: #{neural_net_forward.1} parent=63 // pred_check_branch
          %7367 = sbr.rel (%p7365) target = $region68
        $region67: #{neural_net_forward.1} parent=63 // pred_region
          %s7368 = sand.u32 %s186, 1
          %s7369 = scalar_lea.sflag [#allocation6], %s7368
          %s7370 = sand.u32 %s186, 1
          %s7371 = scalar_lea.vmem [#allocation9], %s7370
          %7373 = dma.done %s7369, 16
        $region68: #{neural_net_forward.1} parent=63 // pred_fallthru
          _
      $region64: #{neural_net_forward.1} parent=5 // pred_fallthru
        _
    $region6: #{neural_net_forward.1} parent=1 // loop_footer
      %s24 = sadd.s32 1, %s20
    $region7: #{neural_net_forward.1} parent=1 // loop_footer_branch
      %19 = sbr.rel target = $region3
    $region8: #{neural_net_forward.1} parent=1 // loop_exit
      _
    %7374 = vsyncpa [#allocation5], 1
    %s7375 = scalar_lea.sflag [#allocation5], 1
    %7376 = vsyncpa %s7375, 1
    %7377 = vsyncpa [#allocation8], 1
    %7378 = vsyncpa [#allocation6], 1
    %s7379 = scalar_lea.sflag [#allocation6], 1
    %7380 = vsyncpa %s7379, 1

</llo_original>
